<compile_context>
chip_gen: v6e
topology: v6e:2x2x1
jax: 0.10.0
libtpu: 0.0.40
codegen_flags: <defaults>
</compile_context>

<pallas_src>
import functools

import jax
import jax.numpy as jnp
import numpy as np
from jax.experimental import pallas as pl
from jax.experimental.pallas import tpu as pltpu

_W_LPAD = 8  # aligned left padding (sublane axis) of the depthwise halo scratch


# ----------------------------------------------------------------------------
# Fused kernel: one batch element per grid step
# ----------------------------------------------------------------------------
def mbconv_fused_kernel(x_ref, we_ref, b0_ref, dw_ref, b1_ref,
                        wr_ref, br_ref, wx_ref, bx_ref, wp_ref, b2_ref,
                        o_ref, xpad_ref, yflat_ref, *, K, H, W):
    """Full MBConv forward for one batch element.

    x_ref    : (1, H*W, Cin)            input pixels (NHWC, flattened spatially)
    we_ref   : (Cin, Cmid)              expand 1x1 weights, BN0 scale folded in
    dw_ref   : (K*K, Cmid)              depthwise weights, BN1 scale folded in
    wp_ref   : (Cmid, Cout)             project 1x1 weights, BN2 scale folded in
    b*_ref   : (1, C)                   folded BN biases / SE biases
    wr/wx_ref: SE reduce/expand weights
    o_ref    : (1, H*W, Cout)           output (residual already added)
    xpad_ref : (H+2p, LPAD+W+LPAD, Cmid) VMEM scratch: zero-padded expanded act.
    yflat_ref: (H*W, Cmid)              VMEM scratch: SE-gated act., flattened
    """
    pad = (K - 1) // 2
    Cmid = we_ref.shape[1]

    x2 = x_ref[...][0]                                     # (H*W, Cin)

    # ---- expand 1x1 conv (BN0 scale pre-folded) + bias + swish ----------------
    h = jnp.dot(x2, we_ref[...], preferred_element_type=jnp.float32)
    h = h + b0_ref[...]
    h = h * jax.nn.sigmoid(h)                              # (H*W, Cmid)

    # ---- depthwise KxK conv, stride 1, 'same' halo built in VMEM --------------
    xpad_ref[...] = jnp.zeros_like(xpad_ref)               # halo = 0
    for i in range(H):                                     # interior rows, aligned
        xpad_ref[pad + i:pad + i + 1, _W_LPAD:_W_LPAD + W, :] = \
            h[i * W:(i + 1) * W, :][None]

    dwv = dw_ref[...]                                      # (K*K, Cmid), hoisted
    b1 = b1_ref[...]                                       # (1, Cmid), hoisted
    acc = jnp.zeros((H, W, Cmid), jnp.float32)
    for kh in range(K):
        for kw in range(K):
            col = _W_LPAD - pad + kw
            tap = dwv[kh * K + kw:kh * K + kw + 1, :]      # (1, Cmid)
            acc = acc + xpad_ref[kh:kh + H, col:col + W, :] * tap
    y = acc + b1
    y = y * jax.nn.sigmoid(y)                              # (H, W, Cmid)

    # ---- squeeze & excitation (global pool -> reduce -> swish -> expand) ------
    pooled = jnp.mean(jnp.mean(y, axis=0), axis=0, keepdims=True)        # (1, Cmid)
    s = jnp.sum(pooled[:, :, None] * wr_ref[...][None, :, :], axis=1) + br_ref[...]
    s = s * jax.nn.sigmoid(s)                              # (1, Csq)
    g = jnp.sum(s[:, :, None] * wx_ref[...][None, :, :], axis=1) + bx_ref[...]
    gate = jax.nn.sigmoid(g)                               # (1, Cmid)
    gated = y * gate[:, None, :]                           # (H, W, Cmid)

    # ---- project 1x1 conv (BN2 scale pre-folded) + bias + identity skip -------
    for i in range(H):                                     # aligned row stores
        yflat_ref[i * W:(i + 1) * W, :] = gated[i]
    z = jnp.dot(yflat_ref[...], wp_ref[...], preferred_element_type=jnp.float32)
    z = z + b2_ref[...] + x2                               # residual add
    o_ref[...] = z[None].astype(o_ref.dtype)


# ----------------------------------------------------------------------------
# Wrapper
# ----------------------------------------------------------------------------
def mbconv_forward(x_nchw, p, K):
    N, Cin, H, W = x_nchw.shape
    Cmid = p["w_expand"].shape[1]
    Cout = p["w_proj"].shape[1]
    Csq = p["w_se_red"].shape[1]
    pad = (K - 1) // 2
    assert Cin == Cout, "identity-skip path requires input_filters == output_filters"
    assert pad <= _W_LPAD

    # NCHW -> NHWC (channels on lanes), flatten H*W so 1x1 convs are matmuls.
    x = jnp.transpose(x_nchw, (0, 2, 3, 1)).astype(jnp.float32)
    x2 = x.reshape(N, H * W, Cin)

    # Fold BatchNorm scales into the conv weights (one-time, outside the kernel).
    we = p["w_expand"] * p["scale0"]                       # (Cin, Cmid)
    dw = p["dw_w"].reshape(K * K, Cmid) * p["scale1"]      # (K*K, Cmid)
    wp = p["w_proj"] * p["scale2"]                         # (Cmid, Cout)

    kernel = functools.partial(mbconv_fused_kernel, K=K, H=H, W=W)
    const = lambda n: (0, 0)

    out2d = pl.pallas_call(
        kernel,
        out_shape=jax.ShapeDtypeStruct((N, H * W, Cout), jnp.float32),
        grid=(N,),
        in_specs=[
            pl.BlockSpec((1, H * W, Cin), lambda n: (n, 0, 0)),   # x
            pl.BlockSpec((Cin, Cmid), const),                     # expand w
            pl.BlockSpec((1, Cmid), const),                       # bn0 bias
            pl.BlockSpec((K * K, Cmid), const),                   # depthwise w
            pl.BlockSpec((1, Cmid), const),                       # bn1 bias
            pl.BlockSpec((Cmid, Csq), const),                     # se reduce w
            pl.BlockSpec((1, Csq), const),                        # se reduce b
            pl.BlockSpec((Csq, Cmid), const),                     # se expand w
            pl.BlockSpec((1, Cmid), const),                       # se expand b
            pl.BlockSpec((Cmid, Cout), const),                    # project w
            pl.BlockSpec((1, Cout), const),                       # bn2 bias
        ],
        out_specs=pl.BlockSpec((1, H * W, Cout), lambda n: (n, 0, 0)),
        scratch_shapes=[
            pltpu.VMEM((H + 2 * pad, _W_LPAD + W + _W_LPAD, Cmid), jnp.float32),
            pltpu.VMEM((H * W, Cmid), jnp.float32),
        ],
        compiler_params=pltpu.CompilerParams(dimension_semantics=("parallel",)),
    )(x2, we, p["bias0"], dw, p["bias1"],
      p["w_se_red"], p["b_se_red"], p["w_se_exp"], p["b_se_exp"],
      wp, p["bias2"])

    out = out2d.reshape(N, H, W, Cout)
    return jnp.transpose(out, (0, 3, 1, 2))                # back to NCHW


# ----------------------------------------------------------------------------
# Pure-JAX reference (uses the un-folded BN parameters -> validates the fold too)
# ----------------------------------------------------------------------------
def reference_forward(x_nchw, p, K):
    swish = lambda v: v * jax.nn.sigmoid(v)
    x = jnp.transpose(x_nchw, (0, 2, 3, 1)).astype(jnp.float32)
    Cmid = p["w_expand"].shape[1]
    y = jnp.einsum("nhwc,cd->nhwd", x, p["w_expand"], precision=jax.lax.Precision.HIGHEST)
    y = swish(y * p["scale0"].reshape(1, 1, 1, -1) + p["bias0"].reshape(1, 1, 1, -1))
    dw = p["dw_w"].reshape(K, K, 1, Cmid)
    y = jax.lax.conv_general_dilated(
        y, dw, window_strides=(1, 1), padding="SAME",
        dimension_numbers=("NHWC", "HWIO", "NHWC"),
        feature_group_count=Cmid, precision=jax.lax.Precision.HIGHEST)
    y = swish(y * p["scale1"].reshape(1, 1, 1, -1) + p["bias1"].reshape(1, 1, 1, -1))
    pooled = jnp.mean(y, axis=(1, 2))
    hse = swish(pooled @ p["w_se_red"] + p["b_se_red"].reshape(1, -1))
    gate = jax.nn.sigmoid(hse @ p["w_se_exp"] + p["b_se_exp"].reshape(1, -1))
    y = y * gate[:, None, None, :]
    z = jnp.einsum("nhwc,cd->nhwd", y, p["w_proj"], precision=jax.lax.Precision.HIGHEST)
    z = z * p["scale2"].reshape(1, 1, 1, -1) + p["bias2"].reshape(1, 1, 1, -1)
    z = z + x
    return jnp.transpose(z, (0, 3, 1, 2))


def bn_fold(gamma, beta, mean, var, eps):
    inv = gamma / jnp.sqrt(var + eps)
    return (inv.reshape(1, -1), (beta - mean * inv).reshape(1, -1))


# ----------------------------------------------------------------------------
# Main
# ----------------------------------------------------------------------------
if __name__ == "__main__":
    # Block args (exercises every branch of forward(): expand, dw, SE, skip).
    N, Cin, H, W = 2, 8, 16, 16
    expand_ratio = 4
    Cmid = Cin * expand_ratio          # 32
    Cout = Cin                         # output_filters == input_filters -> skip
    K = 3                              # depthwise kernel size, stride 1
    se_ratio = 0.25
    Csq = max(1, int(Cin * se_ratio))  # 2
    eps = 1e-3                         # global_params.batch_norm_epsilon

    key = jax.random.PRNGKey(0)
    ks = jax.random.split(key, 20)
    f32 = jnp.float32

    def bn_params(k, c):
        k1, k2, k3, k4 = jax.random.split(k, 4)
        gamma = 1.0 + 0.1 * jax.random.normal(k1, (c,), f32)
        beta = 0.1 * jax.random.normal(k2, (c,), f32)
        mean = 0.1 * jax.random.normal(k3, (c,), f32)
        var = 1.0 + 0.1 * jnp.abs(jax.random.normal(k4, (c,), f32))
        return gamma, beta, mean, var

    s0, b0 = bn_fold(*bn_params(ks[10], Cmid), eps)
    s1, b1 = bn_fold(*bn_params(ks[11], Cmid), eps)
    s2, b2 = bn_fold(*bn_params(ks[12], Cout), eps)

    params = {
        "w_expand": 0.2 * jax.random.normal(ks[0], (Cin, Cmid), f32),
        "dw_w": 0.2 * jax.random.normal(ks[1], (K, K, Cmid), f32),
        "w_se_red": 0.2 * jax.random.normal(ks[2], (Cmid, Csq), f32),
        "b_se_red": 0.1 * jax.random.normal(ks[3], (1, Csq), f32),
        "w_se_exp": 0.2 * jax.random.normal(ks[4], (Csq, Cmid), f32),
        "b_se_exp": 0.1 * jax.random.normal(ks[5], (1, Cmid), f32),
        "w_proj": 0.2 * jax.random.normal(ks[6], (Cmid, Cout), f32),
        "scale0": s0, "bias0": b0,
        "scale1": s1, "bias1": b1,
        "scale2": s2, "bias2": b2,
    }

    x = jax.random.normal(ks[7], (N, Cin, H, W), f32)   # NCHW, like the PyTorch module

    out = jax.block_until_ready(mbconv_forward(x, params, K))
    ref = jax.block_until_ready(reference_forward(x, params, K))

    assert out.shape == (N, Cout, H, W), out.shape
    np.testing.assert_allclose(np.asarray(out), np.asarray(ref), rtol=2e-3, atol=2e-3)
    print("KERNEL_OK")
</pallas_src>

<mosaic_0001>
module attributes {stable_mosaic.version = 11 : i64} {
  func.func @mbconv_fused_kernel(%arg0: i32, %arg1: memref<1x256x8xf32, #tpu.memory_space<vmem>>, %arg2: memref<8x32xf32, #tpu.memory_space<vmem>>, %arg3: memref<1x32xf32, #tpu.memory_space<vmem>>, %arg4: memref<9x32xf32, #tpu.memory_space<vmem>>, %arg5: memref<1x32xf32, #tpu.memory_space<vmem>>, %arg6: memref<32x2xf32, #tpu.memory_space<vmem>>, %arg7: memref<1x2xf32, #tpu.memory_space<vmem>>, %arg8: memref<2x32xf32, #tpu.memory_space<vmem>>, %arg9: memref<1x32xf32, #tpu.memory_space<vmem>>, %arg10: memref<32x8xf32, #tpu.memory_space<vmem>>, %arg11: memref<1x8xf32, #tpu.memory_space<vmem>>, %arg12: memref<1x256x8xf32, #tpu.memory_space<vmem>>, %arg13: memref<18x32x32xf32, #tpu.memory_space<vmem>>, %arg14: memref<256x32xf32, #tpu.memory_space<vmem>>) attributes {dimension_semantics = [#tpu.dimension_semantics<parallel>], iteration_bounds = array<i64: 2>, scalar_prefetch = 0 : i64, scratch_operands = 2 : i64, tpu.core_type = #tpu.core_type<tc>, window_params = [{transform_indices = @transform_0, window_bounds = array<i64: 1, 256, 8>}, {pipeline_mode = #tpu.pipeline_mode<synchronous>, transform_indices = @transform_1, window_bounds = array<i64: 8, 32>}, {pipeline_mode = #tpu.pipeline_mode<synchronous>, transform_indices = @transform_2, window_bounds = array<i64: 1, 32>}, {pipeline_mode = #tpu.pipeline_mode<synchronous>, transform_indices = @transform_3, window_bounds = array<i64: 9, 32>}, {pipeline_mode = #tpu.pipeline_mode<synchronous>, transform_indices = @transform_4, window_bounds = array<i64: 1, 32>}, {pipeline_mode = #tpu.pipeline_mode<synchronous>, transform_indices = @transform_5, window_bounds = array<i64: 32, 2>}, {pipeline_mode = #tpu.pipeline_mode<synchronous>, transform_indices = @transform_6, window_bounds = array<i64: 1, 2>}, {pipeline_mode = #tpu.pipeline_mode<synchronous>, transform_indices = @transform_7, window_bounds = array<i64: 2, 32>}, {pipeline_mode = #tpu.pipeline_mode<synchronous>, transform_indices = @transform_8, window_bounds = array<i64: 1, 32>}, {pipeline_mode = #tpu.pipeline_mode<synchronous>, transform_indices = @transform_9, window_bounds = array<i64: 32, 8>}, {pipeline_mode = #tpu.pipeline_mode<synchronous>, transform_indices = @transform_10, window_bounds = array<i64: 1, 8>}, {transform_indices = @transform_11, window_bounds = array<i64: 1, 256, 8>}]} {
    %c0 = arith.constant 0 : index
    %c0_0 = arith.constant 0 : index
    %c0_1 = arith.constant 0 : index
    %0 = vector.load %arg1[%c0, %c0_0, %c0_1] : memref<1x256x8xf32, #tpu.memory_space<vmem>>, vector<1x256x8xf32>
    %1 = vector.shape_cast %0 : vector<1x256x8xf32> to vector<256x8xf32>
    %c0_2 = arith.constant 0 : index
    %c0_3 = arith.constant 0 : index
    %2 = vector.load %arg2[%c0_2, %c0_3] : memref<8x32xf32, #tpu.memory_space<vmem>>, vector<8x32xf32>
    %cst = arith.constant dense<0.000000e+00> : vector<256x32xf32>
    %3 = tpu.matmul %1, %2, %cst {dimension_numbers = #tpu.dot_dimension_numbers<[1], [0], [0], [1], [0, 0, 1, 1], [], []>} : vector<256x8xf32>, vector<8x32xf32>, vector<256x32xf32> -> vector<256x32xf32>
    %c0_4 = arith.constant 0 : index
    %c0_5 = arith.constant 0 : index
    %4 = vector.load %arg3[%c0_4, %c0_5] : memref<1x32xf32, #tpu.memory_space<vmem>>, vector<1x32xf32>
    %5 = vector.broadcast %4 : vector<1x32xf32> to vector<256x32xf32>
    %6 = arith.addf %3, %5 : vector<256x32xf32>
    %7 = arith.negf %6 : vector<256x32xf32>
    %8 = math.exp %7 : vector<256x32xf32>
    %cst_6 = arith.constant 1.000000e+00 : f32
    %9 = vector.broadcast %cst_6 : f32 to vector<256x32xf32>
    %10 = arith.addf %9, %8 : vector<256x32xf32>
    %11 = arith.divf %9, %10 : vector<256x32xf32>
    %12 = arith.mulf %6, %11 : vector<256x32xf32>
    %cst_7 = arith.constant 0.000000e+00 : f32
    %13 = vector.broadcast %cst_7 : f32 to vector<18x32x32xf32>
    %c0_8 = arith.constant 0 : index
    %c0_9 = arith.constant 0 : index
    %c0_10 = arith.constant 0 : index
    %14 = vector.load %arg13[%c0_8, %c0_9, %c0_10] : memref<18x32x32xf32, #tpu.memory_space<vmem>>, vector<18x32x32xf32>
    tpu.vector_store %arg13[%c0_8, %c0_9, %c0_10], %13 {strides = array<i32>} : memref<18x32x32xf32, #tpu.memory_space<vmem>>, vector<18x32x32xf32>,
    %15 = vector.extract_strided_slice %12 {offsets = [0, 0], sizes = [16, 32], strides = [1, 1]} : vector<256x32xf32> to vector<16x32xf32>
    %16 = vector.shape_cast %15 : vector<16x32xf32> to vector<1x16x32xf32>
    %c1 = arith.constant 1 : index
    %c8 = arith.constant 8 : index
    %c0_11 = arith.constant 0 : index
    %17 = vector.load %arg13[%c1, %c8, %c0_11] : memref<18x32x32xf32, #tpu.memory_space<vmem>>, vector<1x16x32xf32>
    tpu.vector_store %arg13[%c1, %c8, %c0_11], %16 {strides = array<i32>} : memref<18x32x32xf32, #tpu.memory_space<vmem>>, vector<1x16x32xf32>,
    %18 = vector.extract_strided_slice %12 {offsets = [16, 0], sizes = [16, 32], strides = [1, 1]} : vector<256x32xf32> to vector<16x32xf32>
    %19 = vector.shape_cast %18 : vector<16x32xf32> to vector<1x16x32xf32>
    %c2 = arith.constant 2 : index
    %c8_12 = arith.constant 8 : index
    %c0_13 = arith.constant 0 : index
    %20 = vector.load %arg13[%c2, %c8_12, %c0_13] : memref<18x32x32xf32, #tpu.memory_space<vmem>>, vector<1x16x32xf32>
    tpu.vector_store %arg13[%c2, %c8_12, %c0_13], %19 {strides = array<i32>} : memref<18x32x32xf32, #tpu.memory_space<vmem>>, vector<1x16x32xf32>,
    %21 = vector.extract_strided_slice %12 {offsets = [32, 0], sizes = [16, 32], strides = [1, 1]} : vector<256x32xf32> to vector<16x32xf32>
    %22 = vector.shape_cast %21 : vector<16x32xf32> to vector<1x16x32xf32>
    %c3 = arith.constant 3 : index
    %c8_14 = arith.constant 8 : index
    %c0_15 = arith.constant 0 : index
    %23 = vector.load %arg13[%c3, %c8_14, %c0_15] : memref<18x32x32xf32, #tpu.memory_space<vmem>>, vector<1x16x32xf32>
    tpu.vector_store %arg13[%c3, %c8_14, %c0_15], %22 {strides = array<i32>} : memref<18x32x32xf32, #tpu.memory_space<vmem>>, vector<1x16x32xf32>,
    %24 = vector.extract_strided_slice %12 {offsets = [48, 0], sizes = [16, 32], strides = [1, 1]} : vector<256x32xf32> to vector<16x32xf32>
    %25 = vector.shape_cast %24 : vector<16x32xf32> to vector<1x16x32xf32>
    %c4 = arith.constant 4 : index
    %c8_16 = arith.constant 8 : index
    %c0_17 = arith.constant 0 : index
    %26 = vector.load %arg13[%c4, %c8_16, %c0_17] : memref<18x32x32xf32, #tpu.memory_space<vmem>>, vector<1x16x32xf32>
    tpu.vector_store %arg13[%c4, %c8_16, %c0_17], %25 {strides = array<i32>} : memref<18x32x32xf32, #tpu.memory_space<vmem>>, vector<1x16x32xf32>,
    %27 = vector.extract_strided_slice %12 {offsets = [64, 0], sizes = [16, 32], strides = [1, 1]} : vector<256x32xf32> to vector<16x32xf32>
    %28 = vector.shape_cast %27 : vector<16x32xf32> to vector<1x16x32xf32>
    %c5 = arith.constant 5 : index
    %c8_18 = arith.constant 8 : index
    %c0_19 = arith.constant 0 : index
    %29 = vector.load %arg13[%c5, %c8_18, %c0_19] : memref<18x32x32xf32, #tpu.memory_space<vmem>>, vector<1x16x32xf32>
    tpu.vector_store %arg13[%c5, %c8_18, %c0_19], %28 {strides = array<i32>} : memref<18x32x32xf32, #tpu.memory_space<vmem>>, vector<1x16x32xf32>,
    %30 = vector.extract_strided_slice %12 {offsets = [80, 0], sizes = [16, 32], strides = [1, 1]} : vector<256x32xf32> to vector<16x32xf32>
    %31 = vector.shape_cast %30 : vector<16x32xf32> to vector<1x16x32xf32>
    %c6 = arith.constant 6 : index
    %c8_20 = arith.constant 8 : index
    %c0_21 = arith.constant 0 : index
    %32 = vector.load %arg13[%c6, %c8_20, %c0_21] : memref<18x32x32xf32, #tpu.memory_space<vmem>>, vector<1x16x32xf32>
    tpu.vector_store %arg13[%c6, %c8_20, %c0_21], %31 {strides = array<i32>} : memref<18x32x32xf32, #tpu.memory_space<vmem>>, vector<1x16x32xf32>,
    %33 = vector.extract_strided_slice %12 {offsets = [96, 0], sizes = [16, 32], strides = [1, 1]} : vector<256x32xf32> to vector<16x32xf32>
    %34 = vector.shape_cast %33 : vector<16x32xf32> to vector<1x16x32xf32>
    %c7 = arith.constant 7 : index
    %c8_22 = arith.constant 8 : index
    %c0_23 = arith.constant 0 : index
    %35 = vector.load %arg13[%c7, %c8_22, %c0_23] : memref<18x32x32xf32, #tpu.memory_space<vmem>>, vector<1x16x32xf32>
    tpu.vector_store %arg13[%c7, %c8_22, %c0_23], %34 {strides = array<i32>} : memref<18x32x32xf32, #tpu.memory_space<vmem>>, vector<1x16x32xf32>,
    %36 = vector.extract_strided_slice %12 {offsets = [112, 0], sizes = [16, 32], strides = [1, 1]} : vector<256x32xf32> to vector<16x32xf32>
    %37 = vector.shape_cast %36 : vector<16x32xf32> to vector<1x16x32xf32>
    %c8_24 = arith.constant 8 : index
    %c8_25 = arith.constant 8 : index
    %c0_26 = arith.constant 0 : index
    %38 = vector.load %arg13[%c8_24, %c8_25, %c0_26] : memref<18x32x32xf32, #tpu.memory_space<vmem>>, vector<1x16x32xf32>
    tpu.vector_store %arg13[%c8_24, %c8_25, %c0_26], %37 {strides = array<i32>} : memref<18x32x32xf32, #tpu.memory_space<vmem>>, vector<1x16x32xf32>,
    %39 = vector.extract_strided_slice %12 {offsets = [128, 0], sizes = [16, 32], strides = [1, 1]} : vector<256x32xf32> to vector<16x32xf32>
    %40 = vector.shape_cast %39 : vector<16x32xf32> to vector<1x16x32xf32>
    %c9 = arith.constant 9 : index
    %c8_27 = arith.constant 8 : index
    %c0_28 = arith.constant 0 : index
    %41 = vector.load %arg13[%c9, %c8_27, %c0_28] : memref<18x32x32xf32, #tpu.memory_space<vmem>>, vector<1x16x32xf32>
    tpu.vector_store %arg13[%c9, %c8_27, %c0_28], %40 {strides = array<i32>} : memref<18x32x32xf32, #tpu.memory_space<vmem>>, vector<1x16x32xf32>,
    %42 = vector.extract_strided_slice %12 {offsets = [144, 0], sizes = [16, 32], strides = [1, 1]} : vector<256x32xf32> to vector<16x32xf32>
    %43 = vector.shape_cast %42 : vector<16x32xf32> to vector<1x16x32xf32>
    %c10 = arith.constant 10 : index
    %c8_29 = arith.constant 8 : index
    %c0_30 = arith.constant 0 : index
    %44 = vector.load %arg13[%c10, %c8_29, %c0_30] : memref<18x32x32xf32, #tpu.memory_space<vmem>>, vector<1x16x32xf32>
    tpu.vector_store %arg13[%c10, %c8_29, %c0_30], %43 {strides = array<i32>} : memref<18x32x32xf32, #tpu.memory_space<vmem>>, vector<1x16x32xf32>,
    %45 = vector.extract_strided_slice %12 {offsets = [160, 0], sizes = [16, 32], strides = [1, 1]} : vector<256x32xf32> to vector<16x32xf32>
    %46 = vector.shape_cast %45 : vector<16x32xf32> to vector<1x16x32xf32>
    %c11 = arith.constant 11 : index
    %c8_31 = arith.constant 8 : index
    %c0_32 = arith.constant 0 : index
    %47 = vector.load %arg13[%c11, %c8_31, %c0_32] : memref<18x32x32xf32, #tpu.memory_space<vmem>>, vector<1x16x32xf32>
    tpu.vector_store %arg13[%c11, %c8_31, %c0_32], %46 {strides = array<i32>} : memref<18x32x32xf32, #tpu.memory_space<vmem>>, vector<1x16x32xf32>,
    %48 = vector.extract_strided_slice %12 {offsets = [176, 0], sizes = [16, 32], strides = [1, 1]} : vector<256x32xf32> to vector<16x32xf32>
    %49 = vector.shape_cast %48 : vector<16x32xf32> to vector<1x16x32xf32>
    %c12 = arith.constant 12 : index
    %c8_33 = arith.constant 8 : index
    %c0_34 = arith.constant 0 : index
    %50 = vector.load %arg13[%c12, %c8_33, %c0_34] : memref<18x32x32xf32, #tpu.memory_space<vmem>>, vector<1x16x32xf32>
    tpu.vector_store %arg13[%c12, %c8_33, %c0_34], %49 {strides = array<i32>} : memref<18x32x32xf32, #tpu.memory_space<vmem>>, vector<1x16x32xf32>,
    %51 = vector.extract_strided_slice %12 {offsets = [192, 0], sizes = [16, 32], strides = [1, 1]} : vector<256x32xf32> to vector<16x32xf32>
    %52 = vector.shape_cast %51 : vector<16x32xf32> to vector<1x16x32xf32>
    %c13 = arith.constant 13 : index
    %c8_35 = arith.constant 8 : index
    %c0_36 = arith.constant 0 : index
    %53 = vector.load %arg13[%c13, %c8_35, %c0_36] : memref<18x32x32xf32, #tpu.memory_space<vmem>>, vector<1x16x32xf32>
    tpu.vector_store %arg13[%c13, %c8_35, %c0_36], %52 {strides = array<i32>} : memref<18x32x32xf32, #tpu.memory_space<vmem>>, vector<1x16x32xf32>,
    %54 = vector.extract_strided_slice %12 {offsets = [208, 0], sizes = [16, 32], strides = [1, 1]} : vector<256x32xf32> to vector<16x32xf32>
    %55 = vector.shape_cast %54 : vector<16x32xf32> to vector<1x16x32xf32>
    %c14 = arith.constant 14 : index
    %c8_37 = arith.constant 8 : index
    %c0_38 = arith.constant 0 : index
    %56 = vector.load %arg13[%c14, %c8_37, %c0_38] : memref<18x32x32xf32, #tpu.memory_space<vmem>>, vector<1x16x32xf32>
    tpu.vector_store %arg13[%c14, %c8_37, %c0_38], %55 {strides = array<i32>} : memref<18x32x32xf32, #tpu.memory_space<vmem>>, vector<1x16x32xf32>,
    %57 = vector.extract_strided_slice %12 {offsets = [224, 0], sizes = [16, 32], strides = [1, 1]} : vector<256x32xf32> to vector<16x32xf32>
    %58 = vector.shape_cast %57 : vector<16x32xf32> to vector<1x16x32xf32>
    %c15 = arith.constant 15 : index
    %c8_39 = arith.constant 8 : index
    %c0_40 = arith.constant 0 : index
    %59 = vector.load %arg13[%c15, %c8_39, %c0_40] : memref<18x32x32xf32, #tpu.memory_space<vmem>>, vector<1x16x32xf32>
    tpu.vector_store %arg13[%c15, %c8_39, %c0_40], %58 {strides = array<i32>} : memref<18x32x32xf32, #tpu.memory_space<vmem>>, vector<1x16x32xf32>,
    %60 = vector.extract_strided_slice %12 {offsets = [240, 0], sizes = [16, 32], strides = [1, 1]} : vector<256x32xf32> to vector<16x32xf32>
    %61 = vector.shape_cast %60 : vector<16x32xf32> to vector<1x16x32xf32>
    %c16 = arith.constant 16 : index
    %c8_41 = arith.constant 8 : index
    %c0_42 = arith.constant 0 : index
    %62 = vector.load %arg13[%c16, %c8_41, %c0_42] : memref<18x32x32xf32, #tpu.memory_space<vmem>>, vector<1x16x32xf32>
    tpu.vector_store %arg13[%c16, %c8_41, %c0_42], %61 {strides = array<i32>} : memref<18x32x32xf32, #tpu.memory_space<vmem>>, vector<1x16x32xf32>,
    %c0_43 = arith.constant 0 : index
    %c0_44 = arith.constant 0 : index
    %63 = vector.load %arg4[%c0_43, %c0_44] : memref<9x32xf32, #tpu.memory_space<vmem>>, vector<9x32xf32>
    %c0_45 = arith.constant 0 : index
    %c0_46 = arith.constant 0 : index
    %64 = vector.load %arg5[%c0_45, %c0_46] : memref<1x32xf32, #tpu.memory_space<vmem>>, vector<1x32xf32>
    %cst_47 = arith.constant 0.000000e+00 : f32
    %65 = vector.broadcast %cst_47 : f32 to vector<16x16x32xf32>
    %66 = vector.extract_strided_slice %63 {offsets = [0, 0], sizes = [1, 32], strides = [1, 1]} : vector<9x32xf32> to vector<1x32xf32>
    %c0_48 = arith.constant 0 : index
    %c7_49 = arith.constant 7 : index
    %c0_50 = arith.constant 0 : index
    %67 = vector.load %arg13[%c0_48, %c7_49, %c0_50] : memref<18x32x32xf32, #tpu.memory_space<vmem>>, vector<16x16x32xf32>
    %68 = vector.shape_cast %66 : vector<1x32xf32> to vector<1x1x32xf32>
    %69 = vector.broadcast %68 : vector<1x1x32xf32> to vector<16x16x32xf32>
    %70 = arith.mulf %67, %69 : vector<16x16x32xf32>
    %71 = arith.addf %65, %70 : vector<16x16x32xf32>
    %72 = vector.extract_strided_slice %63 {offsets = [1, 0], sizes = [1, 32], strides = [1, 1]} : vector<9x32xf32> to vector<1x32xf32>
    %c0_51 = arith.constant 0 : index
    %c8_52 = arith.constant 8 : index
    %c0_53 = arith.constant 0 : index
    %73 = vector.load %arg13[%c0_51, %c8_52, %c0_53] : memref<18x32x32xf32, #tpu.memory_space<vmem>>, vector<16x16x32xf32>
    %74 = vector.shape_cast %72 : vector<1x32xf32> to vector<1x1x32xf32>
    %75 = vector.broadcast %74 : vector<1x1x32xf32> to vector<16x16x32xf32>
    %76 = arith.mulf %73, %75 : vector<16x16x32xf32>
    %77 = arith.addf %71, %76 : vector<16x16x32xf32>
    %78 = vector.extract_strided_slice %63 {offsets = [2, 0], sizes = [1, 32], strides = [1, 1]} : vector<9x32xf32> to vector<1x32xf32>
    %c0_54 = arith.constant 0 : index
    %c9_55 = arith.constant 9 : index
    %c0_56 = arith.constant 0 : index
    %79 = vector.load %arg13[%c0_54, %c9_55, %c0_56] : memref<18x32x32xf32, #tpu.memory_space<vmem>>, vector<16x16x32xf32>
    %80 = vector.shape_cast %78 : vector<1x32xf32> to vector<1x1x32xf32>
    %81 = vector.broadcast %80 : vector<1x1x32xf32> to vector<16x16x32xf32>
    %82 = arith.mulf %79, %81 : vector<16x16x32xf32>
    %83 = arith.addf %77, %82 : vector<16x16x32xf32>
    %84 = vector.extract_strided_slice %63 {offsets = [3, 0], sizes = [1, 32], strides = [1, 1]} : vector<9x32xf32> to vector<1x32xf32>
    %c1_57 = arith.constant 1 : index
    %c7_58 = arith.constant 7 : index
    %c0_59 = arith.constant 0 : index
    %85 = vector.load %arg13[%c1_57, %c7_58, %c0_59] : memref<18x32x32xf32, #tpu.memory_space<vmem>>, vector<16x16x32xf32>
    %86 = vector.shape_cast %84 : vector<1x32xf32> to vector<1x1x32xf32>
    %87 = vector.broadcast %86 : vector<1x1x32xf32> to vector<16x16x32xf32>
    %88 = arith.mulf %85, %87 : vector<16x16x32xf32>
    %89 = arith.addf %83, %88 : vector<16x16x32xf32>
    %90 = vector.extract_strided_slice %63 {offsets = [4, 0], sizes = [1, 32], strides = [1, 1]} : vector<9x32xf32> to vector<1x32xf32>
    %c1_60 = arith.constant 1 : index
    %c8_61 = arith.constant 8 : index
    %c0_62 = arith.constant 0 : index
    %91 = vector.load %arg13[%c1_60, %c8_61, %c0_62] : memref<18x32x32xf32, #tpu.memory_space<vmem>>, vector<16x16x32xf32>
    %92 = vector.shape_cast %90 : vector<1x32xf32> to vector<1x1x32xf32>
    %93 = vector.broadcast %92 : vector<1x1x32xf32> to vector<16x16x32xf32>
    %94 = arith.mulf %91, %93 : vector<16x16x32xf32>
    %95 = arith.addf %89, %94 : vector<16x16x32xf32>
    %96 = vector.extract_strided_slice %63 {offsets = [5, 0], sizes = [1, 32], strides = [1, 1]} : vector<9x32xf32> to vector<1x32xf32>
    %c1_63 = arith.constant 1 : index
    %c9_64 = arith.constant 9 : index
    %c0_65 = arith.constant 0 : index
    %97 = vector.load %arg13[%c1_63, %c9_64, %c0_65] : memref<18x32x32xf32, #tpu.memory_space<vmem>>, vector<16x16x32xf32>
    %98 = vector.shape_cast %96 : vector<1x32xf32> to vector<1x1x32xf32>
    %99 = vector.broadcast %98 : vector<1x1x32xf32> to vector<16x16x32xf32>
    %100 = arith.mulf %97, %99 : vector<16x16x32xf32>
    %101 = arith.addf %95, %100 : vector<16x16x32xf32>
    %102 = vector.extract_strided_slice %63 {offsets = [6, 0], sizes = [1, 32], strides = [1, 1]} : vector<9x32xf32> to vector<1x32xf32>
    %c2_66 = arith.constant 2 : index
    %c7_67 = arith.constant 7 : index
    %c0_68 = arith.constant 0 : index
    %103 = vector.load %arg13[%c2_66, %c7_67, %c0_68] : memref<18x32x32xf32, #tpu.memory_space<vmem>>, vector<16x16x32xf32>
    %104 = vector.shape_cast %102 : vector<1x32xf32> to vector<1x1x32xf32>
    %105 = vector.broadcast %104 : vector<1x1x32xf32> to vector<16x16x32xf32>
    %106 = arith.mulf %103, %105 : vector<16x16x32xf32>
    %107 = arith.addf %101, %106 : vector<16x16x32xf32>
    %108 = vector.extract_strided_slice %63 {offsets = [7, 0], sizes = [1, 32], strides = [1, 1]} : vector<9x32xf32> to vector<1x32xf32>
    %c2_69 = arith.constant 2 : index
    %c8_70 = arith.constant 8 : index
    %c0_71 = arith.constant 0 : index
    %109 = vector.load %arg13[%c2_69, %c8_70, %c0_71] : memref<18x32x32xf32, #tpu.memory_space<vmem>>, vector<16x16x32xf32>
    %110 = vector.shape_cast %108 : vector<1x32xf32> to vector<1x1x32xf32>
    %111 = vector.broadcast %110 : vector<1x1x32xf32> to vector<16x16x32xf32>
    %112 = arith.mulf %109, %111 : vector<16x16x32xf32>
    %113 = arith.addf %107, %112 : vector<16x16x32xf32>
    %114 = vector.extract_strided_slice %63 {offsets = [8, 0], sizes = [1, 32], strides = [1, 1]} : vector<9x32xf32> to vector<1x32xf32>
    %c2_72 = arith.constant 2 : index
    %c9_73 = arith.constant 9 : index
    %c0_74 = arith.constant 0 : index
    %115 = vector.load %arg13[%c2_72, %c9_73, %c0_74] : memref<18x32x32xf32, #tpu.memory_space<vmem>>, vector<16x16x32xf32>
    %116 = vector.shape_cast %114 : vector<1x32xf32> to vector<1x1x32xf32>
    %117 = vector.broadcast %116 : vector<1x1x32xf32> to vector<16x16x32xf32>
    %118 = arith.mulf %115, %117 : vector<16x16x32xf32>
    %119 = arith.addf %113, %118 : vector<16x16x32xf32>
    %120 = vector.shape_cast %64 : vector<1x32xf32> to vector<1x1x32xf32>
    %121 = vector.broadcast %120 : vector<1x1x32xf32> to vector<16x16x32xf32>
    %122 = arith.addf %119, %121 : vector<16x16x32xf32>
    %123 = arith.negf %122 : vector<16x16x32xf32>
    %124 = math.exp %123 : vector<16x16x32xf32>
    %cst_75 = arith.constant 1.000000e+00 : f32
    %125 = vector.broadcast %cst_75 : f32 to vector<16x16x32xf32>
    %126 = arith.addf %125, %124 : vector<16x16x32xf32>
    %127 = arith.divf %125, %126 : vector<16x16x32xf32>
    %128 = arith.mulf %122, %127 : vector<16x16x32xf32>
    %cst_76 = arith.constant dense<0.000000e+00> : vector<16x32xf32>
    %129 = vector.multi_reduction <add>, %128, %cst_76 [0] : vector<16x16x32xf32> to vector<16x32xf32>
    %cst_77 = arith.constant 1.600000e+01 : f32
    %130 = vector.broadcast %cst_77 : f32 to vector<16x32xf32>
    %131 = arith.divf %129, %130 : vector<16x32xf32>
    %cst_78 = arith.constant dense<0.000000e+00> : vector<32xf32>
    %132 = vector.multi_reduction <add>, %131, %cst_78 [0] : vector<16x32xf32> to vector<32xf32>
    %133 = vector.shape_cast %132 : vector<32xf32> to vector<1x32xf32>
    %cst_79 = arith.constant 1.600000e+01 : f32
    %134 = vector.broadcast %cst_79 : f32 to vector<1x32xf32>
    %135 = arith.divf %133, %134 : vector<1x32xf32>
    %136 = vector.shape_cast %135 : vector<1x32xf32> to vector<1x32x1xf32>
    %c0_80 = arith.constant 0 : index
    %c0_81 = arith.constant 0 : index
    %137 = vector.load %arg6[%c0_80, %c0_81] : memref<32x2xf32, #tpu.memory_space<vmem>>, vector<32x2xf32>
    %138 = vector.shape_cast %137 : vector<32x2xf32> to vector<1x32x2xf32>
    %139 = vector.broadcast %136 : vector<1x32x1xf32> to vector<1x32x2xf32>
    %140 = arith.mulf %139, %138 : vector<1x32x2xf32>
    %cst_82 = arith.constant dense<0.000000e+00> : vector<1x2xf32>
    %141 = vector.multi_reduction <add>, %140, %cst_82 [1] : vector<1x32x2xf32> to vector<1x2xf32>
    %c0_83 = arith.constant 0 : index
    %c0_84 = arith.constant 0 : index
    %142 = vector.load %arg7[%c0_83, %c0_84] : memref<1x2xf32, #tpu.memory_space<vmem>>, vector<1x2xf32>
    %143 = arith.addf %141, %142 : vector<1x2xf32>
    %144 = arith.negf %143 : vector<1x2xf32>
    %145 = math.exp %144 : vector<1x2xf32>
    %cst_85 = arith.constant 1.000000e+00 : f32
    %146 = vector.broadcast %cst_85 : f32 to vector<1x2xf32>
    %147 = arith.addf %146, %145 : vector<1x2xf32>
    %148 = arith.divf %146, %147 : vector<1x2xf32>
    %149 = arith.mulf %143, %148 : vector<1x2xf32>
    %150 = vector.shape_cast %149 : vector<1x2xf32> to vector<1x2x1xf32>
    %c0_86 = arith.constant 0 : index
    %c0_87 = arith.constant 0 : index
    %151 = vector.load %arg8[%c0_86, %c0_87] : memref<2x32xf32, #tpu.memory_space<vmem>>, vector<2x32xf32>
    %152 = vector.shape_cast %151 : vector<2x32xf32> to vector<1x2x32xf32>
    %153 = vector.broadcast %150 : vector<1x2x1xf32> to vector<1x2x32xf32>
    %154 = arith.mulf %153, %152 : vector<1x2x32xf32>
    %cst_88 = arith.constant dense<0.000000e+00> : vector<1x32xf32>
    %155 = vector.multi_reduction <add>, %154, %cst_88 [1] : vector<1x2x32xf32> to vector<1x32xf32>
    %c0_89 = arith.constant 0 : index
    %c0_90 = arith.constant 0 : index
    %156 = vector.load %arg9[%c0_89, %c0_90] : memref<1x32xf32, #tpu.memory_space<vmem>>, vector<1x32xf32>
    %157 = arith.addf %155, %156 : vector<1x32xf32>
    %158 = arith.negf %157 : vector<1x32xf32>
    %159 = math.exp %158 : vector<1x32xf32>
    %cst_91 = arith.constant 1.000000e+00 : f32
    %160 = vector.broadcast %cst_91 : f32 to vector<1x32xf32>
    %161 = arith.addf %160, %159 : vector<1x32xf32>
    %162 = arith.divf %160, %161 : vector<1x32xf32>
    %163 = vector.shape_cast %162 : vector<1x32xf32> to vector<1x1x32xf32>
    %164 = vector.broadcast %163 : vector<1x1x32xf32> to vector<16x16x32xf32>
    %165 = arith.mulf %128, %164 : vector<16x16x32xf32>
    %166 = vector.extract_strided_slice %165 {offsets = [0, 0, 0], sizes = [1, 16, 32], strides = [1, 1, 1]} : vector<16x16x32xf32> to vector<1x16x32xf32>
    %167 = vector.shape_cast %166 : vector<1x16x32xf32> to vector<16x32xf32>
    %c0_92 = arith.constant 0 : index
    %c0_93 = arith.constant 0 : index
    %168 = vector.load %arg14[%c0_92, %c0_93] : memref<256x32xf32, #tpu.memory_space<vmem>>, vector<16x32xf32>
    tpu.vector_store %arg14[%c0_92, %c0_93], %167 {strides = array<i32>} : memref<256x32xf32, #tpu.memory_space<vmem>>, vector<16x32xf32>,
    %169 = vector.extract_strided_slice %165 {offsets = [1, 0, 0], sizes = [1, 16, 32], strides = [1, 1, 1]} : vector<16x16x32xf32> to vector<1x16x32xf32>
    %170 = vector.shape_cast %169 : vector<1x16x32xf32> to vector<16x32xf32>
    %c16_94 = arith.constant 16 : index
    %c0_95 = arith.constant 0 : index
    %171 = vector.load %arg14[%c16_94, %c0_95] : memref<256x32xf32, #tpu.memory_space<vmem>>, vector<16x32xf32>
    tpu.vector_store %arg14[%c16_94, %c0_95], %170 {strides = array<i32>} : memref<256x32xf32, #tpu.memory_space<vmem>>, vector<16x32xf32>,
    %172 = vector.extract_strided_slice %165 {offsets = [2, 0, 0], sizes = [1, 16, 32], strides = [1, 1, 1]} : vector<16x16x32xf32> to vector<1x16x32xf32>
    %173 = vector.shape_cast %172 : vector<1x16x32xf32> to vector<16x32xf32>
    %c32 = arith.constant 32 : index
    %c0_96 = arith.constant 0 : index
    %174 = vector.load %arg14[%c32, %c0_96] : memref<256x32xf32, #tpu.memory_space<vmem>>, vector<16x32xf32>
    tpu.vector_store %arg14[%c32, %c0_96], %173 {strides = array<i32>} : memref<256x32xf32, #tpu.memory_space<vmem>>, vector<16x32xf32>,
    %175 = vector.extract_strided_slice %165 {offsets = [3, 0, 0], sizes = [1, 16, 32], strides = [1, 1, 1]} : vector<16x16x32xf32> to vector<1x16x32xf32>
    %176 = vector.shape_cast %175 : vector<1x16x32xf32> to vector<16x32xf32>
    %c48 = arith.constant 48 : index
    %c0_97 = arith.constant 0 : index
    %177 = vector.load %arg14[%c48, %c0_97] : memref<256x32xf32, #tpu.memory_space<vmem>>, vector<16x32xf32>
    tpu.vector_store %arg14[%c48, %c0_97], %176 {strides = array<i32>} : memref<256x32xf32, #tpu.memory_space<vmem>>, vector<16x32xf32>,
    %178 = vector.extract_strided_slice %165 {offsets = [4, 0, 0], sizes = [1, 16, 32], strides = [1, 1, 1]} : vector<16x16x32xf32> to vector<1x16x32xf32>
    %179 = vector.shape_cast %178 : vector<1x16x32xf32> to vector<16x32xf32>
    %c64 = arith.constant 64 : index
    %c0_98 = arith.constant 0 : index
    %180 = vector.load %arg14[%c64, %c0_98] : memref<256x32xf32, #tpu.memory_space<vmem>>, vector<16x32xf32>
    tpu.vector_store %arg14[%c64, %c0_98], %179 {strides = array<i32>} : memref<256x32xf32, #tpu.memory_space<vmem>>, vector<16x32xf32>,
    %181 = vector.extract_strided_slice %165 {offsets = [5, 0, 0], sizes = [1, 16, 32], strides = [1, 1, 1]} : vector<16x16x32xf32> to vector<1x16x32xf32>
    %182 = vector.shape_cast %181 : vector<1x16x32xf32> to vector<16x32xf32>
    %c80 = arith.constant 80 : index
    %c0_99 = arith.constant 0 : index
    %183 = vector.load %arg14[%c80, %c0_99] : memref<256x32xf32, #tpu.memory_space<vmem>>, vector<16x32xf32>
    tpu.vector_store %arg14[%c80, %c0_99], %182 {strides = array<i32>} : memref<256x32xf32, #tpu.memory_space<vmem>>, vector<16x32xf32>,
    %184 = vector.extract_strided_slice %165 {offsets = [6, 0, 0], sizes = [1, 16, 32], strides = [1, 1, 1]} : vector<16x16x32xf32> to vector<1x16x32xf32>
    %185 = vector.shape_cast %184 : vector<1x16x32xf32> to vector<16x32xf32>
    %c96 = arith.constant 96 : index
    %c0_100 = arith.constant 0 : index
    %186 = vector.load %arg14[%c96, %c0_100] : memref<256x32xf32, #tpu.memory_space<vmem>>, vector<16x32xf32>
    tpu.vector_store %arg14[%c96, %c0_100], %185 {strides = array<i32>} : memref<256x32xf32, #tpu.memory_space<vmem>>, vector<16x32xf32>,
    %187 = vector.extract_strided_slice %165 {offsets = [7, 0, 0], sizes = [1, 16, 32], strides = [1, 1, 1]} : vector<16x16x32xf32> to vector<1x16x32xf32>
    %188 = vector.shape_cast %187 : vector<1x16x32xf32> to vector<16x32xf32>
    %c112 = arith.constant 112 : index
    %c0_101 = arith.constant 0 : index
    %189 = vector.load %arg14[%c112, %c0_101] : memref<256x32xf32, #tpu.memory_space<vmem>>, vector<16x32xf32>
    tpu.vector_store %arg14[%c112, %c0_101], %188 {strides = array<i32>} : memref<256x32xf32, #tpu.memory_space<vmem>>, vector<16x32xf32>,
    %190 = vector.extract_strided_slice %165 {offsets = [8, 0, 0], sizes = [1, 16, 32], strides = [1, 1, 1]} : vector<16x16x32xf32> to vector<1x16x32xf32>
    %191 = vector.shape_cast %190 : vector<1x16x32xf32> to vector<16x32xf32>
    %c128 = arith.constant 128 : index
    %c0_102 = arith.constant 0 : index
    %192 = vector.load %arg14[%c128, %c0_102] : memref<256x32xf32, #tpu.memory_space<vmem>>, vector<16x32xf32>
    tpu.vector_store %arg14[%c128, %c0_102], %191 {strides = array<i32>} : memref<256x32xf32, #tpu.memory_space<vmem>>, vector<16x32xf32>,
    %193 = vector.extract_strided_slice %165 {offsets = [9, 0, 0], sizes = [1, 16, 32], strides = [1, 1, 1]} : vector<16x16x32xf32> to vector<1x16x32xf32>
    %194 = vector.shape_cast %193 : vector<1x16x32xf32> to vector<16x32xf32>
    %c144 = arith.constant 144 : index
    %c0_103 = arith.constant 0 : index
    %195 = vector.load %arg14[%c144, %c0_103] : memref<256x32xf32, #tpu.memory_space<vmem>>, vector<16x32xf32>
    tpu.vector_store %arg14[%c144, %c0_103], %194 {strides = array<i32>} : memref<256x32xf32, #tpu.memory_space<vmem>>, vector<16x32xf32>,
    %196 = vector.extract_strided_slice %165 {offsets = [10, 0, 0], sizes = [1, 16, 32], strides = [1, 1, 1]} : vector<16x16x32xf32> to vector<1x16x32xf32>
    %197 = vector.shape_cast %196 : vector<1x16x32xf32> to vector<16x32xf32>
    %c160 = arith.constant 160 : index
    %c0_104 = arith.constant 0 : index
    %198 = vector.load %arg14[%c160, %c0_104] : memref<256x32xf32, #tpu.memory_space<vmem>>, vector<16x32xf32>
    tpu.vector_store %arg14[%c160, %c0_104], %197 {strides = array<i32>} : memref<256x32xf32, #tpu.memory_space<vmem>>, vector<16x32xf32>,
    %199 = vector.extract_strided_slice %165 {offsets = [11, 0, 0], sizes = [1, 16, 32], strides = [1, 1, 1]} : vector<16x16x32xf32> to vector<1x16x32xf32>
    %200 = vector.shape_cast %199 : vector<1x16x32xf32> to vector<16x32xf32>
    %c176 = arith.constant 176 : index
    %c0_105 = arith.constant 0 : index
    %201 = vector.load %arg14[%c176, %c0_105] : memref<256x32xf32, #tpu.memory_space<vmem>>, vector<16x32xf32>
    tpu.vector_store %arg14[%c176, %c0_105], %200 {strides = array<i32>} : memref<256x32xf32, #tpu.memory_space<vmem>>, vector<16x32xf32>,
    %202 = vector.extract_strided_slice %165 {offsets = [12, 0, 0], sizes = [1, 16, 32], strides = [1, 1, 1]} : vector<16x16x32xf32> to vector<1x16x32xf32>
    %203 = vector.shape_cast %202 : vector<1x16x32xf32> to vector<16x32xf32>
    %c192 = arith.constant 192 : index
    %c0_106 = arith.constant 0 : index
    %204 = vector.load %arg14[%c192, %c0_106] : memref<256x32xf32, #tpu.memory_space<vmem>>, vector<16x32xf32>
    tpu.vector_store %arg14[%c192, %c0_106], %203 {strides = array<i32>} : memref<256x32xf32, #tpu.memory_space<vmem>>, vector<16x32xf32>,
    %205 = vector.extract_strided_slice %165 {offsets = [13, 0, 0], sizes = [1, 16, 32], strides = [1, 1, 1]} : vector<16x16x32xf32> to vector<1x16x32xf32>
    %206 = vector.shape_cast %205 : vector<1x16x32xf32> to vector<16x32xf32>
    %c208 = arith.constant 208 : index
    %c0_107 = arith.constant 0 : index
    %207 = vector.load %arg14[%c208, %c0_107] : memref<256x32xf32, #tpu.memory_space<vmem>>, vector<16x32xf32>
    tpu.vector_store %arg14[%c208, %c0_107], %206 {strides = array<i32>} : memref<256x32xf32, #tpu.memory_space<vmem>>, vector<16x32xf32>,
    %208 = vector.extract_strided_slice %165 {offsets = [14, 0, 0], sizes = [1, 16, 32], strides = [1, 1, 1]} : vector<16x16x32xf32> to vector<1x16x32xf32>
    %209 = vector.shape_cast %208 : vector<1x16x32xf32> to vector<16x32xf32>
    %c224 = arith.constant 224 : index
    %c0_108 = arith.constant 0 : index
    %210 = vector.load %arg14[%c224, %c0_108] : memref<256x32xf32, #tpu.memory_space<vmem>>, vector<16x32xf32>
    tpu.vector_store %arg14[%c224, %c0_108], %209 {strides = array<i32>} : memref<256x32xf32, #tpu.memory_space<vmem>>, vector<16x32xf32>,
    %211 = vector.extract_strided_slice %165 {offsets = [15, 0, 0], sizes = [1, 16, 32], strides = [1, 1, 1]} : vector<16x16x32xf32> to vector<1x16x32xf32>
    %212 = vector.shape_cast %211 : vector<1x16x32xf32> to vector<16x32xf32>
    %c240 = arith.constant 240 : index
    %c0_109 = arith.constant 0 : index
    %213 = vector.load %arg14[%c240, %c0_109] : memref<256x32xf32, #tpu.memory_space<vmem>>, vector<16x32xf32>
    tpu.vector_store %arg14[%c240, %c0_109], %212 {strides = array<i32>} : memref<256x32xf32, #tpu.memory_space<vmem>>, vector<16x32xf32>,
    %c0_110 = arith.constant 0 : index
    %c0_111 = arith.constant 0 : index
    %214 = vector.load %arg14[%c0_110, %c0_111] : memref<256x32xf32, #tpu.memory_space<vmem>>, vector<256x32xf32>
    %c0_112 = arith.constant 0 : index
    %c0_113 = arith.constant 0 : index
    %215 = vector.load %arg10[%c0_112, %c0_113] : memref<32x8xf32, #tpu.memory_space<vmem>>, vector<32x8xf32>
    %cst_114 = arith.constant dense<0.000000e+00> : vector<256x8xf32>
    %216 = tpu.matmul %214, %215, %cst_114 {dimension_numbers = #tpu.dot_dimension_numbers<[1], [0], [0], [1], [0, 0, 1, 1], [], []>} : vector<256x32xf32>, vector<32x8xf32>, vector<256x8xf32> -> vector<256x8xf32>
    %c0_115 = arith.constant 0 : index
    %c0_116 = arith.constant 0 : index
    %217 = vector.load %arg11[%c0_115, %c0_116] : memref<1x8xf32, #tpu.memory_space<vmem>>, vector<1x8xf32>
    %218 = vector.broadcast %217 : vector<1x8xf32> to vector<256x8xf32>
    %219 = arith.addf %216, %218 : vector<256x8xf32>
    %220 = arith.addf %219, %1 : vector<256x8xf32>
    %221 = vector.shape_cast %220 : vector<256x8xf32> to vector<1x256x8xf32>
    %c0_117 = arith.constant 0 : index
    %c0_118 = arith.constant 0 : index
    %c0_119 = arith.constant 0 : index
    %222 = vector.load %arg12[%c0_117, %c0_118, %c0_119] : memref<1x256x8xf32, #tpu.memory_space<vmem>>, vector<1x256x8xf32>
    tpu.vector_store %arg12[%c0_117, %c0_118, %c0_119], %221 {strides = array<i32>} : memref<1x256x8xf32, #tpu.memory_space<vmem>>, vector<1x256x8xf32>,
    return
  }
  func.func @transform_0(%arg0: i32) -> (i32, i32, i32) {
    %c0_i32 = arith.constant 0 : i32
    %c0_i32_0 = arith.constant 0 : i32
    %c0_i32_1 = arith.constant 0 : i32
    return %arg0, %c0_i32, %c0_i32_0 : i32, i32, i32
  }
  func.func @transform_1(%arg0: i32) -> (i32, i32) {
    %c0_i32 = arith.constant 0 : i32
    %c0_i32_0 = arith.constant 0 : i32
    %c0_i32_1 = arith.constant 0 : i32
    return %c0_i32, %c0_i32_0 : i32, i32
  }
  func.func @transform_2(%arg0: i32) -> (i32, i32) {
    %c0_i32 = arith.constant 0 : i32
    %c0_i32_0 = arith.constant 0 : i32
    %c0_i32_1 = arith.constant 0 : i32
    return %c0_i32, %c0_i32_0 : i32, i32
  }
  func.func @transform_3(%arg0: i32) -> (i32, i32) {
    %c0_i32 = arith.constant 0 : i32
    %c0_i32_0 = arith.constant 0 : i32
    %c0_i32_1 = arith.constant 0 : i32
    return %c0_i32, %c0_i32_0 : i32, i32
  }
  func.func @transform_4(%arg0: i32) -> (i32, i32) {
    %c0_i32 = arith.constant 0 : i32
    %c0_i32_0 = arith.constant 0 : i32
    %c0_i32_1 = arith.constant 0 : i32
    return %c0_i32, %c0_i32_0 : i32, i32
  }
  func.func @transform_5(%arg0: i32) -> (i32, i32) {
    %c0_i32 = arith.constant 0 : i32
    %c0_i32_0 = arith.constant 0 : i32
    %c0_i32_1 = arith.constant 0 : i32
    return %c0_i32, %c0_i32_0 : i32, i32
  }
  func.func @transform_6(%arg0: i32) -> (i32, i32) {
    %c0_i32 = arith.constant 0 : i32
    %c0_i32_0 = arith.constant 0 : i32
    %c0_i32_1 = arith.constant 0 : i32
    return %c0_i32, %c0_i32_0 : i32, i32
  }
  func.func @transform_7(%arg0: i32) -> (i32, i32) {
    %c0_i32 = arith.constant 0 : i32
    %c0_i32_0 = arith.constant 0 : i32
    %c0_i32_1 = arith.constant 0 : i32
    return %c0_i32, %c0_i32_0 : i32, i32
  }
  func.func @transform_8(%arg0: i32) -> (i32, i32) {
    %c0_i32 = arith.constant 0 : i32
    %c0_i32_0 = arith.constant 0 : i32
    %c0_i32_1 = arith.constant 0 : i32
    return %c0_i32, %c0_i32_0 : i32, i32
  }
  func.func @transform_9(%arg0: i32) -> (i32, i32) {
    %c0_i32 = arith.constant 0 : i32
    %c0_i32_0 = arith.constant 0 : i32
    %c0_i32_1 = arith.constant 0 : i32
    return %c0_i32, %c0_i32_0 : i32, i32
  }
  func.func @transform_10(%arg0: i32) -> (i32, i32) {
    %c0_i32 = arith.constant 0 : i32
    %c0_i32_0 = arith.constant 0 : i32
    %c0_i32_1 = arith.constant 0 : i32
    return %c0_i32, %c0_i32_0 : i32, i32
  }
  func.func @transform_11(%arg0: i32) -> (i32, i32, i32) {
    %c0_i32 = arith.constant 0 : i32
    %c0_i32_0 = arith.constant 0 : i32
    %c0_i32_1 = arith.constant 0 : i32
    return %arg0, %c0_i32, %c0_i32_0 : i32, i32, i32
  }
}

</mosaic_0001>

<llo_original>
// kernel: tpu_custom_call.1
$region0: #{tpu_custom_call.1}
  #allocation0 [shape = 'u32[]', space=smem, size = 0x4, offset = 0x4, fixed_abs, tag = 'smem constant byte address 0x4 - core index']
  #allocation1 [shape = 'u32[144,128]{1,0:T(1,128)}', space=vmem, size = 0x12000, scoped, tag = 'internal scratch']
  #allocation2 [shape = 'f32[18,32,32]{2,1,0:T(8,128)}', space=vmem, size = 0x48000, scoped, tag = 'scratch operand']
  #allocation3 [shape = 'f32[256,32]{1,0:T(8,128)}', space=vmem, size = 0x20000, scoped, tag = 'scratch operand']
  %s0 = inlined_call_operand.vmem [shape: f32[2,256,8], index: 0, kind: input, shape index: {}]
  %s1 = inlined_call_operand.vmem [shape: f32[8,32], index: 1, kind: input, shape index: {}]
  %s2 = inlined_call_operand.vmem [shape: f32[1,32], index: 2, kind: input, shape index: {}]
  %s3 = inlined_call_operand.vmem [shape: f32[9,32], index: 3, kind: input, shape index: {}]
  %s4 = inlined_call_operand.vmem [shape: f32[1,32], index: 4, kind: input, shape index: {}]
  %s5 = inlined_call_operand.vmem [shape: f32[32,2], index: 5, kind: input, shape index: {}]
  %s6 = inlined_call_operand.vmem [shape: f32[1,2], index: 6, kind: input, shape index: {}]
  %s7 = inlined_call_operand.vmem [shape: f32[2,32], index: 7, kind: input, shape index: {}]
  %s8 = inlined_call_operand.vmem [shape: f32[1,32], index: 8, kind: input, shape index: {}]
  %s9 = inlined_call_operand.vmem [shape: f32[32,8], index: 9, kind: input, shape index: {}]
  %s10 = inlined_call_operand.vmem [shape: f32[1,8], index: 10, kind: input, shape index: {}]
  %s11 = inlined_call_operand.vmem [shape: f32[2,256,8], index: 11, kind: output, shape index: {}]
  %s12 = sld [smem:[#allocation0]]
  $region77: #{tpu_custom_call.1} parent=0
    _
  %s14 = ssub.s32 1, %s12
  %s15 = scalar_select 0, %s14, %s12
  loop: start=0, step=1, limit=4
  $region2: #{tpu_custom_call.1} parent=0 // loop_pre_header
    _
  $region3: #{tpu_custom_call.1} parent=0 // loop_header
    %s17 = sphi 0, %s21
    %p18 = scmp.ge.s32.totalorder %s17, 4
    %s27 = sphi 0, %s29
    %s30 = sphi 0, %s27
    %s31 = sphi 0, %s30
    %s47 = sphi 0, %s31
    %s51 = sphi 0, %s51
    %s53 = sphi 0, %s51
    %s54 = sphi 0, %s53
    %s68 = sphi 0, %s54
    %s72 = sphi 0, %s72
    %s74 = sphi 0, %s72
    %s75 = sphi 0, %s74
    %s89 = sphi 0, %s75
    %s93 = sphi 0, %s93
    %s95 = sphi 0, %s93
    %s96 = sphi 0, %s95
    %s110 = sphi 0, %s96
    %s114 = sphi 0, %s114
    %s116 = sphi 0, %s114
    %s117 = sphi 0, %s116
    %s131 = sphi 0, %s117
    %s135 = sphi 0, %s135
    %s137 = sphi 0, %s135
    %s138 = sphi 0, %s137
    %s152 = sphi 0, %s138
    %s156 = sphi 0, %s156
    %s158 = sphi 0, %s156
    %s159 = sphi 0, %s158
    %s173 = sphi 0, %s159
    %s177 = sphi 0, %s177
    %s179 = sphi 0, %s177
    %s180 = sphi 0, %s179
    %s194 = sphi 0, %s180
    %s198 = sphi 0, %s198
    %s200 = sphi 0, %s198
    %s201 = sphi 0, %s200
    %s215 = sphi 0, %s201
    %s219 = sphi 0, %s219
    %s221 = sphi 0, %s219
    %s222 = sphi 0, %s221
    %s236 = sphi 0, %s222
    %s240 = sphi 0, %s240
    %s242 = sphi 0, %s240
    %s243 = sphi 0, %s242
    %s257 = sphi 0, %s243
    %s263 = sphi 0, %s265
    %s266 = sphi 0, %s263
    %s267 = sphi 0, %s266
    %s283 = sphi 0, %s267
  $region4: #{tpu_custom_call.1} parent=0 // loop_header_branch
    %20 = sbr.rel (%p18) target = $region8
  $region5: #{tpu_custom_call.1} parent=0 // loop_body
    %s22 = ssub.s32 %s17, 1
    %s23 = ssub.s32 %s17, 2
    %s24 = sadd.s32 %s17, 1
    %s25 = ssub.s32 %s17, %s24
    %p26 = scmp.eq.s32.totalorder %s25, 0
    %s28 = sadd.s32 %s27, 1
    %s29 = scalar_select %p26, %s27, %s28
    %p32 = pneg %p26
    %p33 = scmp.eq.s32.totalorder %s17, 1
    %p34 = por %p32, %p33
    %p35 = scmp.ne.s32.totalorder %s27, %s30
    %p36 = scmp.eq.s32.totalorder %s17, 0
    %p37 = por %p35, %p36
    %p38 = scmp.ne.s32.totalorder %s27, %s30
    %p39 = scmp.eq.s32.totalorder %s22, 1
    %p40 = por %p38, %p39
    %p41 = scmp.ne.s32.totalorder %s30, %s31
    %p42 = scmp.eq.s32.totalorder %s22, 0
    %p43 = por %p41, %p42
    %p44 = scmp.ne.s32.totalorder %s30, %s31
    %p45 = scmp.eq.s32.totalorder %s23, 1
    %p46 = por %p44, %p45
    %p48 = scmp.ne.s32.totalorder %s31, %s47
    %p49 = scmp.eq.s32.totalorder %s23, 0
    %p50 = por %p48, %p49
    %s52 = sadd.s32 %s51, 1
    %p55 = scmp.eq.s32.totalorder %s17, 1
    %p56 = scmp.ne.s32.totalorder %s51, %s53
    %p57 = scmp.eq.s32.totalorder %s17, 0
    %p58 = por %p56, %p57
    %p59 = scmp.ne.s32.totalorder %s51, %s53
    %p60 = scmp.eq.s32.totalorder %s22, 1
    %p61 = por %p59, %p60
    %p62 = scmp.ne.s32.totalorder %s53, %s54
    %p63 = scmp.eq.s32.totalorder %s22, 0
    %p64 = por %p62, %p63
    %p65 = scmp.ne.s32.totalorder %s53, %s54
    %p66 = scmp.eq.s32.totalorder %s23, 1
    %p67 = por %p65, %p66
    %p69 = scmp.ne.s32.totalorder %s54, %s68
    %p70 = scmp.eq.s32.totalorder %s23, 0
    %p71 = por %p69, %p70
    %s73 = sadd.s32 %s72, 1
    %p76 = scmp.eq.s32.totalorder %s17, 1
    %p77 = scmp.ne.s32.totalorder %s72, %s74
    %p78 = scmp.eq.s32.totalorder %s17, 0
    %p79 = por %p77, %p78
    %p80 = scmp.ne.s32.totalorder %s72, %s74
    %p81 = scmp.eq.s32.totalorder %s22, 1
    %p82 = por %p80, %p81
    %p83 = scmp.ne.s32.totalorder %s74, %s75
    %p84 = scmp.eq.s32.totalorder %s22, 0
    %p85 = por %p83, %p84
    %p86 = scmp.ne.s32.totalorder %s74, %s75
    %p87 = scmp.eq.s32.totalorder %s23, 1
    %p88 = por %p86, %p87
    %p90 = scmp.ne.s32.totalorder %s75, %s89
    %p91 = scmp.eq.s32.totalorder %s23, 0
    %p92 = por %p90, %p91
    %s94 = sadd.s32 %s93, 1
    %p97 = scmp.eq.s32.totalorder %s17, 1
    %p98 = scmp.ne.s32.totalorder %s93, %s95
    %p99 = scmp.eq.s32.totalorder %s17, 0
    %p100 = por %p98, %p99
    %p101 = scmp.ne.s32.totalorder %s93, %s95
    %p102 = scmp.eq.s32.totalorder %s22, 1
    %p103 = por %p101, %p102
    %p104 = scmp.ne.s32.totalorder %s95, %s96
    %p105 = scmp.eq.s32.totalorder %s22, 0
    %p106 = por %p104, %p105
    %p107 = scmp.ne.s32.totalorder %s95, %s96
    %p108 = scmp.eq.s32.totalorder %s23, 1
    %p109 = por %p107, %p108
    %p111 = scmp.ne.s32.totalorder %s96, %s110
    %p112 = scmp.eq.s32.totalorder %s23, 0
    %p113 = por %p111, %p112
    %s115 = sadd.s32 %s114, 1
    %p118 = scmp.eq.s32.totalorder %s17, 1
    %p119 = scmp.ne.s32.totalorder %s114, %s116
    %p120 = scmp.eq.s32.totalorder %s17, 0
    %p121 = por %p119, %p120
    %p122 = scmp.ne.s32.totalorder %s114, %s116
    %p123 = scmp.eq.s32.totalorder %s22, 1
    %p124 = por %p122, %p123
    %p125 = scmp.ne.s32.totalorder %s116, %s117
    %p126 = scmp.eq.s32.totalorder %s22, 0
    %p127 = por %p125, %p126
    %p128 = scmp.ne.s32.totalorder %s116, %s117
    %p129 = scmp.eq.s32.totalorder %s23, 1
    %p130 = por %p128, %p129
    %p132 = scmp.ne.s32.totalorder %s117, %s131
    %p133 = scmp.eq.s32.totalorder %s23, 0
    %p134 = por %p132, %p133
    %s136 = sadd.s32 %s135, 1
    %p139 = scmp.eq.s32.totalorder %s17, 1
    %p140 = scmp.ne.s32.totalorder %s135, %s137
    %p141 = scmp.eq.s32.totalorder %s17, 0
    %p142 = por %p140, %p141
    %p143 = scmp.ne.s32.totalorder %s135, %s137
    %p144 = scmp.eq.s32.totalorder %s22, 1
    %p145 = por %p143, %p144
    %p146 = scmp.ne.s32.totalorder %s137, %s138
    %p147 = scmp.eq.s32.totalorder %s22, 0
    %p148 = por %p146, %p147
    %p149 = scmp.ne.s32.totalorder %s137, %s138
    %p150 = scmp.eq.s32.totalorder %s23, 1
    %p151 = por %p149, %p150
    %p153 = scmp.ne.s32.totalorder %s138, %s152
    %p154 = scmp.eq.s32.totalorder %s23, 0
    %p155 = por %p153, %p154
    %s157 = sadd.s32 %s156, 1
    %p160 = scmp.eq.s32.totalorder %s17, 1
    %p161 = scmp.ne.s32.totalorder %s156, %s158
    %p162 = scmp.eq.s32.totalorder %s17, 0
    %p163 = por %p161, %p162
    %p164 = scmp.ne.s32.totalorder %s156, %s158
    %p165 = scmp.eq.s32.totalorder %s22, 1
    %p166 = por %p164, %p165
    %p167 = scmp.ne.s32.totalorder %s158, %s159
    %p168 = scmp.eq.s32.totalorder %s22, 0
    %p169 = por %p167, %p168
    %p170 = scmp.ne.s32.totalorder %s158, %s159
    %p171 = scmp.eq.s32.totalorder %s23, 1
    %p172 = por %p170, %p171
    %p174 = scmp.ne.s32.totalorder %s159, %s173
    %p175 = scmp.eq.s32.totalorder %s23, 0
    %p176 = por %p174, %p175
    %s178 = sadd.s32 %s177, 1
    %p181 = scmp.eq.s32.totalorder %s17, 1
    %p182 = scmp.ne.s32.totalorder %s177, %s179
    %p183 = scmp.eq.s32.totalorder %s17, 0
    %p184 = por %p182, %p183
    %p185 = scmp.ne.s32.totalorder %s177, %s179
    %p186 = scmp.eq.s32.totalorder %s22, 1
    %p187 = por %p185, %p186
    %p188 = scmp.ne.s32.totalorder %s179, %s180
    %p189 = scmp.eq.s32.totalorder %s22, 0
    %p190 = por %p188, %p189
    %p191 = scmp.ne.s32.totalorder %s179, %s180
    %p192 = scmp.eq.s32.totalorder %s23, 1
    %p193 = por %p191, %p192
    %p195 = scmp.ne.s32.totalorder %s180, %s194
    %p196 = scmp.eq.s32.totalorder %s23, 0
    %p197 = por %p195, %p196
    %s199 = sadd.s32 %s198, 1
    %p202 = scmp.eq.s32.totalorder %s17, 1
    %p203 = scmp.ne.s32.totalorder %s198, %s200
    %p204 = scmp.eq.s32.totalorder %s17, 0
    %p205 = por %p203, %p204
    %p206 = scmp.ne.s32.totalorder %s198, %s200
    %p207 = scmp.eq.s32.totalorder %s22, 1
    %p208 = por %p206, %p207
    %p209 = scmp.ne.s32.totalorder %s200, %s201
    %p210 = scmp.eq.s32.totalorder %s22, 0
    %p211 = por %p209, %p210
    %p212 = scmp.ne.s32.totalorder %s200, %s201
    %p213 = scmp.eq.s32.totalorder %s23, 1
    %p214 = por %p212, %p213
    %p216 = scmp.ne.s32.totalorder %s201, %s215
    %p217 = scmp.eq.s32.totalorder %s23, 0
    %p218 = por %p216, %p217
    %s220 = sadd.s32 %s219, 1
    %p223 = scmp.eq.s32.totalorder %s17, 1
    %p224 = scmp.ne.s32.totalorder %s219, %s221
    %p225 = scmp.eq.s32.totalorder %s17, 0
    %p226 = por %p224, %p225
    %p227 = scmp.ne.s32.totalorder %s219, %s221
    %p228 = scmp.eq.s32.totalorder %s22, 1
    %p229 = por %p227, %p228
    %p230 = scmp.ne.s32.totalorder %s221, %s222
    %p231 = scmp.eq.s32.totalorder %s22, 0
    %p232 = por %p230, %p231
    %p233 = scmp.ne.s32.totalorder %s221, %s222
    %p234 = scmp.eq.s32.totalorder %s23, 1
    %p235 = por %p233, %p234
    %p237 = scmp.ne.s32.totalorder %s222, %s236
    %p238 = scmp.eq.s32.totalorder %s23, 0
    %p239 = por %p237, %p238
    %s241 = sadd.s32 %s240, 1
    %p244 = scmp.eq.s32.totalorder %s17, 1
    %p245 = scmp.ne.s32.totalorder %s240, %s242
    %p246 = scmp.eq.s32.totalorder %s17, 0
    %p247 = por %p245, %p246
    %p248 = scmp.ne.s32.totalorder %s240, %s242
    %p249 = scmp.eq.s32.totalorder %s22, 1
    %p250 = por %p248, %p249
    %p251 = scmp.ne.s32.totalorder %s242, %s243
    %p252 = scmp.eq.s32.totalorder %s22, 0
    %p253 = por %p251, %p252
    %p254 = scmp.ne.s32.totalorder %s242, %s243
    %p255 = scmp.eq.s32.totalorder %s23, 1
    %p256 = por %p254, %p255
    %p258 = scmp.ne.s32.totalorder %s243, %s257
    %p259 = scmp.eq.s32.totalorder %s23, 0
    %p260 = por %p258, %p259
    %s261 = ssub.s32 %s17, %s24
    %p262 = scmp.eq.s32.totalorder %s261, 0
    %s264 = sadd.s32 %s263, 1
    %s265 = scalar_select %p262, %s263, %s264
    %p268 = pneg %p262
    %p269 = scmp.eq.s32.totalorder %s17, 1
    %p270 = por %p268, %p269
    %p271 = scmp.ne.s32.totalorder %s263, %s266
    %p272 = scmp.eq.s32.totalorder %s17, 0
    %p273 = por %p271, %p272
    %p274 = scmp.ne.s32.totalorder %s263, %s266
    %p275 = scmp.eq.s32.totalorder %s22, 1
    %p276 = por %p274, %p275
    %p277 = scmp.ne.s32.totalorder %s266, %s267
    %p278 = scmp.eq.s32.totalorder %s22, 0
    %p279 = por %p277, %p278
    %p280 = scmp.ne.s32.totalorder %s266, %s267
    %p281 = scmp.eq.s32.totalorder %s23, 1
    %p282 = por %p280, %p281
    %p284 = scmp.ne.s32.totalorder %s267, %s283
    %p285 = scmp.eq.s32.totalorder %s23, 0
    %p286 = por %p284, %p285
    %p287 = scmp.le.s32.totalorder 1, %s17
    %p288 = scmp.lt.s32.totalorder %s17, 3
    %p289 = pnand %p287, %p288
    %p290 = pneg %p289
    // Predicated region
    $region9: #{tpu_custom_call.1} parent=5 // pred_check
      _
    $region10: #{tpu_custom_call.1} parent=5 // pred_check_branch
      %292 = sbr.rel (%p289) target = $region12
    $region11: #{tpu_custom_call.1} parent=5 // pred_region
      %s293 = ssub.s32 %s17, 1
      // Predicated region
      $region13: #{tpu_custom_call.1} parent=11 // pred_check
        %p294 = pneg %p64
      $region14: #{tpu_custom_call.1} parent=11 // pred_check_branch
        %296 = sbr.rel (%p294) target = $region16
      $region15: #{tpu_custom_call.1} parent=11 // pred_region
        _
      $region16: #{tpu_custom_call.1} parent=11 // pred_fallthru
        _
      // Predicated region
      $region17: #{tpu_custom_call.1} parent=11 // pred_check
        %p297 = pneg %p85
      $region18: #{tpu_custom_call.1} parent=11 // pred_check_branch
        %299 = sbr.rel (%p297) target = $region20
      $region19: #{tpu_custom_call.1} parent=11 // pred_region
        _
      $region20: #{tpu_custom_call.1} parent=11 // pred_fallthru
        _
      // Predicated region
      $region21: #{tpu_custom_call.1} parent=11 // pred_check
        %p300 = pneg %p106
      $region22: #{tpu_custom_call.1} parent=11 // pred_check_branch
        %302 = sbr.rel (%p300) target = $region24
      $region23: #{tpu_custom_call.1} parent=11 // pred_region
        _
      $region24: #{tpu_custom_call.1} parent=11 // pred_fallthru
        _
      // Predicated region
      $region25: #{tpu_custom_call.1} parent=11 // pred_check
        %p303 = pneg %p127
      $region26: #{tpu_custom_call.1} parent=11 // pred_check_branch
        %305 = sbr.rel (%p303) target = $region28
      $region27: #{tpu_custom_call.1} parent=11 // pred_region
        _
      $region28: #{tpu_custom_call.1} parent=11 // pred_fallthru
        _
      // Predicated region
      $region29: #{tpu_custom_call.1} parent=11 // pred_check
        %p306 = pneg %p148
      $region30: #{tpu_custom_call.1} parent=11 // pred_check_branch
        %308 = sbr.rel (%p306) target = $region32
      $region31: #{tpu_custom_call.1} parent=11 // pred_region
        _
      $region32: #{tpu_custom_call.1} parent=11 // pred_fallthru
        _
      // Predicated region
      $region33: #{tpu_custom_call.1} parent=11 // pred_check
        %p309 = pneg %p169
      $region34: #{tpu_custom_call.1} parent=11 // pred_check_branch
        %311 = sbr.rel (%p309) target = $region36
      $region35: #{tpu_custom_call.1} parent=11 // pred_region
        _
      $region36: #{tpu_custom_call.1} parent=11 // pred_fallthru
        _
      // Predicated region
      $region37: #{tpu_custom_call.1} parent=11 // pred_check
        %p312 = pneg %p190
      $region38: #{tpu_custom_call.1} parent=11 // pred_check_branch
        %314 = sbr.rel (%p312) target = $region40
      $region39: #{tpu_custom_call.1} parent=11 // pred_region
        _
      $region40: #{tpu_custom_call.1} parent=11 // pred_fallthru
        _
      // Predicated region
      $region41: #{tpu_custom_call.1} parent=11 // pred_check
        %p315 = pneg %p211
      $region42: #{tpu_custom_call.1} parent=11 // pred_check_branch
        %317 = sbr.rel (%p315) target = $region44
      $region43: #{tpu_custom_call.1} parent=11 // pred_region
        _
      $region44: #{tpu_custom_call.1} parent=11 // pred_fallthru
        _
      // Predicated region
      $region45: #{tpu_custom_call.1} parent=11 // pred_check
        %p318 = pneg %p232
      $region46: #{tpu_custom_call.1} parent=11 // pred_check_branch
        %320 = sbr.rel (%p318) target = $region48
      $region47: #{tpu_custom_call.1} parent=11 // pred_region
        _
      $region48: #{tpu_custom_call.1} parent=11 // pred_fallthru
        _
      // Predicated region
      $region49: #{tpu_custom_call.1} parent=11 // pred_check
        %p321 = pneg %p253
      $region50: #{tpu_custom_call.1} parent=11 // pred_check_branch
        %323 = sbr.rel (%p321) target = $region52
      $region51: #{tpu_custom_call.1} parent=11 // pred_region
        _
      $region52: #{tpu_custom_call.1} parent=11 // pred_fallthru
        _
    $region12: #{tpu_custom_call.1} parent=5 // pred_fallthru
      _
    %p324 = scmp.lt.s32.totalorder %s17, 2
    // Predicated region
    $region53: #{tpu_custom_call.1} parent=5 // pred_check
      %p325 = pneg %p324
    $region54: #{tpu_custom_call.1} parent=5 // pred_check_branch
      %327 = sbr.rel (%p325) target = $region56
    $region55: #{tpu_custom_call.1} parent=5 // pred_region
      // Predicated region
      $region57: #{tpu_custom_call.1} parent=55 // pred_check
        %p328 = pneg %p37
      $region58: #{tpu_custom_call.1} parent=55 // pred_check_branch
        %330 = sbr.rel (%p328) target = $region60
      $region59: #{tpu_custom_call.1} parent=55 // pred_region
        %p331 = scmp.lt.s32.totalorder %s17, 1
        %s332 = scalar_select %p331, %s17, 1
        %s333 = smul.addr %s332, 32
        %s334 = smul.addr %s333, 8
        %s335 = scalar_lea.vmem %s0, %s334
      $region60: #{tpu_custom_call.1} parent=55 // pred_fallthru
        _
    $region56: #{tpu_custom_call.1} parent=5 // pred_fallthru
      _
    %p336 = scmp.le.s32.totalorder 1, %s17
    %p337 = scmp.lt.s32.totalorder %s17, 3
    %p338 = pnand %p336, %p337
    %p339 = pneg %p338
    // Predicated region
    $region61: #{tpu_custom_call.1} parent=5 // pred_check
      _
    $region62: #{tpu_custom_call.1} parent=5 // pred_check_branch
      %341 = sbr.rel (%p338) target = $region64
    $region63: #{tpu_custom_call.1} parent=5 // pred_region
      %s342 = ssub.s32 %s17, 1
      %p343 = scmp.lt.s32.totalorder %s22, 1
      %s344 = scalar_select %p343, %s22, 1
      %s345 = smul.addr %s344, 32
      %s346 = smul.addr %s345, 8
      %s347 = scalar_lea.vmem %s0, %s346
      %p348 = pneg %p43
      %p349 = pneg %p40
      %p350 = pneg %p64
      %p351 = pneg %p61
      %p352 = pneg %p85
      %p353 = pneg %p82
      %p354 = pneg %p106
      %p355 = pneg %p103
      %p356 = pneg %p127
      %p357 = pneg %p124
      %p358 = pneg %p148
      %p359 = pneg %p145
      %p360 = pneg %p169
      %p361 = pneg %p166
      %p362 = pneg %p190
      %p363 = pneg %p187
      %p364 = pneg %p211
      %p365 = pneg %p208
      %p366 = pneg %p232
      %p367 = pneg %p229
      %p368 = pneg %p253
      %p369 = pneg %p250
      %p370 = pneg %p279
      %p371 = pneg %p276
      %p372 = scmp.lt.s32.totalorder %s22, 1
      %s373 = scalar_select %p372, %s22, 1
      %s374 = smul.addr %s373, 32
      %s375 = smul.addr %s374, 8
      %s376 = scalar_lea.vmem %s11, %s375
      %p377 = scmp.lt.s32.totalorder %s22, 1
      %s378 = scalar_select %p377, %s22, 1
      %s379 = smul.addr %s378, 32
      %s380 = smul.addr %s379, 8
      %s381 = scalar_lea.vmem %s0, %s380
      %p382 = scmp.lt.s32.totalorder %s22, 1
      %s383 = scalar_select %p382, %s22, 1
      %s384 = smul.addr %s383, 32
      %s385 = smul.addr %s384, 8
      %s386 = scalar_lea.vmem %s11, %s385
      %v387 = vld [vmem:[%s381] sm:$0xff]
      %v388 = vld [vmem:[%s381 + $0x8] sm:$0xff]
      %v389 = vld [vmem:[%s381 + $0x10] sm:$0xff]
      %v390 = vld [vmem:[%s381 + $0x18] sm:$0xff]
      %v391 = vld [vmem:[%s381 + $0x20] sm:$0xff]
      %v392 = vld [vmem:[%s381 + $0x28] sm:$0xff]
      %v393 = vld [vmem:[%s381 + $0x30] sm:$0xff]
      %v394 = vld [vmem:[%s381 + $0x38] sm:$0xff]
      %v395 = vld [vmem:[%s381 + $0x40] sm:$0xff]
      %v396 = vld [vmem:[%s381 + $0x48] sm:$0xff]
      %v397 = vld [vmem:[%s381 + $0x50] sm:$0xff]
      %v398 = vld [vmem:[%s381 + $0x58] sm:$0xff]
      %v399 = vld [vmem:[%s381 + $0x60] sm:$0xff]
      %v400 = vld [vmem:[%s381 + $0x68] sm:$0xff]
      %v401 = vld [vmem:[%s381 + $0x70] sm:$0xff]
      %v402 = vld [vmem:[%s381 + $0x78] sm:$0xff]
      %v403 = vld [vmem:[%s381 + $0x80] sm:$0xff]
      %v404 = vld [vmem:[%s381 + $0x88] sm:$0xff]
      %v405 = vld [vmem:[%s381 + $0x90] sm:$0xff]
      %v406 = vld [vmem:[%s381 + $0x98] sm:$0xff]
      %v407 = vld [vmem:[%s381 + $0xa0] sm:$0xff]
      %v408 = vld [vmem:[%s381 + $0xa8] sm:$0xff]
      %v409 = vld [vmem:[%s381 + $0xb0] sm:$0xff]
      %v410 = vld [vmem:[%s381 + $0xb8] sm:$0xff]
      %v411 = vld [vmem:[%s381 + $0xc0] sm:$0xff]
      %v412 = vld [vmem:[%s381 + $0xc8] sm:$0xff]
      %v413 = vld [vmem:[%s381 + $0xd0] sm:$0xff]
      %v414 = vld [vmem:[%s381 + $0xd8] sm:$0xff]
      %v415 = vld [vmem:[%s381 + $0xe0] sm:$0xff]
      %v416 = vld [vmem:[%s381 + $0xe8] sm:$0xff]
      %v417 = vld [vmem:[%s381 + $0xf0] sm:$0xff]
      %v418 = vld [vmem:[%s381 + $0xf8] sm:$0xff]
      %v419 = vld [vmem:[%s1] sm:$0xff]
      %v420 = vld [vmem:[%s2] sm:$0x1]
      %v422 = vlaneseq
      %v423 = vshrl.u32 %v422, 7
      %v424 = vsub.s32 0, %v423
      %v425 = vrot.slane %v420, %v424
      %vm427 = vcmask 64512
      %v429 = vsel %vm427, %v387, 0
      %v432 = vsel %vm427, %v388, 0
      %v435 = vsel %vm427, %v389, 0
      %v438 = vsel %vm427, %v390, 0
      %v441 = vsel %vm427, %v391, 0
      %v444 = vsel %vm427, %v392, 0
      %v447 = vsel %vm427, %v393, 0
      %v450 = vsel %vm427, %v394, 0
      %v453 = vsel %vm427, %v395, 0
      %v456 = vsel %vm427, %v396, 0
      %v459 = vsel %vm427, %v397, 0
      %v462 = vsel %vm427, %v398, 0
      %v465 = vsel %vm427, %v399, 0
      %v468 = vsel %vm427, %v400, 0
      %v471 = vsel %vm427, %v401, 0
      %v474 = vsel %vm427, %v402, 0
      %v477 = vsel %vm427, %v403, 0
      %v480 = vsel %vm427, %v404, 0
      %v483 = vsel %vm427, %v405, 0
      %v486 = vsel %vm427, %v406, 0
      %v489 = vsel %vm427, %v407, 0
      %v492 = vsel %vm427, %v408, 0
      %v495 = vsel %vm427, %v409, 0
      %v498 = vsel %vm427, %v410, 0
      %v501 = vsel %vm427, %v411, 0
      %v504 = vsel %vm427, %v412, 0
      %v507 = vsel %vm427, %v413, 0
      %v510 = vsel %vm427, %v414, 0
      %v513 = vsel %vm427, %v415, 0
      %v516 = vsel %vm427, %v416, 0
      %v519 = vsel %vm427, %v417, 0
      %v522 = vsel %vm427, %v418, 0
      %524 = vmatprep.subr.mxu0 0.0
      %525 = vmatpush1.msra.mxu0 0.0
      %526 = vmatprep.subr.mxu0 0.0
      %527 = vmatpush1.msra.mxu0 0.0
      %528 = vmatprep.subr.mxu0 0.0
      %529 = vmatpush1.msra.mxu0 0.0
      %530 = vmatprep.subr.mxu0 0.0
      %531 = vmatpush1.msra.mxu0 0.0
      %532 = vmatprep.subr.mxu0 0.0
      %533 = vmatpush1.msra.mxu0 0.0
      %534 = vmatprep.subr.mxu0 0.0
      %535 = vmatpush1.msra.mxu0 0.0
      %536 = vmatprep.subr.mxu0 0.0
      %537 = vmatpush1.msra.mxu0 0.0
      %538 = vmatprep.subr.mxu0 0.0
      %539 = vmatpush1.msra.mxu0 0.0
      %540 = vmatprep.subr.mxu0 0.0
      %541 = vmatpush1.msra.mxu0 0.0
      %542 = vmatprep.subr.mxu0 0.0
      %543 = vmatpush1.msra.mxu0 0.0
      %544 = vmatprep.subr.mxu0 0.0
      %545 = vmatpush1.msra.mxu0 0.0
      %546 = vmatprep.subr.mxu0 0.0
      %547 = vmatpush1.msra.mxu0 0.0
      %548 = vmatprep.subr.mxu0 0.0
      %549 = vmatpush1.msra.mxu0 0.0
      %550 = vmatprep.subr.mxu0 0.0
      %551 = vmatpush1.msra.mxu0 0.0
      %552 = vmatprep.subr.mxu0 0.0
      %553 = vmatpush1.msra.mxu0 0.0
      %554 = vmatprep.subr.mxu0 0.0
      %555 = vmatpush1.msra.mxu0 %v419
      %556 = vmatprep.subr.mxu0 0.0
      %557 = vmatpush2.msra.mxu0 0.0
      %558 = vmatprep.subr.mxu0 0.0
      %559 = vmatpush2.msra.mxu0 0.0
      %560 = vmatprep.subr.mxu0 0.0
      %561 = vmatpush2.msra.mxu0 0.0
      %562 = vmatprep.subr.mxu0 0.0
      %563 = vmatpush2.msra.mxu0 0.0
      %564 = vmatprep.subr.mxu0 0.0
      %565 = vmatpush2.msra.mxu0 0.0
      %566 = vmatprep.subr.mxu0 0.0
      %567 = vmatpush2.msra.mxu0 0.0
      %568 = vmatprep.subr.mxu0 0.0
      %569 = vmatpush2.msra.mxu0 0.0
      %570 = vmatprep.subr.mxu0 0.0
      %571 = vmatpush2.msra.mxu0 0.0
      %572 = vmatprep.subr.mxu0 0.0
      %573 = vmatpush2.msra.mxu0 0.0
      %574 = vmatprep.subr.mxu0 0.0
      %575 = vmatpush2.msra.mxu0 0.0
      %576 = vmatprep.subr.mxu0 0.0
      %577 = vmatpush2.msra.mxu0 0.0
      %578 = vmatprep.subr.mxu0 0.0
      %579 = vmatpush2.msra.mxu0 0.0
      %580 = vmatprep.subr.mxu0 0.0
      %581 = vmatpush2.msra.mxu0 0.0
      %582 = vmatprep.subr.mxu0 0.0
      %583 = vmatpush2.msra.mxu0 0.0
      %584 = vmatprep.subr.mxu0 0.0
      %585 = vmatpush2.msra.mxu0 0.0
      %586 = vmatprep.subr.mxu0 0.0
      %587 = vmatpush2.msra.mxu0 0.0
      %588 = vmatprep.mubr.f32.mxu0 0.0
      %589 = vmatmul.mubr.f32.gmra.mxu0 %v429
      %v590 = vpop.f32.mrf.mxu0
      %v591 = vadd.f32 %v425, %v590
      %v592 = vpop.f32.mrf.mxu0
      %593 = vmatprep.mubr.f32.mxu0 0.0
      %594 = vmatmul.mubr.f32.gmra.mxu0 %v432
      %v595 = vpop.f32.mrf.mxu0
      %v596 = vadd.f32 %v425, %v595
      %v597 = vpop.f32.mrf.mxu0
      %598 = vmatprep.mubr.f32.mxu0 0.0
      %599 = vmatmul.mubr.f32.gmra.mxu0 %v435
      %v600 = vpop.f32.mrf.mxu0
      %v601 = vadd.f32 %v425, %v600
      %v602 = vpop.f32.mrf.mxu0
      %603 = vmatprep.mubr.f32.mxu0 0.0
      %604 = vmatmul.mubr.f32.gmra.mxu0 %v438
      %v605 = vpop.f32.mrf.mxu0
      %v606 = vadd.f32 %v425, %v605
      %v607 = vpop.f32.mrf.mxu0
      %608 = vmatprep.mubr.f32.mxu0 0.0
      %609 = vmatmul.mubr.f32.gmra.mxu0 %v441
      %v610 = vpop.f32.mrf.mxu0
      %v611 = vadd.f32 %v425, %v610
      %v612 = vpop.f32.mrf.mxu0
      %613 = vmatprep.mubr.f32.mxu0 0.0
      %614 = vmatmul.mubr.f32.gmra.mxu0 %v444
      %v615 = vpop.f32.mrf.mxu0
      %v616 = vadd.f32 %v425, %v615
      %v617 = vpop.f32.mrf.mxu0
      %618 = vmatprep.mubr.f32.mxu0 0.0
      %619 = vmatmul.mubr.f32.gmra.mxu0 %v447
      %v620 = vpop.f32.mrf.mxu0
      %v621 = vadd.f32 %v425, %v620
      %v622 = vpop.f32.mrf.mxu0
      %623 = vmatprep.mubr.f32.mxu0 0.0
      %624 = vmatmul.mubr.f32.gmra.mxu0 %v450
      %v625 = vpop.f32.mrf.mxu0
      %v626 = vadd.f32 %v425, %v625
      %v627 = vpop.f32.mrf.mxu0
      %628 = vmatprep.mubr.f32.mxu0 0.0
      %629 = vmatmul.mubr.f32.gmra.mxu0 %v453
      %v630 = vpop.f32.mrf.mxu0
      %v631 = vadd.f32 %v425, %v630
      %v632 = vpop.f32.mrf.mxu0
      %633 = vmatprep.mubr.f32.mxu0 0.0
      %634 = vmatmul.mubr.f32.gmra.mxu0 %v456
      %v635 = vpop.f32.mrf.mxu0
      %v636 = vadd.f32 %v425, %v635
      %v637 = vpop.f32.mrf.mxu0
      %638 = vmatprep.mubr.f32.mxu0 0.0
      %639 = vmatmul.mubr.f32.gmra.mxu0 %v459
      %v640 = vpop.f32.mrf.mxu0
      %v641 = vadd.f32 %v425, %v640
      %v642 = vpop.f32.mrf.mxu0
      %643 = vmatprep.mubr.f32.mxu0 0.0
      %644 = vmatmul.mubr.f32.gmra.mxu0 %v462
      %v645 = vpop.f32.mrf.mxu0
      %v646 = vadd.f32 %v425, %v645
      %v647 = vpop.f32.mrf.mxu0
      %648 = vmatprep.mubr.f32.mxu0 0.0
      %649 = vmatmul.mubr.f32.gmra.mxu0 %v465
      %v650 = vpop.f32.mrf.mxu0
      %v651 = vadd.f32 %v425, %v650
      %v652 = vpop.f32.mrf.mxu0
      %653 = vmatprep.mubr.f32.mxu0 0.0
      %654 = vmatmul.mubr.f32.gmra.mxu0 %v468
      %v655 = vpop.f32.mrf.mxu0
      %v656 = vadd.f32 %v425, %v655
      %v657 = vpop.f32.mrf.mxu0
      %658 = vmatprep.mubr.f32.mxu0 0.0
      %659 = vmatmul.mubr.f32.gmra.mxu0 %v471
      %v660 = vpop.f32.mrf.mxu0
      %v661 = vadd.f32 %v425, %v660
      %v662 = vpop.f32.mrf.mxu0
      %663 = vmatprep.mubr.f32.mxu0 0.0
      %664 = vmatmul.mubr.f32.gmra.mxu0 %v474
      %v665 = vpop.f32.mrf.mxu0
      %v666 = vadd.f32 %v425, %v665
      %v667 = vpop.f32.mrf.mxu0
      %668 = vmatprep.mubr.f32.mxu0 0.0
      %669 = vmatmul.mubr.f32.gmra.mxu0 %v477
      %v670 = vpop.f32.mrf.mxu0
      %v671 = vadd.f32 %v425, %v670
      %v672 = vpop.f32.mrf.mxu0
      %673 = vmatprep.mubr.f32.mxu0 0.0
      %674 = vmatmul.mubr.f32.gmra.mxu0 %v480
      %v675 = vpop.f32.mrf.mxu0
      %v676 = vadd.f32 %v425, %v675
      %v677 = vpop.f32.mrf.mxu0
      %678 = vmatprep.mubr.f32.mxu0 0.0
      %679 = vmatmul.mubr.f32.gmra.mxu0 %v483
      %v680 = vpop.f32.mrf.mxu0
      %v681 = vadd.f32 %v425, %v680
      %v682 = vpop.f32.mrf.mxu0
      %683 = vmatprep.mubr.f32.mxu0 0.0
      %684 = vmatmul.mubr.f32.gmra.mxu0 %v486
      %v685 = vpop.f32.mrf.mxu0
      %v686 = vadd.f32 %v425, %v685
      %v687 = vpop.f32.mrf.mxu0
      %688 = vmatprep.mubr.f32.mxu0 0.0
      %689 = vmatmul.mubr.f32.gmra.mxu0 %v489
      %v690 = vpop.f32.mrf.mxu0
      %v691 = vadd.f32 %v425, %v690
      %v692 = vpop.f32.mrf.mxu0
      %693 = vmatprep.mubr.f32.mxu0 0.0
      %694 = vmatmul.mubr.f32.gmra.mxu0 %v492
      %v695 = vpop.f32.mrf.mxu0
      %v696 = vadd.f32 %v425, %v695
      %v697 = vpop.f32.mrf.mxu0
      %698 = vmatprep.mubr.f32.mxu0 0.0
      %699 = vmatmul.mubr.f32.gmra.mxu0 %v495
      %v700 = vpop.f32.mrf.mxu0
      %v701 = vadd.f32 %v425, %v700
      %v702 = vpop.f32.mrf.mxu0
      %703 = vmatprep.mubr.f32.mxu0 0.0
      %704 = vmatmul.mubr.f32.gmra.mxu0 %v498
      %v705 = vpop.f32.mrf.mxu0
      %v706 = vadd.f32 %v425, %v705
      %v707 = vpop.f32.mrf.mxu0
      %708 = vmatprep.mubr.f32.mxu0 0.0
      %709 = vmatmul.mubr.f32.gmra.mxu0 %v501
      %v710 = vpop.f32.mrf.mxu0
      %v711 = vadd.f32 %v425, %v710
      %v712 = vpop.f32.mrf.mxu0
      %713 = vmatprep.mubr.f32.mxu0 0.0
      %714 = vmatmul.mubr.f32.gmra.mxu0 %v504
      %v715 = vpop.f32.mrf.mxu0
      %v716 = vadd.f32 %v425, %v715
      %v717 = vpop.f32.mrf.mxu0
      %718 = vmatprep.mubr.f32.mxu0 0.0
      %719 = vmatmul.mubr.f32.gmra.mxu0 %v507
      %v720 = vpop.f32.mrf.mxu0
      %v721 = vadd.f32 %v425, %v720
      %v722 = vpop.f32.mrf.mxu0
      %723 = vmatprep.mubr.f32.mxu0 0.0
      %724 = vmatmul.mubr.f32.gmra.mxu0 %v510
      %v725 = vpop.f32.mrf.mxu0
      %v726 = vadd.f32 %v425, %v725
      %v727 = vpop.f32.mrf.mxu0
      %728 = vmatprep.mubr.f32.mxu0 0.0
      %729 = vmatmul.mubr.f32.gmra.mxu0 %v513
      %v730 = vpop.f32.mrf.mxu0
      %v731 = vadd.f32 %v425, %v730
      %v732 = vpop.f32.mrf.mxu0
      %733 = vmatprep.mubr.f32.mxu0 0.0
      %734 = vmatmul.mubr.f32.gmra.mxu0 %v516
      %v735 = vpop.f32.mrf.mxu0
      %v736 = vadd.f32 %v425, %v735
      %v737 = vpop.f32.mrf.mxu0
      %738 = vmatprep.mubr.f32.mxu0 0.0
      %739 = vmatmul.mubr.f32.gmra.mxu0 %v519
      %v740 = vpop.f32.mrf.mxu0
      %v741 = vadd.f32 %v425, %v740
      %v742 = vpop.f32.mrf.mxu0
      %743 = vmatprep.mubr.f32.mxu0 0.0
      %744 = vmatmul.mubr.f32.gmra.mxu0 %v522
      %v745 = vpop.f32.mrf.mxu0
      %v746 = vadd.f32 %v425, %v745
      %v747 = vpop.f32.mrf.mxu0
      %748 = vdwg.mxu0
      %v749 = vxor.u32 %v591, 2147483648
      %v750 = vxor.u32 %v596, 2147483648
      %v751 = vxor.u32 %v601, 2147483648
      %v752 = vxor.u32 %v606, 2147483648
      %v753 = vxor.u32 %v611, 2147483648
      %v754 = vxor.u32 %v616, 2147483648
      %v755 = vxor.u32 %v621, 2147483648
      %v756 = vxor.u32 %v626, 2147483648
      %v757 = vxor.u32 %v631, 2147483648
      %v758 = vxor.u32 %v636, 2147483648
      %v759 = vxor.u32 %v641, 2147483648
      %v760 = vxor.u32 %v646, 2147483648
      %v761 = vxor.u32 %v651, 2147483648
      %v762 = vxor.u32 %v656, 2147483648
      %v763 = vxor.u32 %v661, 2147483648
      %v764 = vxor.u32 %v666, 2147483648
      %v765 = vxor.u32 %v671, 2147483648
      %v766 = vxor.u32 %v676, 2147483648
      %v767 = vxor.u32 %v681, 2147483648
      %v768 = vxor.u32 %v686, 2147483648
      %v769 = vxor.u32 %v691, 2147483648
      %v770 = vxor.u32 %v696, 2147483648
      %v771 = vxor.u32 %v701, 2147483648
      %v772 = vxor.u32 %v706, 2147483648
      %v773 = vxor.u32 %v711, 2147483648
      %v774 = vxor.u32 %v716, 2147483648
      %v775 = vxor.u32 %v721, 2147483648
      %v776 = vxor.u32 %v726, 2147483648
      %v777 = vxor.u32 %v731, 2147483648
      %v778 = vxor.u32 %v736, 2147483648
      %v779 = vxor.u32 %v741, 2147483648
      %v780 = vxor.u32 %v746, 2147483648
      %v781 = vmul.f32 %v749, 1.442695
      %v782 = vpow.pop %v781
      %v783 = vmul.f32 %v750, 1.442695
      %v784 = vpow.pop %v783
      %v785 = vmul.f32 %v751, 1.442695
      %v786 = vpow.pop %v785
      %v787 = vmul.f32 %v752, 1.442695
      %v788 = vpow.pop %v787
      %v789 = vmul.f32 %v753, 1.442695
      %v790 = vpow.pop %v789
      %v791 = vmul.f32 %v754, 1.442695
      %v792 = vpow.pop %v791
      %v793 = vmul.f32 %v755, 1.442695
      %v794 = vpow.pop %v793
      %v795 = vmul.f32 %v756, 1.442695
      %v796 = vpow.pop %v795
      %v797 = vmul.f32 %v757, 1.442695
      %v798 = vpow.pop %v797
      %v799 = vmul.f32 %v758, 1.442695
      %v800 = vpow.pop %v799
      %v801 = vmul.f32 %v759, 1.442695
      %v802 = vpow.pop %v801
      %v803 = vmul.f32 %v760, 1.442695
      %v804 = vpow.pop %v803
      %v805 = vmul.f32 %v761, 1.442695
      %v806 = vpow.pop %v805
      %v807 = vmul.f32 %v762, 1.442695
      %v808 = vpow.pop %v807
      %v809 = vmul.f32 %v763, 1.442695
      %v810 = vpow.pop %v809
      %v811 = vmul.f32 %v764, 1.442695
      %v812 = vpow.pop %v811
      %v813 = vmul.f32 %v765, 1.442695
      %v814 = vpow.pop %v813
      %v815 = vmul.f32 %v766, 1.442695
      %v816 = vpow.pop %v815
      %v817 = vmul.f32 %v767, 1.442695
      %v818 = vpow.pop %v817
      %v819 = vmul.f32 %v768, 1.442695
      %v820 = vpow.pop %v819
      %v821 = vmul.f32 %v769, 1.442695
      %v822 = vpow.pop %v821
      %v823 = vmul.f32 %v770, 1.442695
      %v824 = vpow.pop %v823
      %v825 = vmul.f32 %v771, 1.442695
      %v826 = vpow.pop %v825
      %v827 = vmul.f32 %v772, 1.442695
      %v828 = vpow.pop %v827
      %v829 = vmul.f32 %v773, 1.442695
      %v830 = vpow.pop %v829
      %v831 = vmul.f32 %v774, 1.442695
      %v832 = vpow.pop %v831
      %v833 = vmul.f32 %v775, 1.442695
      %v834 = vpow.pop %v833
      %v835 = vmul.f32 %v776, 1.442695
      %v836 = vpow.pop %v835
      %v837 = vmul.f32 %v777, 1.442695
      %v838 = vpow.pop %v837
      %v839 = vmul.f32 %v778, 1.442695
      %v840 = vpow.pop %v839
      %v841 = vmul.f32 %v779, 1.442695
      %v842 = vpow.pop %v841
      %v843 = vmul.f32 %v780, 1.442695
      %v844 = vpow.pop %v843
      %v845 = vadd.f32 %v782, 1.0
      %v846 = vadd.f32 %v784, 1.0
      %v847 = vadd.f32 %v786, 1.0
      %v848 = vadd.f32 %v788, 1.0
      %v849 = vadd.f32 %v790, 1.0
      %v850 = vadd.f32 %v792, 1.0
      %v851 = vadd.f32 %v794, 1.0
      %v852 = vadd.f32 %v796, 1.0
      %v853 = vadd.f32 %v798, 1.0
      %v854 = vadd.f32 %v800, 1.0
      %v855 = vadd.f32 %v802, 1.0
      %v856 = vadd.f32 %v804, 1.0
      %v857 = vadd.f32 %v806, 1.0
      %v858 = vadd.f32 %v808, 1.0
      %v859 = vadd.f32 %v810, 1.0
      %v860 = vadd.f32 %v812, 1.0
      %v861 = vadd.f32 %v814, 1.0
      %v862 = vadd.f32 %v816, 1.0
      %v863 = vadd.f32 %v818, 1.0
      %v864 = vadd.f32 %v820, 1.0
      %v865 = vadd.f32 %v822, 1.0
      %v866 = vadd.f32 %v824, 1.0
      %v867 = vadd.f32 %v826, 1.0
      %v868 = vadd.f32 %v828, 1.0
      %v869 = vadd.f32 %v830, 1.0
      %v870 = vadd.f32 %v832, 1.0
      %v871 = vadd.f32 %v834, 1.0
      %v872 = vadd.f32 %v836, 1.0
      %v873 = vadd.f32 %v838, 1.0
      %v874 = vadd.f32 %v840, 1.0
      %v875 = vadd.f32 %v842, 1.0
      %v876 = vadd.f32 %v844, 1.0
      %v877 = vrcp.pop %v845
      %v878 = vmul.f32 1.0, %v877
      %v879 = vrcp.pop %v846
      %v880 = vmul.f32 1.0, %v879
      %v881 = vrcp.pop %v847
      %v882 = vmul.f32 1.0, %v881
      %v883 = vrcp.pop %v848
      %v884 = vmul.f32 1.0, %v883
      %v885 = vrcp.pop %v849
      %v886 = vmul.f32 1.0, %v885
      %v887 = vrcp.pop %v850
      %v888 = vmul.f32 1.0, %v887
      %v889 = vrcp.pop %v851
      %v890 = vmul.f32 1.0, %v889
      %v891 = vrcp.pop %v852
      %v892 = vmul.f32 1.0, %v891
      %v893 = vrcp.pop %v853
      %v894 = vmul.f32 1.0, %v893
      %v895 = vrcp.pop %v854
      %v896 = vmul.f32 1.0, %v895
      %v897 = vrcp.pop %v855
      %v898 = vmul.f32 1.0, %v897
      %v899 = vrcp.pop %v856
      %v900 = vmul.f32 1.0, %v899
      %v901 = vrcp.pop %v857
      %v902 = vmul.f32 1.0, %v901
      %v903 = vrcp.pop %v858
      %v904 = vmul.f32 1.0, %v903
      %v905 = vrcp.pop %v859
      %v906 = vmul.f32 1.0, %v905
      %v907 = vrcp.pop %v860
      %v908 = vmul.f32 1.0, %v907
      %v909 = vrcp.pop %v861
      %v910 = vmul.f32 1.0, %v909
      %v911 = vrcp.pop %v862
      %v912 = vmul.f32 1.0, %v911
      %v913 = vrcp.pop %v863
      %v914 = vmul.f32 1.0, %v913
      %v915 = vrcp.pop %v864
      %v916 = vmul.f32 1.0, %v915
      %v917 = vrcp.pop %v865
      %v918 = vmul.f32 1.0, %v917
      %v919 = vrcp.pop %v866
      %v920 = vmul.f32 1.0, %v919
      %v921 = vrcp.pop %v867
      %v922 = vmul.f32 1.0, %v921
      %v923 = vrcp.pop %v868
      %v924 = vmul.f32 1.0, %v923
      %v925 = vrcp.pop %v869
      %v926 = vmul.f32 1.0, %v925
      %v927 = vrcp.pop %v870
      %v928 = vmul.f32 1.0, %v927
      %v929 = vrcp.pop %v871
      %v930 = vmul.f32 1.0, %v929
      %v931 = vrcp.pop %v872
      %v932 = vmul.f32 1.0, %v931
      %v933 = vrcp.pop %v873
      %v934 = vmul.f32 1.0, %v933
      %v935 = vrcp.pop %v874
      %v936 = vmul.f32 1.0, %v935
      %v937 = vrcp.pop %v875
      %v938 = vmul.f32 1.0, %v937
      %v939 = vrcp.pop %v876
      %v940 = vmul.f32 1.0, %v939
      %v941 = vmul.f32 %v591, %v878
      %v942 = vmul.f32 %v596, %v880
      %v943 = vmul.f32 %v601, %v882
      %v944 = vmul.f32 %v606, %v884
      %v945 = vmul.f32 %v611, %v886
      %v946 = vmul.f32 %v616, %v888
      %v947 = vmul.f32 %v621, %v890
      %v948 = vmul.f32 %v626, %v892
      %v949 = vmul.f32 %v631, %v894
      %v950 = vmul.f32 %v636, %v896
      %v951 = vmul.f32 %v641, %v898
      %v952 = vmul.f32 %v646, %v900
      %v953 = vmul.f32 %v651, %v902
      %v954 = vmul.f32 %v656, %v904
      %v955 = vmul.f32 %v661, %v906
      %v956 = vmul.f32 %v666, %v908
      %v957 = vmul.f32 %v671, %v910
      %v958 = vmul.f32 %v676, %v912
      %v959 = vmul.f32 %v681, %v914
      %v960 = vmul.f32 %v686, %v916
      %v961 = vmul.f32 %v691, %v918
      %v962 = vmul.f32 %v696, %v920
      %v963 = vmul.f32 %v701, %v922
      %v964 = vmul.f32 %v706, %v924
      %v965 = vmul.f32 %v711, %v926
      %v966 = vmul.f32 %v716, %v928
      %v967 = vmul.f32 %v721, %v930
      %v968 = vmul.f32 %v726, %v932
      %v969 = vmul.f32 %v731, %v934
      %v970 = vmul.f32 %v736, %v936
      %v971 = vmul.f32 %v741, %v938
      %v972 = vmul.f32 %v746, %v940
      %vm973 = vcmask 261120
      %974 = vst.msk [vmem:[#allocation2] sm:$0xff] %vm973, 0.0
      %975 = vst.msk [vmem:[#allocation2 + $0x8] sm:$0xff] %vm973, 0.0
      %976 = vst.msk [vmem:[#allocation2 + $0x10] sm:$0xff] %vm973, 0.0
      %977 = vst.msk [vmem:[#allocation2 + $0x18] sm:$0xff] %vm973, 0.0
      %978 = vst.msk [vmem:[#allocation2 + $0x20] sm:$0xff] %vm973, 0.0
      %979 = vst.msk [vmem:[#allocation2 + $0x28] sm:$0xff] %vm973, 0.0
      %980 = vst.msk [vmem:[#allocation2 + $0x30] sm:$0xff] %vm973, 0.0
      %981 = vst.msk [vmem:[#allocation2 + $0x38] sm:$0xff] %vm973, 0.0
      %982 = vst.msk [vmem:[#allocation2 + $0x40] sm:$0xff] %vm973, 0.0
      %983 = vst.msk [vmem:[#allocation2 + $0x48] sm:$0xff] %vm973, 0.0
      %984 = vst.msk [vmem:[#allocation2 + $0x50] sm:$0xff] %vm973, 0.0
      %985 = vst.msk [vmem:[#allocation2 + $0x58] sm:$0xff] %vm973, 0.0
      %986 = vst.msk [vmem:[#allocation2 + $0x60] sm:$0xff] %vm973, 0.0
      %987 = vst.msk [vmem:[#allocation2 + $0x68] sm:$0xff] %vm973, 0.0
      %988 = vst.msk [vmem:[#allocation2 + $0x70] sm:$0xff] %vm973, 0.0
      %989 = vst.msk [vmem:[#allocation2 + $0x78] sm:$0xff] %vm973, 0.0
      %990 = vst.msk [vmem:[#allocation2 + $0x80] sm:$0xff] %vm973, 0.0
      %991 = vst.msk [vmem:[#allocation2 + $0x88] sm:$0xff] %vm973, 0.0
      %992 = vst.msk [vmem:[#allocation2 + $0x90] sm:$0xff] %vm973, 0.0
      %993 = vst.msk [vmem:[#allocation2 + $0x98] sm:$0xff] %vm973, 0.0
      %994 = vst.msk [vmem:[#allocation2 + $0xa0] sm:$0xff] %vm973, 0.0
      %995 = vst.msk [vmem:[#allocation2 + $0xa8] sm:$0xff] %vm973, 0.0
      %996 = vst.msk [vmem:[#allocation2 + $0xb0] sm:$0xff] %vm973, 0.0
      %997 = vst.msk [vmem:[#allocation2 + $0xb8] sm:$0xff] %vm973, 0.0
      %998 = vst.msk [vmem:[#allocation2 + $0xc0] sm:$0xff] %vm973, 0.0
      %999 = vst.msk [vmem:[#allocation2 + $0xc8] sm:$0xff] %vm973, 0.0
      %1000 = vst.msk [vmem:[#allocation2 + $0xd0] sm:$0xff] %vm973, 0.0
      %1001 = vst.msk [vmem:[#allocation2 + $0xd8] sm:$0xff] %vm973, 0.0
      %1002 = vst.msk [vmem:[#allocation2 + $0xe0] sm:$0xff] %vm973, 0.0
      %1003 = vst.msk [vmem:[#allocation2 + $0xe8] sm:$0xff] %vm973, 0.0
      %1004 = vst.msk [vmem:[#allocation2 + $0xf0] sm:$0xff] %vm973, 0.0
      %1005 = vst.msk [vmem:[#allocation2 + $0xf8] sm:$0xff] %vm973, 0.0
      %1006 = vst.msk [vmem:[#allocation2 + $0x100] sm:$0xff] %vm973, 0.0
      %1007 = vst.msk [vmem:[#allocation2 + $0x108] sm:$0xff] %vm973, 0.0
      %1008 = vst.msk [vmem:[#allocation2 + $0x110] sm:$0xff] %vm973, 0.0
      %1009 = vst.msk [vmem:[#allocation2 + $0x118] sm:$0xff] %vm973, 0.0
      %1010 = vst.msk [vmem:[#allocation2 + $0x120] sm:$0xff] %vm973, 0.0
      %1011 = vst.msk [vmem:[#allocation2 + $0x128] sm:$0xff] %vm973, 0.0
      %1012 = vst.msk [vmem:[#allocation2 + $0x130] sm:$0xff] %vm973, 0.0
      %1013 = vst.msk [vmem:[#allocation2 + $0x138] sm:$0xff] %vm973, 0.0
      %1014 = vst.msk [vmem:[#allocation2 + $0x140] sm:$0xff] %vm973, 0.0
      %1015 = vst.msk [vmem:[#allocation2 + $0x148] sm:$0xff] %vm973, 0.0
      %1016 = vst.msk [vmem:[#allocation2 + $0x150] sm:$0xff] %vm973, 0.0
      %1017 = vst.msk [vmem:[#allocation2 + $0x158] sm:$0xff] %vm973, 0.0
      %1018 = vst.msk [vmem:[#allocation2 + $0x160] sm:$0xff] %vm973, 0.0
      %1019 = vst.msk [vmem:[#allocation2 + $0x168] sm:$0xff] %vm973, 0.0
      %1020 = vst.msk [vmem:[#allocation2 + $0x170] sm:$0xff] %vm973, 0.0
      %1021 = vst.msk [vmem:[#allocation2 + $0x178] sm:$0xff] %vm973, 0.0
      %1022 = vst.msk [vmem:[#allocation2 + $0x180] sm:$0xff] %vm973, 0.0
      %1023 = vst.msk [vmem:[#allocation2 + $0x188] sm:$0xff] %vm973, 0.0
      %1024 = vst.msk [vmem:[#allocation2 + $0x190] sm:$0xff] %vm973, 0.0
      %1025 = vst.msk [vmem:[#allocation2 + $0x198] sm:$0xff] %vm973, 0.0
      %1026 = vst.msk [vmem:[#allocation2 + $0x1a0] sm:$0xff] %vm973, 0.0
      %1027 = vst.msk [vmem:[#allocation2 + $0x1a8] sm:$0xff] %vm973, 0.0
      %1028 = vst.msk [vmem:[#allocation2 + $0x1b0] sm:$0xff] %vm973, 0.0
      %1029 = vst.msk [vmem:[#allocation2 + $0x1b8] sm:$0xff] %vm973, 0.0
      %1030 = vst.msk [vmem:[#allocation2 + $0x1c0] sm:$0xff] %vm973, 0.0
      %1031 = vst.msk [vmem:[#allocation2 + $0x1c8] sm:$0xff] %vm973, 0.0
      %1032 = vst.msk [vmem:[#allocation2 + $0x1d0] sm:$0xff] %vm973, 0.0
      %1033 = vst.msk [vmem:[#allocation2 + $0x1d8] sm:$0xff] %vm973, 0.0
      %1034 = vst.msk [vmem:[#allocation2 + $0x1e0] sm:$0xff] %vm973, 0.0
      %1035 = vst.msk [vmem:[#allocation2 + $0x1e8] sm:$0xff] %vm973, 0.0
      %1036 = vst.msk [vmem:[#allocation2 + $0x1f0] sm:$0xff] %vm973, 0.0
      %1037 = vst.msk [vmem:[#allocation2 + $0x1f8] sm:$0xff] %vm973, 0.0
      %1038 = vst.msk [vmem:[#allocation2 + $0x200] sm:$0xff] %vm973, 0.0
      %1039 = vst.msk [vmem:[#allocation2 + $0x208] sm:$0xff] %vm973, 0.0
      %1040 = vst.msk [vmem:[#allocation2 + $0x210] sm:$0xff] %vm973, 0.0
      %1041 = vst.msk [vmem:[#allocation2 + $0x218] sm:$0xff] %vm973, 0.0
      %1042 = vst.msk [vmem:[#allocation2 + $0x220] sm:$0xff] %vm973, 0.0
      %1043 = vst.msk [vmem:[#allocation2 + $0x228] sm:$0xff] %vm973, 0.0
      %1044 = vst.msk [vmem:[#allocation2 + $0x230] sm:$0xff] %vm973, 0.0
      %1045 = vst.msk [vmem:[#allocation2 + $0x238] sm:$0xff] %vm973, 0.0
      %s1046 = scalar_lea.vmem [#allocation2], 32
      %1047 = vst.msk [vmem:[%s1046 + $0x8] sm:$0xff] %vm973, %v941
      %1048 = vst.msk [vmem:[%s1046 + $0x10] sm:$0xff] %vm973, %v942
      %s1049 = scalar_lea.vmem [#allocation2], 64
      %1050 = vst.msk [vmem:[%s1049 + $0x8] sm:$0xff] %vm973, %v943
      %1051 = vst.msk [vmem:[%s1049 + $0x10] sm:$0xff] %vm973, %v944
      %s1052 = scalar_lea.vmem [#allocation2], 96
      %1053 = vst.msk [vmem:[%s1052 + $0x8] sm:$0xff] %vm973, %v945
      %1054 = vst.msk [vmem:[%s1052 + $0x10] sm:$0xff] %vm973, %v946
      %s1055 = scalar_lea.vmem [#allocation2], 128
      %1056 = vst.msk [vmem:[%s1055 + $0x8] sm:$0xff] %vm973, %v947
      %1057 = vst.msk [vmem:[%s1055 + $0x10] sm:$0xff] %vm973, %v948
      %s1058 = scalar_lea.vmem [#allocation2], 160
      %1059 = vst.msk [vmem:[%s1058 + $0x8] sm:$0xff] %vm973, %v949
      %1060 = vst.msk [vmem:[%s1058 + $0x10] sm:$0xff] %vm973, %v950
      %s1061 = scalar_lea.vmem [#allocation2], 192
      %1062 = vst.msk [vmem:[%s1061 + $0x8] sm:$0xff] %vm973, %v951
      %1063 = vst.msk [vmem:[%s1061 + $0x10] sm:$0xff] %vm973, %v952
      %s1064 = scalar_lea.vmem [#allocation2], 224
      %1065 = vst.msk [vmem:[%s1064 + $0x8] sm:$0xff] %vm973, %v953
      %1066 = vst.msk [vmem:[%s1064 + $0x10] sm:$0xff] %vm973, %v954
      %s1067 = scalar_lea.vmem [#allocation2], 256
      %1068 = vst.msk [vmem:[%s1067 + $0x8] sm:$0xff] %vm973, %v955
      %1069 = vst.msk [vmem:[%s1067 + $0x10] sm:$0xff] %vm973, %v956
      %s1070 = scalar_lea.vmem [#allocation2], 288
      %1071 = vst.msk [vmem:[%s1070 + $0x8] sm:$0xff] %vm973, %v957
      %1072 = vst.msk [vmem:[%s1070 + $0x10] sm:$0xff] %vm973, %v958
      %s1073 = scalar_lea.vmem [#allocation2], 320
      %1074 = vst.msk [vmem:[%s1073 + $0x8] sm:$0xff] %vm973, %v959
      %1075 = vst.msk [vmem:[%s1073 + $0x10] sm:$0xff] %vm973, %v960
      %s1076 = scalar_lea.vmem [#allocation2], 352
      %1077 = vst.msk [vmem:[%s1076 + $0x8] sm:$0xff] %vm973, %v961
      %1078 = vst.msk [vmem:[%s1076 + $0x10] sm:$0xff] %vm973, %v962
      %s1079 = scalar_lea.vmem [#allocation2], 384
      %1080 = vst.msk [vmem:[%s1079 + $0x8] sm:$0xff] %vm973, %v963
      %1081 = vst.msk [vmem:[%s1079 + $0x10] sm:$0xff] %vm973, %v964
      %s1082 = scalar_lea.vmem [#allocation2], 416
      %1083 = vst.msk [vmem:[%s1082 + $0x8] sm:$0xff] %vm973, %v965
      %1084 = vst.msk [vmem:[%s1082 + $0x10] sm:$0xff] %vm973, %v966
      %s1085 = scalar_lea.vmem [#allocation2], 448
      %1086 = vst.msk [vmem:[%s1085 + $0x8] sm:$0xff] %vm973, %v967
      %1087 = vst.msk [vmem:[%s1085 + $0x10] sm:$0xff] %vm973, %v968
      %s1088 = scalar_lea.vmem [#allocation2], 480
      %1089 = vst.msk [vmem:[%s1088 + $0x8] sm:$0xff] %vm973, %v969
      %1090 = vst.msk [vmem:[%s1088 + $0x10] sm:$0xff] %vm973, %v970
      %s1091 = scalar_lea.vmem [#allocation2], 512
      %1092 = vst.msk [vmem:[%s1091 + $0x8] sm:$0xff] %vm973, %v971
      %1093 = vst.msk [vmem:[%s1091 + $0x10] sm:$0xff] %vm973, %v972
      %v1094 = vld [vmem:[%s3] sm:$0xff]
      %v1095 = vld [vmem:[%s3 + $0x8] sm:$0x1]
      %v1096 = vld [vmem:[%s4] sm:$0x1]
      %v1097 = vld [vmem:[#allocation2 + $0x7] sm:$0xff]
      %v1098 = vld [vmem:[#allocation2 + $0xf] sm:$0xff]
      %v1099 = vld [vmem:[#allocation2 + $0x27] sm:$0xff]
      %v1100 = vld [vmem:[#allocation2 + $0x2f] sm:$0xff]
      %v1101 = vld [vmem:[#allocation2 + $0x47] sm:$0xff]
      %v1102 = vld [vmem:[#allocation2 + $0x4f] sm:$0xff]
      %v1103 = vld [vmem:[#allocation2 + $0x67] sm:$0xff]
      %v1104 = vld [vmem:[#allocation2 + $0x6f] sm:$0xff]
      %v1105 = vld [vmem:[#allocation2 + $0x87] sm:$0xff]
      %v1106 = vld [vmem:[#allocation2 + $0x8f] sm:$0xff]
      %v1107 = vld [vmem:[#allocation2 + $0xa7] sm:$0xff]
      %v1108 = vld [vmem:[#allocation2 + $0xaf] sm:$0xff]
      %v1109 = vld [vmem:[#allocation2 + $0xc7] sm:$0xff]
      %v1110 = vld [vmem:[#allocation2 + $0xcf] sm:$0xff]
      %v1111 = vld [vmem:[#allocation2 + $0xe7] sm:$0xff]
      %v1112 = vld [vmem:[#allocation2 + $0xef] sm:$0xff]
      %v1113 = vld [vmem:[#allocation2 + $0x107] sm:$0xff]
      %v1114 = vld [vmem:[#allocation2 + $0x10f] sm:$0xff]
      %v1115 = vld [vmem:[#allocation2 + $0x127] sm:$0xff]
      %v1116 = vld [vmem:[#allocation2 + $0x12f] sm:$0xff]
      %v1117 = vld [vmem:[#allocation2 + $0x147] sm:$0xff]
      %v1118 = vld [vmem:[#allocation2 + $0x14f] sm:$0xff]
      %v1119 = vld [vmem:[#allocation2 + $0x167] sm:$0xff]
      %v1120 = vld [vmem:[#allocation2 + $0x16f] sm:$0xff]
      %v1121 = vld [vmem:[#allocation2 + $0x187] sm:$0xff]
      %v1122 = vld [vmem:[#allocation2 + $0x18f] sm:$0xff]
      %v1123 = vld [vmem:[#allocation2 + $0x1a7] sm:$0xff]
      %v1124 = vld [vmem:[#allocation2 + $0x1af] sm:$0xff]
      %v1125 = vld [vmem:[#allocation2 + $0x1c7] sm:$0xff]
      %v1126 = vld [vmem:[#allocation2 + $0x1cf] sm:$0xff]
      %v1127 = vld [vmem:[#allocation2 + $0x1e7] sm:$0xff]
      %v1128 = vld [vmem:[#allocation2 + $0x1ef] sm:$0xff]
      %v1129 = vlaneseq
      %v1130 = vshrl.u32 %v1129, 7
      %v1131 = vsub.s32 0, %v1130
      %v1132 = vrot.slane %v1094, %v1131
      %v1133 = vmul.f32 %v1097, %v1132
      %v1134 = vmul.f32 %v1098, %v1132
      %v1135 = vmul.f32 %v1099, %v1132
      %v1136 = vmul.f32 %v1100, %v1132
      %v1137 = vmul.f32 %v1101, %v1132
      %v1138 = vmul.f32 %v1102, %v1132
      %v1139 = vmul.f32 %v1103, %v1132
      %v1140 = vmul.f32 %v1104, %v1132
      %v1141 = vmul.f32 %v1105, %v1132
      %v1142 = vmul.f32 %v1106, %v1132
      %v1143 = vmul.f32 %v1107, %v1132
      %v1144 = vmul.f32 %v1108, %v1132
      %v1145 = vmul.f32 %v1109, %v1132
      %v1146 = vmul.f32 %v1110, %v1132
      %v1147 = vmul.f32 %v1111, %v1132
      %v1148 = vmul.f32 %v1112, %v1132
      %v1149 = vmul.f32 %v1113, %v1132
      %v1150 = vmul.f32 %v1114, %v1132
      %v1151 = vmul.f32 %v1115, %v1132
      %v1152 = vmul.f32 %v1116, %v1132
      %v1153 = vmul.f32 %v1117, %v1132
      %v1154 = vmul.f32 %v1118, %v1132
      %v1155 = vmul.f32 %v1119, %v1132
      %v1156 = vmul.f32 %v1120, %v1132
      %v1157 = vmul.f32 %v1121, %v1132
      %v1158 = vmul.f32 %v1122, %v1132
      %v1159 = vmul.f32 %v1123, %v1132
      %v1160 = vmul.f32 %v1124, %v1132
      %v1161 = vmul.f32 %v1125, %v1132
      %v1162 = vmul.f32 %v1126, %v1132
      %v1163 = vmul.f32 %v1127, %v1132
      %v1164 = vmul.f32 %v1128, %v1132
      %v1165 = vadd.f32 %v1133, 0.0
      %v1166 = vadd.f32 %v1134, 0.0
      %v1167 = vadd.f32 %v1135, 0.0
      %v1168 = vadd.f32 %v1136, 0.0
      %v1169 = vadd.f32 %v1137, 0.0
      %v1170 = vadd.f32 %v1138, 0.0
      %v1171 = vadd.f32 %v1139, 0.0
      %v1172 = vadd.f32 %v1140, 0.0
      %v1173 = vadd.f32 %v1141, 0.0
      %v1174 = vadd.f32 %v1142, 0.0
      %v1175 = vadd.f32 %v1143, 0.0
      %v1176 = vadd.f32 %v1144, 0.0
      %v1177 = vadd.f32 %v1145, 0.0
      %v1178 = vadd.f32 %v1146, 0.0
      %v1179 = vadd.f32 %v1147, 0.0
      %v1180 = vadd.f32 %v1148, 0.0
      %v1181 = vadd.f32 %v1149, 0.0
      %v1182 = vadd.f32 %v1150, 0.0
      %v1183 = vadd.f32 %v1151, 0.0
      %v1184 = vadd.f32 %v1152, 0.0
      %v1185 = vadd.f32 %v1153, 0.0
      %v1186 = vadd.f32 %v1154, 0.0
      %v1187 = vadd.f32 %v1155, 0.0
      %v1188 = vadd.f32 %v1156, 0.0
      %v1189 = vadd.f32 %v1157, 0.0
      %v1190 = vadd.f32 %v1158, 0.0
      %v1191 = vadd.f32 %v1159, 0.0
      %v1192 = vadd.f32 %v1160, 0.0
      %v1193 = vadd.f32 %v1161, 0.0
      %v1194 = vadd.f32 %v1162, 0.0
      %v1195 = vadd.f32 %v1163, 0.0
      %v1196 = vadd.f32 %v1164, 0.0
      %v1197 = vld [vmem:[#allocation2 + $0x8] sm:$0xff]
      %v1198 = vld [vmem:[#allocation2 + $0x10] sm:$0xff]
      %v1199 = vld [vmem:[#allocation2 + $0x28] sm:$0xff]
      %v1200 = vld [vmem:[#allocation2 + $0x30] sm:$0xff]
      %v1201 = vld [vmem:[#allocation2 + $0x48] sm:$0xff]
      %v1202 = vld [vmem:[#allocation2 + $0x50] sm:$0xff]
      %v1203 = vld [vmem:[#allocation2 + $0x68] sm:$0xff]
      %v1204 = vld [vmem:[#allocation2 + $0x70] sm:$0xff]
      %v1205 = vld [vmem:[#allocation2 + $0x88] sm:$0xff]
      %v1206 = vld [vmem:[#allocation2 + $0x90] sm:$0xff]
      %v1207 = vld [vmem:[#allocation2 + $0xa8] sm:$0xff]
      %v1208 = vld [vmem:[#allocation2 + $0xb0] sm:$0xff]
      %v1209 = vld [vmem:[#allocation2 + $0xc8] sm:$0xff]
      %v1210 = vld [vmem:[#allocation2 + $0xd0] sm:$0xff]
      %v1211 = vld [vmem:[#allocation2 + $0xe8] sm:$0xff]
      %v1212 = vld [vmem:[#allocation2 + $0xf0] sm:$0xff]
      %v1213 = vld [vmem:[#allocation2 + $0x108] sm:$0xff]
      %v1214 = vld [vmem:[#allocation2 + $0x110] sm:$0xff]
      %v1215 = vld [vmem:[#allocation2 + $0x128] sm:$0xff]
      %v1216 = vld [vmem:[#allocation2 + $0x130] sm:$0xff]
      %v1217 = vld [vmem:[#allocation2 + $0x148] sm:$0xff]
      %v1218 = vld [vmem:[#allocation2 + $0x150] sm:$0xff]
      %v1219 = vld [vmem:[#allocation2 + $0x168] sm:$0xff]
      %v1220 = vld [vmem:[#allocation2 + $0x170] sm:$0xff]
      %v1221 = vld [vmem:[#allocation2 + $0x188] sm:$0xff]
      %v1222 = vld [vmem:[#allocation2 + $0x190] sm:$0xff]
      %v1223 = vld [vmem:[#allocation2 + $0x1a8] sm:$0xff]
      %v1224 = vld [vmem:[#allocation2 + $0x1b0] sm:$0xff]
      %v1225 = vld [vmem:[#allocation2 + $0x1c8] sm:$0xff]
      %v1226 = vld [vmem:[#allocation2 + $0x1d0] sm:$0xff]
      %v1227 = vld [vmem:[#allocation2 + $0x1e8] sm:$0xff]
      %v1228 = vld [vmem:[#allocation2 + $0x1f0] sm:$0xff]
      %v1229 = vlaneseq
      %v1230 = vshrl.u32 %v1229, 7
      %v1231 = vsub.s32 1, %v1230
      %v1232 = vrot.slane %v1094, %v1231
      %v1233 = vmul.f32 %v1197, %v1232
      %v1234 = vmul.f32 %v1198, %v1232
      %v1235 = vmul.f32 %v1199, %v1232
      %v1236 = vmul.f32 %v1200, %v1232
      %v1237 = vmul.f32 %v1201, %v1232
      %v1238 = vmul.f32 %v1202, %v1232
      %v1239 = vmul.f32 %v1203, %v1232
      %v1240 = vmul.f32 %v1204, %v1232
      %v1241 = vmul.f32 %v1205, %v1232
      %v1242 = vmul.f32 %v1206, %v1232
      %v1243 = vmul.f32 %v1207, %v1232
      %v1244 = vmul.f32 %v1208, %v1232
      %v1245 = vmul.f32 %v1209, %v1232
      %v1246 = vmul.f32 %v1210, %v1232
      %v1247 = vmul.f32 %v1211, %v1232
      %v1248 = vmul.f32 %v1212, %v1232
      %v1249 = vmul.f32 %v1213, %v1232
      %v1250 = vmul.f32 %v1214, %v1232
      %v1251 = vmul.f32 %v1215, %v1232
      %v1252 = vmul.f32 %v1216, %v1232
      %v1253 = vmul.f32 %v1217, %v1232
      %v1254 = vmul.f32 %v1218, %v1232
      %v1255 = vmul.f32 %v1219, %v1232
      %v1256 = vmul.f32 %v1220, %v1232
      %v1257 = vmul.f32 %v1221, %v1232
      %v1258 = vmul.f32 %v1222, %v1232
      %v1259 = vmul.f32 %v1223, %v1232
      %v1260 = vmul.f32 %v1224, %v1232
      %v1261 = vmul.f32 %v1225, %v1232
      %v1262 = vmul.f32 %v1226, %v1232
      %v1263 = vmul.f32 %v1227, %v1232
      %v1264 = vmul.f32 %v1228, %v1232
      %v1265 = vadd.f32 %v1165, %v1233
      %v1266 = vadd.f32 %v1166, %v1234
      %v1267 = vadd.f32 %v1167, %v1235
      %v1268 = vadd.f32 %v1168, %v1236
      %v1269 = vadd.f32 %v1169, %v1237
      %v1270 = vadd.f32 %v1170, %v1238
      %v1271 = vadd.f32 %v1171, %v1239
      %v1272 = vadd.f32 %v1172, %v1240
      %v1273 = vadd.f32 %v1173, %v1241
      %v1274 = vadd.f32 %v1174, %v1242
      %v1275 = vadd.f32 %v1175, %v1243
      %v1276 = vadd.f32 %v1176, %v1244
      %v1277 = vadd.f32 %v1177, %v1245
      %v1278 = vadd.f32 %v1178, %v1246
      %v1279 = vadd.f32 %v1179, %v1247
      %v1280 = vadd.f32 %v1180, %v1248
      %v1281 = vadd.f32 %v1181, %v1249
      %v1282 = vadd.f32 %v1182, %v1250
      %v1283 = vadd.f32 %v1183, %v1251
      %v1284 = vadd.f32 %v1184, %v1252
      %v1285 = vadd.f32 %v1185, %v1253
      %v1286 = vadd.f32 %v1186, %v1254
      %v1287 = vadd.f32 %v1187, %v1255
      %v1288 = vadd.f32 %v1188, %v1256
      %v1289 = vadd.f32 %v1189, %v1257
      %v1290 = vadd.f32 %v1190, %v1258
      %v1291 = vadd.f32 %v1191, %v1259
      %v1292 = vadd.f32 %v1192, %v1260
      %v1293 = vadd.f32 %v1193, %v1261
      %v1294 = vadd.f32 %v1194, %v1262
      %v1295 = vadd.f32 %v1195, %v1263
      %v1296 = vadd.f32 %v1196, %v1264
      %v1297 = vld [vmem:[#allocation2 + $0x9] sm:$0xff]
      %v1298 = vld [vmem:[#allocation2 + $0x11] sm:$0xff]
      %v1299 = vld [vmem:[#allocation2 + $0x29] sm:$0xff]
      %v1300 = vld [vmem:[#allocation2 + $0x31] sm:$0xff]
      %v1301 = vld [vmem:[#allocation2 + $0x49] sm:$0xff]
      %v1302 = vld [vmem:[#allocation2 + $0x51] sm:$0xff]
      %v1303 = vld [vmem:[#allocation2 + $0x69] sm:$0xff]
      %v1304 = vld [vmem:[#allocation2 + $0x71] sm:$0xff]
      %v1305 = vld [vmem:[#allocation2 + $0x89] sm:$0xff]
      %v1306 = vld [vmem:[#allocation2 + $0x91] sm:$0xff]
      %v1307 = vld [vmem:[#allocation2 + $0xa9] sm:$0xff]
      %v1308 = vld [vmem:[#allocation2 + $0xb1] sm:$0xff]
      %v1309 = vld [vmem:[#allocation2 + $0xc9] sm:$0xff]
      %v1310 = vld [vmem:[#allocation2 + $0xd1] sm:$0xff]
      %v1311 = vld [vmem:[#allocation2 + $0xe9] sm:$0xff]
      %v1312 = vld [vmem:[#allocation2 + $0xf1] sm:$0xff]
      %v1313 = vld [vmem:[#allocation2 + $0x109] sm:$0xff]
      %v1314 = vld [vmem:[#allocation2 + $0x111] sm:$0xff]
      %v1315 = vld [vmem:[#allocation2 + $0x129] sm:$0xff]
      %v1316 = vld [vmem:[#allocation2 + $0x131] sm:$0xff]
      %v1317 = vld [vmem:[#allocation2 + $0x149] sm:$0xff]
      %v1318 = vld [vmem:[#allocation2 + $0x151] sm:$0xff]
      %v1319 = vld [vmem:[#allocation2 + $0x169] sm:$0xff]
      %v1320 = vld [vmem:[#allocation2 + $0x171] sm:$0xff]
      %v1321 = vld [vmem:[#allocation2 + $0x189] sm:$0xff]
      %v1322 = vld [vmem:[#allocation2 + $0x191] sm:$0xff]
      %v1323 = vld [vmem:[#allocation2 + $0x1a9] sm:$0xff]
      %v1324 = vld [vmem:[#allocation2 + $0x1b1] sm:$0xff]
      %v1325 = vld [vmem:[#allocation2 + $0x1c9] sm:$0xff]
      %v1326 = vld [vmem:[#allocation2 + $0x1d1] sm:$0xff]
      %v1327 = vld [vmem:[#allocation2 + $0x1e9] sm:$0xff]
      %v1328 = vld [vmem:[#allocation2 + $0x1f1] sm:$0xff]
      %v1329 = vlaneseq
      %v1330 = vshrl.u32 %v1329, 7
      %v1331 = vsub.s32 2, %v1330
      %v1332 = vrot.slane %v1094, %v1331
      %v1333 = vmul.f32 %v1297, %v1332
      %v1334 = vmul.f32 %v1298, %v1332
      %v1335 = vmul.f32 %v1299, %v1332
      %v1336 = vmul.f32 %v1300, %v1332
      %v1337 = vmul.f32 %v1301, %v1332
      %v1338 = vmul.f32 %v1302, %v1332
      %v1339 = vmul.f32 %v1303, %v1332
      %v1340 = vmul.f32 %v1304, %v1332
      %v1341 = vmul.f32 %v1305, %v1332
      %v1342 = vmul.f32 %v1306, %v1332
      %v1343 = vmul.f32 %v1307, %v1332
      %v1344 = vmul.f32 %v1308, %v1332
      %v1345 = vmul.f32 %v1309, %v1332
      %v1346 = vmul.f32 %v1310, %v1332
      %v1347 = vmul.f32 %v1311, %v1332
      %v1348 = vmul.f32 %v1312, %v1332
      %v1349 = vmul.f32 %v1313, %v1332
      %v1350 = vmul.f32 %v1314, %v1332
      %v1351 = vmul.f32 %v1315, %v1332
      %v1352 = vmul.f32 %v1316, %v1332
      %v1353 = vmul.f32 %v1317, %v1332
      %v1354 = vmul.f32 %v1318, %v1332
      %v1355 = vmul.f32 %v1319, %v1332
      %v1356 = vmul.f32 %v1320, %v1332
      %v1357 = vmul.f32 %v1321, %v1332
      %v1358 = vmul.f32 %v1322, %v1332
      %v1359 = vmul.f32 %v1323, %v1332
      %v1360 = vmul.f32 %v1324, %v1332
      %v1361 = vmul.f32 %v1325, %v1332
      %v1362 = vmul.f32 %v1326, %v1332
      %v1363 = vmul.f32 %v1327, %v1332
      %v1364 = vmul.f32 %v1328, %v1332
      %v1365 = vadd.f32 %v1265, %v1333
      %v1366 = vadd.f32 %v1266, %v1334
      %v1367 = vadd.f32 %v1267, %v1335
      %v1368 = vadd.f32 %v1268, %v1336
      %v1369 = vadd.f32 %v1269, %v1337
      %v1370 = vadd.f32 %v1270, %v1338
      %v1371 = vadd.f32 %v1271, %v1339
      %v1372 = vadd.f32 %v1272, %v1340
      %v1373 = vadd.f32 %v1273, %v1341
      %v1374 = vadd.f32 %v1274, %v1342
      %v1375 = vadd.f32 %v1275, %v1343
      %v1376 = vadd.f32 %v1276, %v1344
      %v1377 = vadd.f32 %v1277, %v1345
      %v1378 = vadd.f32 %v1278, %v1346
      %v1379 = vadd.f32 %v1279, %v1347
      %v1380 = vadd.f32 %v1280, %v1348
      %v1381 = vadd.f32 %v1281, %v1349
      %v1382 = vadd.f32 %v1282, %v1350
      %v1383 = vadd.f32 %v1283, %v1351
      %v1384 = vadd.f32 %v1284, %v1352
      %v1385 = vadd.f32 %v1285, %v1353
      %v1386 = vadd.f32 %v1286, %v1354
      %v1387 = vadd.f32 %v1287, %v1355
      %v1388 = vadd.f32 %v1288, %v1356
      %v1389 = vadd.f32 %v1289, %v1357
      %v1390 = vadd.f32 %v1290, %v1358
      %v1391 = vadd.f32 %v1291, %v1359
      %v1392 = vadd.f32 %v1292, %v1360
      %v1393 = vadd.f32 %v1293, %v1361
      %v1394 = vadd.f32 %v1294, %v1362
      %v1395 = vadd.f32 %v1295, %v1363
      %v1396 = vadd.f32 %v1296, %v1364
      %v1397 = vld [vmem:[%s1046 + $0x7] sm:$0xff]
      %v1398 = vld [vmem:[%s1046 + $0xf] sm:$0xff]
      %v1399 = vld [vmem:[%s1046 + $0x27] sm:$0xff]
      %v1400 = vld [vmem:[%s1046 + $0x2f] sm:$0xff]
      %v1401 = vld [vmem:[%s1046 + $0x47] sm:$0xff]
      %v1402 = vld [vmem:[%s1046 + $0x4f] sm:$0xff]
      %v1403 = vld [vmem:[%s1046 + $0x67] sm:$0xff]
      %v1404 = vld [vmem:[%s1046 + $0x6f] sm:$0xff]
      %v1405 = vld [vmem:[%s1046 + $0x87] sm:$0xff]
      %v1406 = vld [vmem:[%s1046 + $0x8f] sm:$0xff]
      %v1407 = vld [vmem:[%s1046 + $0xa7] sm:$0xff]
      %v1408 = vld [vmem:[%s1046 + $0xaf] sm:$0xff]
      %v1409 = vld [vmem:[%s1046 + $0xc7] sm:$0xff]
      %v1410 = vld [vmem:[%s1046 + $0xcf] sm:$0xff]
      %v1411 = vld [vmem:[%s1046 + $0xe7] sm:$0xff]
      %v1412 = vld [vmem:[%s1046 + $0xef] sm:$0xff]
      %v1413 = vld [vmem:[%s1046 + $0x107] sm:$0xff]
      %v1414 = vld [vmem:[%s1046 + $0x10f] sm:$0xff]
      %v1415 = vld [vmem:[%s1046 + $0x127] sm:$0xff]
      %v1416 = vld [vmem:[%s1046 + $0x12f] sm:$0xff]
      %v1417 = vld [vmem:[%s1046 + $0x147] sm:$0xff]
      %v1418 = vld [vmem:[%s1046 + $0x14f] sm:$0xff]
      %v1419 = vld [vmem:[%s1046 + $0x167] sm:$0xff]
      %v1420 = vld [vmem:[%s1046 + $0x16f] sm:$0xff]
      %v1421 = vld [vmem:[%s1046 + $0x187] sm:$0xff]
      %v1422 = vld [vmem:[%s1046 + $0x18f] sm:$0xff]
      %v1423 = vld [vmem:[%s1046 + $0x1a7] sm:$0xff]
      %v1424 = vld [vmem:[%s1046 + $0x1af] sm:$0xff]
      %v1425 = vld [vmem:[%s1046 + $0x1c7] sm:$0xff]
      %v1426 = vld [vmem:[%s1046 + $0x1cf] sm:$0xff]
      %v1427 = vld [vmem:[%s1046 + $0x1e7] sm:$0xff]
      %v1428 = vld [vmem:[%s1046 + $0x1ef] sm:$0xff]
      %v1429 = vlaneseq
      %v1430 = vshrl.u32 %v1429, 7
      %v1431 = vsub.s32 3, %v1430
      %v1432 = vrot.slane %v1094, %v1431
      %v1433 = vmul.f32 %v1397, %v1432
      %v1434 = vmul.f32 %v1398, %v1432
      %v1435 = vmul.f32 %v1399, %v1432
      %v1436 = vmul.f32 %v1400, %v1432
      %v1437 = vmul.f32 %v1401, %v1432
      %v1438 = vmul.f32 %v1402, %v1432
      %v1439 = vmul.f32 %v1403, %v1432
      %v1440 = vmul.f32 %v1404, %v1432
      %v1441 = vmul.f32 %v1405, %v1432
      %v1442 = vmul.f32 %v1406, %v1432
      %v1443 = vmul.f32 %v1407, %v1432
      %v1444 = vmul.f32 %v1408, %v1432
      %v1445 = vmul.f32 %v1409, %v1432
      %v1446 = vmul.f32 %v1410, %v1432
      %v1447 = vmul.f32 %v1411, %v1432
      %v1448 = vmul.f32 %v1412, %v1432
      %v1449 = vmul.f32 %v1413, %v1432
      %v1450 = vmul.f32 %v1414, %v1432
      %v1451 = vmul.f32 %v1415, %v1432
      %v1452 = vmul.f32 %v1416, %v1432
      %v1453 = vmul.f32 %v1417, %v1432
      %v1454 = vmul.f32 %v1418, %v1432
      %v1455 = vmul.f32 %v1419, %v1432
      %v1456 = vmul.f32 %v1420, %v1432
      %v1457 = vmul.f32 %v1421, %v1432
      %v1458 = vmul.f32 %v1422, %v1432
      %v1459 = vmul.f32 %v1423, %v1432
      %v1460 = vmul.f32 %v1424, %v1432
      %v1461 = vmul.f32 %v1425, %v1432
      %v1462 = vmul.f32 %v1426, %v1432
      %v1463 = vmul.f32 %v1427, %v1432
      %v1464 = vmul.f32 %v1428, %v1432
      %v1465 = vadd.f32 %v1365, %v1433
      %v1466 = vadd.f32 %v1366, %v1434
      %v1467 = vadd.f32 %v1367, %v1435
      %v1468 = vadd.f32 %v1368, %v1436
      %v1469 = vadd.f32 %v1369, %v1437
      %v1470 = vadd.f32 %v1370, %v1438
      %v1471 = vadd.f32 %v1371, %v1439
      %v1472 = vadd.f32 %v1372, %v1440
      %v1473 = vadd.f32 %v1373, %v1441
      %v1474 = vadd.f32 %v1374, %v1442
      %v1475 = vadd.f32 %v1375, %v1443
      %v1476 = vadd.f32 %v1376, %v1444
      %v1477 = vadd.f32 %v1377, %v1445
      %v1478 = vadd.f32 %v1378, %v1446
      %v1479 = vadd.f32 %v1379, %v1447
      %v1480 = vadd.f32 %v1380, %v1448
      %v1481 = vadd.f32 %v1381, %v1449
      %v1482 = vadd.f32 %v1382, %v1450
      %v1483 = vadd.f32 %v1383, %v1451
      %v1484 = vadd.f32 %v1384, %v1452
      %v1485 = vadd.f32 %v1385, %v1453
      %v1486 = vadd.f32 %v1386, %v1454
      %v1487 = vadd.f32 %v1387, %v1455
      %v1488 = vadd.f32 %v1388, %v1456
      %v1489 = vadd.f32 %v1389, %v1457
      %v1490 = vadd.f32 %v1390, %v1458
      %v1491 = vadd.f32 %v1391, %v1459
      %v1492 = vadd.f32 %v1392, %v1460
      %v1493 = vadd.f32 %v1393, %v1461
      %v1494 = vadd.f32 %v1394, %v1462
      %v1495 = vadd.f32 %v1395, %v1463
      %v1496 = vadd.f32 %v1396, %v1464
      %v1497 = vld [vmem:[%s1046 + $0x8] sm:$0xff]
      %v1498 = vld [vmem:[%s1046 + $0x10] sm:$0xff]
      %v1499 = vld [vmem:[%s1046 + $0x28] sm:$0xff]
      %v1500 = vld [vmem:[%s1046 + $0x30] sm:$0xff]
      %v1501 = vld [vmem:[%s1046 + $0x48] sm:$0xff]
      %v1502 = vld [vmem:[%s1046 + $0x50] sm:$0xff]
      %v1503 = vld [vmem:[%s1046 + $0x68] sm:$0xff]
      %v1504 = vld [vmem:[%s1046 + $0x70] sm:$0xff]
      %v1505 = vld [vmem:[%s1046 + $0x88] sm:$0xff]
      %v1506 = vld [vmem:[%s1046 + $0x90] sm:$0xff]
      %v1507 = vld [vmem:[%s1046 + $0xa8] sm:$0xff]
      %v1508 = vld [vmem:[%s1046 + $0xb0] sm:$0xff]
      %v1509 = vld [vmem:[%s1046 + $0xc8] sm:$0xff]
      %v1510 = vld [vmem:[%s1046 + $0xd0] sm:$0xff]
      %v1511 = vld [vmem:[%s1046 + $0xe8] sm:$0xff]
      %v1512 = vld [vmem:[%s1046 + $0xf0] sm:$0xff]
      %v1513 = vld [vmem:[%s1046 + $0x108] sm:$0xff]
      %v1514 = vld [vmem:[%s1046 + $0x110] sm:$0xff]
      %v1515 = vld [vmem:[%s1046 + $0x128] sm:$0xff]
      %v1516 = vld [vmem:[%s1046 + $0x130] sm:$0xff]
      %v1517 = vld [vmem:[%s1046 + $0x148] sm:$0xff]
      %v1518 = vld [vmem:[%s1046 + $0x150] sm:$0xff]
      %v1519 = vld [vmem:[%s1046 + $0x168] sm:$0xff]
      %v1520 = vld [vmem:[%s1046 + $0x170] sm:$0xff]
      %v1521 = vld [vmem:[%s1046 + $0x188] sm:$0xff]
      %v1522 = vld [vmem:[%s1046 + $0x190] sm:$0xff]
      %v1523 = vld [vmem:[%s1046 + $0x1a8] sm:$0xff]
      %v1524 = vld [vmem:[%s1046 + $0x1b0] sm:$0xff]
      %v1525 = vld [vmem:[%s1046 + $0x1c8] sm:$0xff]
      %v1526 = vld [vmem:[%s1046 + $0x1d0] sm:$0xff]
      %v1527 = vld [vmem:[%s1046 + $0x1e8] sm:$0xff]
      %v1528 = vld [vmem:[%s1046 + $0x1f0] sm:$0xff]
      %v1529 = vlaneseq
      %v1530 = vshrl.u32 %v1529, 7
      %v1531 = vsub.s32 4, %v1530
      %v1532 = vrot.slane %v1094, %v1531
      %v1533 = vmul.f32 %v1497, %v1532
      %v1534 = vmul.f32 %v1498, %v1532
      %v1535 = vmul.f32 %v1499, %v1532
      %v1536 = vmul.f32 %v1500, %v1532
      %v1537 = vmul.f32 %v1501, %v1532
      %v1538 = vmul.f32 %v1502, %v1532
      %v1539 = vmul.f32 %v1503, %v1532
      %v1540 = vmul.f32 %v1504, %v1532
      %v1541 = vmul.f32 %v1505, %v1532
      %v1542 = vmul.f32 %v1506, %v1532
      %v1543 = vmul.f32 %v1507, %v1532
      %v1544 = vmul.f32 %v1508, %v1532
      %v1545 = vmul.f32 %v1509, %v1532
      %v1546 = vmul.f32 %v1510, %v1532
      %v1547 = vmul.f32 %v1511, %v1532
      %v1548 = vmul.f32 %v1512, %v1532
      %v1549 = vmul.f32 %v1513, %v1532
      %v1550 = vmul.f32 %v1514, %v1532
      %v1551 = vmul.f32 %v1515, %v1532
      %v1552 = vmul.f32 %v1516, %v1532
      %v1553 = vmul.f32 %v1517, %v1532
      %v1554 = vmul.f32 %v1518, %v1532
      %v1555 = vmul.f32 %v1519, %v1532
      %v1556 = vmul.f32 %v1520, %v1532
      %v1557 = vmul.f32 %v1521, %v1532
      %v1558 = vmul.f32 %v1522, %v1532
      %v1559 = vmul.f32 %v1523, %v1532
      %v1560 = vmul.f32 %v1524, %v1532
      %v1561 = vmul.f32 %v1525, %v1532
      %v1562 = vmul.f32 %v1526, %v1532
      %v1563 = vmul.f32 %v1527, %v1532
      %v1564 = vmul.f32 %v1528, %v1532
      %v1565 = vadd.f32 %v1465, %v1533
      %v1566 = vadd.f32 %v1466, %v1534
      %v1567 = vadd.f32 %v1467, %v1535
      %v1568 = vadd.f32 %v1468, %v1536
      %v1569 = vadd.f32 %v1469, %v1537
      %v1570 = vadd.f32 %v1470, %v1538
      %v1571 = vadd.f32 %v1471, %v1539
      %v1572 = vadd.f32 %v1472, %v1540
      %v1573 = vadd.f32 %v1473, %v1541
      %v1574 = vadd.f32 %v1474, %v1542
      %v1575 = vadd.f32 %v1475, %v1543
      %v1576 = vadd.f32 %v1476, %v1544
      %v1577 = vadd.f32 %v1477, %v1545
      %v1578 = vadd.f32 %v1478, %v1546
      %v1579 = vadd.f32 %v1479, %v1547
      %v1580 = vadd.f32 %v1480, %v1548
      %v1581 = vadd.f32 %v1481, %v1549
      %v1582 = vadd.f32 %v1482, %v1550
      %v1583 = vadd.f32 %v1483, %v1551
      %v1584 = vadd.f32 %v1484, %v1552
      %v1585 = vadd.f32 %v1485, %v1553
      %v1586 = vadd.f32 %v1486, %v1554
      %v1587 = vadd.f32 %v1487, %v1555
      %v1588 = vadd.f32 %v1488, %v1556
      %v1589 = vadd.f32 %v1489, %v1557
      %v1590 = vadd.f32 %v1490, %v1558
      %v1591 = vadd.f32 %v1491, %v1559
      %v1592 = vadd.f32 %v1492, %v1560
      %v1593 = vadd.f32 %v1493, %v1561
      %v1594 = vadd.f32 %v1494, %v1562
      %v1595 = vadd.f32 %v1495, %v1563
      %v1596 = vadd.f32 %v1496, %v1564
      %v1597 = vld [vmem:[%s1046 + $0x9] sm:$0xff]
      %v1598 = vld [vmem:[%s1046 + $0x11] sm:$0xff]
      %v1599 = vld [vmem:[%s1046 + $0x29] sm:$0xff]
      %v1600 = vld [vmem:[%s1046 + $0x31] sm:$0xff]
      %v1601 = vld [vmem:[%s1046 + $0x49] sm:$0xff]
      %v1602 = vld [vmem:[%s1046 + $0x51] sm:$0xff]
      %v1603 = vld [vmem:[%s1046 + $0x69] sm:$0xff]
      %v1604 = vld [vmem:[%s1046 + $0x71] sm:$0xff]
      %v1605 = vld [vmem:[%s1046 + $0x89] sm:$0xff]
      %v1606 = vld [vmem:[%s1046 + $0x91] sm:$0xff]
      %v1607 = vld [vmem:[%s1046 + $0xa9] sm:$0xff]
      %v1608 = vld [vmem:[%s1046 + $0xb1] sm:$0xff]
      %v1609 = vld [vmem:[%s1046 + $0xc9] sm:$0xff]
      %v1610 = vld [vmem:[%s1046 + $0xd1] sm:$0xff]
      %v1611 = vld [vmem:[%s1046 + $0xe9] sm:$0xff]
      %v1612 = vld [vmem:[%s1046 + $0xf1] sm:$0xff]
      %v1613 = vld [vmem:[%s1046 + $0x109] sm:$0xff]
      %v1614 = vld [vmem:[%s1046 + $0x111] sm:$0xff]
      %v1615 = vld [vmem:[%s1046 + $0x129] sm:$0xff]
      %v1616 = vld [vmem:[%s1046 + $0x131] sm:$0xff]
      %v1617 = vld [vmem:[%s1046 + $0x149] sm:$0xff]
      %v1618 = vld [vmem:[%s1046 + $0x151] sm:$0xff]
      %v1619 = vld [vmem:[%s1046 + $0x169] sm:$0xff]
      %v1620 = vld [vmem:[%s1046 + $0x171] sm:$0xff]
      %v1621 = vld [vmem:[%s1046 + $0x189] sm:$0xff]
      %v1622 = vld [vmem:[%s1046 + $0x191] sm:$0xff]
      %v1623 = vld [vmem:[%s1046 + $0x1a9] sm:$0xff]
      %v1624 = vld [vmem:[%s1046 + $0x1b1] sm:$0xff]
      %v1625 = vld [vmem:[%s1046 + $0x1c9] sm:$0xff]
      %v1626 = vld [vmem:[%s1046 + $0x1d1] sm:$0xff]
      %v1627 = vld [vmem:[%s1046 + $0x1e9] sm:$0xff]
      %v1628 = vld [vmem:[%s1046 + $0x1f1] sm:$0xff]
      %v1629 = vlaneseq
      %v1630 = vshrl.u32 %v1629, 7
      %v1631 = vsub.s32 5, %v1630
      %v1632 = vrot.slane %v1094, %v1631
      %v1633 = vmul.f32 %v1597, %v1632
      %v1634 = vmul.f32 %v1598, %v1632
      %v1635 = vmul.f32 %v1599, %v1632
      %v1636 = vmul.f32 %v1600, %v1632
      %v1637 = vmul.f32 %v1601, %v1632
      %v1638 = vmul.f32 %v1602, %v1632
      %v1639 = vmul.f32 %v1603, %v1632
      %v1640 = vmul.f32 %v1604, %v1632
      %v1641 = vmul.f32 %v1605, %v1632
      %v1642 = vmul.f32 %v1606, %v1632
      %v1643 = vmul.f32 %v1607, %v1632
      %v1644 = vmul.f32 %v1608, %v1632
      %v1645 = vmul.f32 %v1609, %v1632
      %v1646 = vmul.f32 %v1610, %v1632
      %v1647 = vmul.f32 %v1611, %v1632
      %v1648 = vmul.f32 %v1612, %v1632
      %v1649 = vmul.f32 %v1613, %v1632
      %v1650 = vmul.f32 %v1614, %v1632
      %v1651 = vmul.f32 %v1615, %v1632
      %v1652 = vmul.f32 %v1616, %v1632
      %v1653 = vmul.f32 %v1617, %v1632
      %v1654 = vmul.f32 %v1618, %v1632
      %v1655 = vmul.f32 %v1619, %v1632
      %v1656 = vmul.f32 %v1620, %v1632
      %v1657 = vmul.f32 %v1621, %v1632
      %v1658 = vmul.f32 %v1622, %v1632
      %v1659 = vmul.f32 %v1623, %v1632
      %v1660 = vmul.f32 %v1624, %v1632
      %v1661 = vmul.f32 %v1625, %v1632
      %v1662 = vmul.f32 %v1626, %v1632
      %v1663 = vmul.f32 %v1627, %v1632
      %v1664 = vmul.f32 %v1628, %v1632
      %v1665 = vadd.f32 %v1565, %v1633
      %v1666 = vadd.f32 %v1566, %v1634
      %v1667 = vadd.f32 %v1567, %v1635
      %v1668 = vadd.f32 %v1568, %v1636
      %v1669 = vadd.f32 %v1569, %v1637
      %v1670 = vadd.f32 %v1570, %v1638
      %v1671 = vadd.f32 %v1571, %v1639
      %v1672 = vadd.f32 %v1572, %v1640
      %v1673 = vadd.f32 %v1573, %v1641
      %v1674 = vadd.f32 %v1574, %v1642
      %v1675 = vadd.f32 %v1575, %v1643
      %v1676 = vadd.f32 %v1576, %v1644
      %v1677 = vadd.f32 %v1577, %v1645
      %v1678 = vadd.f32 %v1578, %v1646
      %v1679 = vadd.f32 %v1579, %v1647
      %v1680 = vadd.f32 %v1580, %v1648
      %v1681 = vadd.f32 %v1581, %v1649
      %v1682 = vadd.f32 %v1582, %v1650
      %v1683 = vadd.f32 %v1583, %v1651
      %v1684 = vadd.f32 %v1584, %v1652
      %v1685 = vadd.f32 %v1585, %v1653
      %v1686 = vadd.f32 %v1586, %v1654
      %v1687 = vadd.f32 %v1587, %v1655
      %v1688 = vadd.f32 %v1588, %v1656
      %v1689 = vadd.f32 %v1589, %v1657
      %v1690 = vadd.f32 %v1590, %v1658
      %v1691 = vadd.f32 %v1591, %v1659
      %v1692 = vadd.f32 %v1592, %v1660
      %v1693 = vadd.f32 %v1593, %v1661
      %v1694 = vadd.f32 %v1594, %v1662
      %v1695 = vadd.f32 %v1595, %v1663
      %v1696 = vadd.f32 %v1596, %v1664
      %v1697 = vld [vmem:[%s1049 + $0x7] sm:$0xff]
      %v1698 = vld [vmem:[%s1049 + $0xf] sm:$0xff]
      %v1699 = vld [vmem:[%s1049 + $0x27] sm:$0xff]
      %v1700 = vld [vmem:[%s1049 + $0x2f] sm:$0xff]
      %v1701 = vld [vmem:[%s1049 + $0x47] sm:$0xff]
      %v1702 = vld [vmem:[%s1049 + $0x4f] sm:$0xff]
      %v1703 = vld [vmem:[%s1049 + $0x67] sm:$0xff]
      %v1704 = vld [vmem:[%s1049 + $0x6f] sm:$0xff]
      %v1705 = vld [vmem:[%s1049 + $0x87] sm:$0xff]
      %v1706 = vld [vmem:[%s1049 + $0x8f] sm:$0xff]
      %v1707 = vld [vmem:[%s1049 + $0xa7] sm:$0xff]
      %v1708 = vld [vmem:[%s1049 + $0xaf] sm:$0xff]
      %v1709 = vld [vmem:[%s1049 + $0xc7] sm:$0xff]
      %v1710 = vld [vmem:[%s1049 + $0xcf] sm:$0xff]
      %v1711 = vld [vmem:[%s1049 + $0xe7] sm:$0xff]
      %v1712 = vld [vmem:[%s1049 + $0xef] sm:$0xff]
      %v1713 = vld [vmem:[%s1049 + $0x107] sm:$0xff]
      %v1714 = vld [vmem:[%s1049 + $0x10f] sm:$0xff]
      %v1715 = vld [vmem:[%s1049 + $0x127] sm:$0xff]
      %v1716 = vld [vmem:[%s1049 + $0x12f] sm:$0xff]
      %v1717 = vld [vmem:[%s1049 + $0x147] sm:$0xff]
      %v1718 = vld [vmem:[%s1049 + $0x14f] sm:$0xff]
      %v1719 = vld [vmem:[%s1049 + $0x167] sm:$0xff]
      %v1720 = vld [vmem:[%s1049 + $0x16f] sm:$0xff]
      %v1721 = vld [vmem:[%s1049 + $0x187] sm:$0xff]
      %v1722 = vld [vmem:[%s1049 + $0x18f] sm:$0xff]
      %v1723 = vld [vmem:[%s1049 + $0x1a7] sm:$0xff]
      %v1724 = vld [vmem:[%s1049 + $0x1af] sm:$0xff]
      %v1725 = vld [vmem:[%s1049 + $0x1c7] sm:$0xff]
      %v1726 = vld [vmem:[%s1049 + $0x1cf] sm:$0xff]
      %v1727 = vld [vmem:[%s1049 + $0x1e7] sm:$0xff]
      %v1728 = vld [vmem:[%s1049 + $0x1ef] sm:$0xff]
      %v1729 = vlaneseq
      %v1730 = vshrl.u32 %v1729, 7
      %v1731 = vsub.s32 6, %v1730
      %v1732 = vrot.slane %v1094, %v1731
      %v1733 = vmul.f32 %v1697, %v1732
      %v1734 = vmul.f32 %v1698, %v1732
      %v1735 = vmul.f32 %v1699, %v1732
      %v1736 = vmul.f32 %v1700, %v1732
      %v1737 = vmul.f32 %v1701, %v1732
      %v1738 = vmul.f32 %v1702, %v1732
      %v1739 = vmul.f32 %v1703, %v1732
      %v1740 = vmul.f32 %v1704, %v1732
      %v1741 = vmul.f32 %v1705, %v1732
      %v1742 = vmul.f32 %v1706, %v1732
      %v1743 = vmul.f32 %v1707, %v1732
      %v1744 = vmul.f32 %v1708, %v1732
      %v1745 = vmul.f32 %v1709, %v1732
      %v1746 = vmul.f32 %v1710, %v1732
      %v1747 = vmul.f32 %v1711, %v1732
      %v1748 = vmul.f32 %v1712, %v1732
      %v1749 = vmul.f32 %v1713, %v1732
      %v1750 = vmul.f32 %v1714, %v1732
      %v1751 = vmul.f32 %v1715, %v1732
      %v1752 = vmul.f32 %v1716, %v1732
      %v1753 = vmul.f32 %v1717, %v1732
      %v1754 = vmul.f32 %v1718, %v1732
      %v1755 = vmul.f32 %v1719, %v1732
      %v1756 = vmul.f32 %v1720, %v1732
      %v1757 = vmul.f32 %v1721, %v1732
      %v1758 = vmul.f32 %v1722, %v1732
      %v1759 = vmul.f32 %v1723, %v1732
      %v1760 = vmul.f32 %v1724, %v1732
      %v1761 = vmul.f32 %v1725, %v1732
      %v1762 = vmul.f32 %v1726, %v1732
      %v1763 = vmul.f32 %v1727, %v1732
      %v1764 = vmul.f32 %v1728, %v1732
      %v1765 = vadd.f32 %v1665, %v1733
      %v1766 = vadd.f32 %v1666, %v1734
      %v1767 = vadd.f32 %v1667, %v1735
      %v1768 = vadd.f32 %v1668, %v1736
      %v1769 = vadd.f32 %v1669, %v1737
      %v1770 = vadd.f32 %v1670, %v1738
      %v1771 = vadd.f32 %v1671, %v1739
      %v1772 = vadd.f32 %v1672, %v1740
      %v1773 = vadd.f32 %v1673, %v1741
      %v1774 = vadd.f32 %v1674, %v1742
      %v1775 = vadd.f32 %v1675, %v1743
      %v1776 = vadd.f32 %v1676, %v1744
      %v1777 = vadd.f32 %v1677, %v1745
      %v1778 = vadd.f32 %v1678, %v1746
      %v1779 = vadd.f32 %v1679, %v1747
      %v1780 = vadd.f32 %v1680, %v1748
      %v1781 = vadd.f32 %v1681, %v1749
      %v1782 = vadd.f32 %v1682, %v1750
      %v1783 = vadd.f32 %v1683, %v1751
      %v1784 = vadd.f32 %v1684, %v1752
      %v1785 = vadd.f32 %v1685, %v1753
      %v1786 = vadd.f32 %v1686, %v1754
      %v1787 = vadd.f32 %v1687, %v1755
      %v1788 = vadd.f32 %v1688, %v1756
      %v1789 = vadd.f32 %v1689, %v1757
      %v1790 = vadd.f32 %v1690, %v1758
      %v1791 = vadd.f32 %v1691, %v1759
      %v1792 = vadd.f32 %v1692, %v1760
      %v1793 = vadd.f32 %v1693, %v1761
      %v1794 = vadd.f32 %v1694, %v1762
      %v1795 = vadd.f32 %v1695, %v1763
      %v1796 = vadd.f32 %v1696, %v1764
      %v1797 = vld [vmem:[%s1049 + $0x8] sm:$0xff]
      %v1798 = vld [vmem:[%s1049 + $0x10] sm:$0xff]
      %v1799 = vld [vmem:[%s1049 + $0x28] sm:$0xff]
      %v1800 = vld [vmem:[%s1049 + $0x30] sm:$0xff]
      %v1801 = vld [vmem:[%s1049 + $0x48] sm:$0xff]
      %v1802 = vld [vmem:[%s1049 + $0x50] sm:$0xff]
      %v1803 = vld [vmem:[%s1049 + $0x68] sm:$0xff]
      %v1804 = vld [vmem:[%s1049 + $0x70] sm:$0xff]
      %v1805 = vld [vmem:[%s1049 + $0x88] sm:$0xff]
      %v1806 = vld [vmem:[%s1049 + $0x90] sm:$0xff]
      %v1807 = vld [vmem:[%s1049 + $0xa8] sm:$0xff]
      %v1808 = vld [vmem:[%s1049 + $0xb0] sm:$0xff]
      %v1809 = vld [vmem:[%s1049 + $0xc8] sm:$0xff]
      %v1810 = vld [vmem:[%s1049 + $0xd0] sm:$0xff]
      %v1811 = vld [vmem:[%s1049 + $0xe8] sm:$0xff]
      %v1812 = vld [vmem:[%s1049 + $0xf0] sm:$0xff]
      %v1813 = vld [vmem:[%s1049 + $0x108] sm:$0xff]
      %v1814 = vld [vmem:[%s1049 + $0x110] sm:$0xff]
      %v1815 = vld [vmem:[%s1049 + $0x128] sm:$0xff]
      %v1816 = vld [vmem:[%s1049 + $0x130] sm:$0xff]
      %v1817 = vld [vmem:[%s1049 + $0x148] sm:$0xff]
      %v1818 = vld [vmem:[%s1049 + $0x150] sm:$0xff]
      %v1819 = vld [vmem:[%s1049 + $0x168] sm:$0xff]
      %v1820 = vld [vmem:[%s1049 + $0x170] sm:$0xff]
      %v1821 = vld [vmem:[%s1049 + $0x188] sm:$0xff]
      %v1822 = vld [vmem:[%s1049 + $0x190] sm:$0xff]
      %v1823 = vld [vmem:[%s1049 + $0x1a8] sm:$0xff]
      %v1824 = vld [vmem:[%s1049 + $0x1b0] sm:$0xff]
      %v1825 = vld [vmem:[%s1049 + $0x1c8] sm:$0xff]
      %v1826 = vld [vmem:[%s1049 + $0x1d0] sm:$0xff]
      %v1827 = vld [vmem:[%s1049 + $0x1e8] sm:$0xff]
      %v1828 = vld [vmem:[%s1049 + $0x1f0] sm:$0xff]
      %v1829 = vlaneseq
      %v1830 = vshrl.u32 %v1829, 7
      %v1831 = vsub.s32 7, %v1830
      %v1832 = vrot.slane %v1094, %v1831
      %v1833 = vmul.f32 %v1797, %v1832
      %v1834 = vmul.f32 %v1798, %v1832
      %v1835 = vmul.f32 %v1799, %v1832
      %v1836 = vmul.f32 %v1800, %v1832
      %v1837 = vmul.f32 %v1801, %v1832
      %v1838 = vmul.f32 %v1802, %v1832
      %v1839 = vmul.f32 %v1803, %v1832
      %v1840 = vmul.f32 %v1804, %v1832
      %v1841 = vmul.f32 %v1805, %v1832
      %v1842 = vmul.f32 %v1806, %v1832
      %v1843 = vmul.f32 %v1807, %v1832
      %v1844 = vmul.f32 %v1808, %v1832
      %v1845 = vmul.f32 %v1809, %v1832
      %v1846 = vmul.f32 %v1810, %v1832
      %v1847 = vmul.f32 %v1811, %v1832
      %v1848 = vmul.f32 %v1812, %v1832
      %v1849 = vmul.f32 %v1813, %v1832
      %v1850 = vmul.f32 %v1814, %v1832
      %v1851 = vmul.f32 %v1815, %v1832
      %v1852 = vmul.f32 %v1816, %v1832
      %v1853 = vmul.f32 %v1817, %v1832
      %v1854 = vmul.f32 %v1818, %v1832
      %v1855 = vmul.f32 %v1819, %v1832
      %v1856 = vmul.f32 %v1820, %v1832
      %v1857 = vmul.f32 %v1821, %v1832
      %v1858 = vmul.f32 %v1822, %v1832
      %v1859 = vmul.f32 %v1823, %v1832
      %v1860 = vmul.f32 %v1824, %v1832
      %v1861 = vmul.f32 %v1825, %v1832
      %v1862 = vmul.f32 %v1826, %v1832
      %v1863 = vmul.f32 %v1827, %v1832
      %v1864 = vmul.f32 %v1828, %v1832
      %v1865 = vadd.f32 %v1765, %v1833
      %v1866 = vadd.f32 %v1766, %v1834
      %v1867 = vadd.f32 %v1767, %v1835
      %v1868 = vadd.f32 %v1768, %v1836
      %v1869 = vadd.f32 %v1769, %v1837
      %v1870 = vadd.f32 %v1770, %v1838
      %v1871 = vadd.f32 %v1771, %v1839
      %v1872 = vadd.f32 %v1772, %v1840
      %v1873 = vadd.f32 %v1773, %v1841
      %v1874 = vadd.f32 %v1774, %v1842
      %v1875 = vadd.f32 %v1775, %v1843
      %v1876 = vadd.f32 %v1776, %v1844
      %v1877 = vadd.f32 %v1777, %v1845
      %v1878 = vadd.f32 %v1778, %v1846
      %v1879 = vadd.f32 %v1779, %v1847
      %v1880 = vadd.f32 %v1780, %v1848
      %v1881 = vadd.f32 %v1781, %v1849
      %v1882 = vadd.f32 %v1782, %v1850
      %v1883 = vadd.f32 %v1783, %v1851
      %v1884 = vadd.f32 %v1784, %v1852
      %v1885 = vadd.f32 %v1785, %v1853
      %v1886 = vadd.f32 %v1786, %v1854
      %v1887 = vadd.f32 %v1787, %v1855
      %v1888 = vadd.f32 %v1788, %v1856
      %v1889 = vadd.f32 %v1789, %v1857
      %v1890 = vadd.f32 %v1790, %v1858
      %v1891 = vadd.f32 %v1791, %v1859
      %v1892 = vadd.f32 %v1792, %v1860
      %v1893 = vadd.f32 %v1793, %v1861
      %v1894 = vadd.f32 %v1794, %v1862
      %v1895 = vadd.f32 %v1795, %v1863
      %v1896 = vadd.f32 %v1796, %v1864
      %v1897 = vld [vmem:[%s1049 + $0x9] sm:$0xff]
      %v1898 = vld [vmem:[%s1049 + $0x11] sm:$0xff]
      %v1899 = vld [vmem:[%s1049 + $0x29] sm:$0xff]
      %v1900 = vld [vmem:[%s1049 + $0x31] sm:$0xff]
      %v1901 = vld [vmem:[%s1049 + $0x49] sm:$0xff]
      %v1902 = vld [vmem:[%s1049 + $0x51] sm:$0xff]
      %v1903 = vld [vmem:[%s1049 + $0x69] sm:$0xff]
      %v1904 = vld [vmem:[%s1049 + $0x71] sm:$0xff]
      %v1905 = vld [vmem:[%s1049 + $0x89] sm:$0xff]
      %v1906 = vld [vmem:[%s1049 + $0x91] sm:$0xff]
      %v1907 = vld [vmem:[%s1049 + $0xa9] sm:$0xff]
      %v1908 = vld [vmem:[%s1049 + $0xb1] sm:$0xff]
      %v1909 = vld [vmem:[%s1049 + $0xc9] sm:$0xff]
      %v1910 = vld [vmem:[%s1049 + $0xd1] sm:$0xff]
      %v1911 = vld [vmem:[%s1049 + $0xe9] sm:$0xff]
      %v1912 = vld [vmem:[%s1049 + $0xf1] sm:$0xff]
      %v1913 = vld [vmem:[%s1049 + $0x109] sm:$0xff]
      %v1914 = vld [vmem:[%s1049 + $0x111] sm:$0xff]
      %v1915 = vld [vmem:[%s1049 + $0x129] sm:$0xff]
      %v1916 = vld [vmem:[%s1049 + $0x131] sm:$0xff]
      %v1917 = vld [vmem:[%s1049 + $0x149] sm:$0xff]
      %v1918 = vld [vmem:[%s1049 + $0x151] sm:$0xff]
      %v1919 = vld [vmem:[%s1049 + $0x169] sm:$0xff]
      %v1920 = vld [vmem:[%s1049 + $0x171] sm:$0xff]
      %v1921 = vld [vmem:[%s1049 + $0x189] sm:$0xff]
      %v1922 = vld [vmem:[%s1049 + $0x191] sm:$0xff]
      %v1923 = vld [vmem:[%s1049 + $0x1a9] sm:$0xff]
      %v1924 = vld [vmem:[%s1049 + $0x1b1] sm:$0xff]
      %v1925 = vld [vmem:[%s1049 + $0x1c9] sm:$0xff]
      %v1926 = vld [vmem:[%s1049 + $0x1d1] sm:$0xff]
      %v1927 = vld [vmem:[%s1049 + $0x1e9] sm:$0xff]
      %v1928 = vld [vmem:[%s1049 + $0x1f1] sm:$0xff]
      %v1929 = vlaneseq
      %v1930 = vshrl.u32 %v1929, 7
      %v1931 = vsub.s32 0, %v1930
      %v1932 = vrot.slane %v1095, %v1931
      %v1933 = vmul.f32 %v1897, %v1932
      %v1934 = vmul.f32 %v1898, %v1932
      %v1935 = vmul.f32 %v1899, %v1932
      %v1936 = vmul.f32 %v1900, %v1932
      %v1937 = vmul.f32 %v1901, %v1932
      %v1938 = vmul.f32 %v1902, %v1932
      %v1939 = vmul.f32 %v1903, %v1932
      %v1940 = vmul.f32 %v1904, %v1932
      %v1941 = vmul.f32 %v1905, %v1932
      %v1942 = vmul.f32 %v1906, %v1932
      %v1943 = vmul.f32 %v1907, %v1932
      %v1944 = vmul.f32 %v1908, %v1932
      %v1945 = vmul.f32 %v1909, %v1932
      %v1946 = vmul.f32 %v1910, %v1932
      %v1947 = vmul.f32 %v1911, %v1932
      %v1948 = vmul.f32 %v1912, %v1932
      %v1949 = vmul.f32 %v1913, %v1932
      %v1950 = vmul.f32 %v1914, %v1932
      %v1951 = vmul.f32 %v1915, %v1932
      %v1952 = vmul.f32 %v1916, %v1932
      %v1953 = vmul.f32 %v1917, %v1932
      %v1954 = vmul.f32 %v1918, %v1932
      %v1955 = vmul.f32 %v1919, %v1932
      %v1956 = vmul.f32 %v1920, %v1932
      %v1957 = vmul.f32 %v1921, %v1932
      %v1958 = vmul.f32 %v1922, %v1932
      %v1959 = vmul.f32 %v1923, %v1932
      %v1960 = vmul.f32 %v1924, %v1932
      %v1961 = vmul.f32 %v1925, %v1932
      %v1962 = vmul.f32 %v1926, %v1932
      %v1963 = vmul.f32 %v1927, %v1932
      %v1964 = vmul.f32 %v1928, %v1932
      %v1965 = vadd.f32 %v1865, %v1933
      %v1966 = vadd.f32 %v1866, %v1934
      %v1967 = vadd.f32 %v1867, %v1935
      %v1968 = vadd.f32 %v1868, %v1936
      %v1969 = vadd.f32 %v1869, %v1937
      %v1970 = vadd.f32 %v1870, %v1938
      %v1971 = vadd.f32 %v1871, %v1939
      %v1972 = vadd.f32 %v1872, %v1940
      %v1973 = vadd.f32 %v1873, %v1941
      %v1974 = vadd.f32 %v1874, %v1942
      %v1975 = vadd.f32 %v1875, %v1943
      %v1976 = vadd.f32 %v1876, %v1944
      %v1977 = vadd.f32 %v1877, %v1945
      %v1978 = vadd.f32 %v1878, %v1946
      %v1979 = vadd.f32 %v1879, %v1947
      %v1980 = vadd.f32 %v1880, %v1948
      %v1981 = vadd.f32 %v1881, %v1949
      %v1982 = vadd.f32 %v1882, %v1950
      %v1983 = vadd.f32 %v1883, %v1951
      %v1984 = vadd.f32 %v1884, %v1952
      %v1985 = vadd.f32 %v1885, %v1953
      %v1986 = vadd.f32 %v1886, %v1954
      %v1987 = vadd.f32 %v1887, %v1955
      %v1988 = vadd.f32 %v1888, %v1956
      %v1989 = vadd.f32 %v1889, %v1957
      %v1990 = vadd.f32 %v1890, %v1958
      %v1991 = vadd.f32 %v1891, %v1959
      %v1992 = vadd.f32 %v1892, %v1960
      %v1993 = vadd.f32 %v1893, %v1961
      %v1994 = vadd.f32 %v1894, %v1962
      %v1995 = vadd.f32 %v1895, %v1963
      %v1996 = vadd.f32 %v1896, %v1964
      %v1998 = vlaneseq
      %v1999 = vshrl.u32 %v1998, 7
      %v2000 = vsub.s32 0, %v1999
      %v2001 = vrot.slane %v1096, %v2000
      %v2003 = vadd.f32 %v1965, %v2001
      %v2004 = vadd.f32 %v1966, %v2001
      %v2005 = vadd.f32 %v1967, %v2001
      %v2006 = vadd.f32 %v1968, %v2001
      %v2007 = vadd.f32 %v1969, %v2001
      %v2008 = vadd.f32 %v1970, %v2001
      %v2009 = vadd.f32 %v1971, %v2001
      %v2010 = vadd.f32 %v1972, %v2001
      %v2011 = vadd.f32 %v1973, %v2001
      %v2012 = vadd.f32 %v1974, %v2001
      %v2013 = vadd.f32 %v1975, %v2001
      %v2014 = vadd.f32 %v1976, %v2001
      %v2015 = vadd.f32 %v1977, %v2001
      %v2016 = vadd.f32 %v1978, %v2001
      %v2017 = vadd.f32 %v1979, %v2001
      %v2018 = vadd.f32 %v1980, %v2001
      %v2019 = vadd.f32 %v1981, %v2001
      %v2020 = vadd.f32 %v1982, %v2001
      %v2021 = vadd.f32 %v1983, %v2001
      %v2022 = vadd.f32 %v1984, %v2001
      %v2023 = vadd.f32 %v1985, %v2001
      %v2024 = vadd.f32 %v1986, %v2001
      %v2025 = vadd.f32 %v1987, %v2001
      %v2026 = vadd.f32 %v1988, %v2001
      %v2027 = vadd.f32 %v1989, %v2001
      %v2028 = vadd.f32 %v1990, %v2001
      %v2029 = vadd.f32 %v1991, %v2001
      %v2030 = vadd.f32 %v1992, %v2001
      %v2031 = vadd.f32 %v1993, %v2001
      %v2032 = vadd.f32 %v1994, %v2001
      %v2033 = vadd.f32 %v1995, %v2001
      %v2034 = vadd.f32 %v1996, %v2001
      %v2035 = vxor.u32 %v2003, 2147483648
      %v2036 = vxor.u32 %v2004, 2147483648
      %v2037 = vxor.u32 %v2005, 2147483648
      %v2038 = vxor.u32 %v2006, 2147483648
      %v2039 = vxor.u32 %v2007, 2147483648
      %v2040 = vxor.u32 %v2008, 2147483648
      %v2041 = vxor.u32 %v2009, 2147483648
      %v2042 = vxor.u32 %v2010, 2147483648
      %v2043 = vxor.u32 %v2011, 2147483648
      %v2044 = vxor.u32 %v2012, 2147483648
      %v2045 = vxor.u32 %v2013, 2147483648
      %v2046 = vxor.u32 %v2014, 2147483648
      %v2047 = vxor.u32 %v2015, 2147483648
      %v2048 = vxor.u32 %v2016, 2147483648
      %v2049 = vxor.u32 %v2017, 2147483648
      %v2050 = vxor.u32 %v2018, 2147483648
      %v2051 = vxor.u32 %v2019, 2147483648
      %v2052 = vxor.u32 %v2020, 2147483648
      %v2053 = vxor.u32 %v2021, 2147483648
      %v2054 = vxor.u32 %v2022, 2147483648
      %v2055 = vxor.u32 %v2023, 2147483648
      %v2056 = vxor.u32 %v2024, 2147483648
      %v2057 = vxor.u32 %v2025, 2147483648
      %v2058 = vxor.u32 %v2026, 2147483648
      %v2059 = vxor.u32 %v2027, 2147483648
      %v2060 = vxor.u32 %v2028, 2147483648
      %v2061 = vxor.u32 %v2029, 2147483648
      %v2062 = vxor.u32 %v2030, 2147483648
      %v2063 = vxor.u32 %v2031, 2147483648
      %v2064 = vxor.u32 %v2032, 2147483648
      %v2065 = vxor.u32 %v2033, 2147483648
      %v2066 = vxor.u32 %v2034, 2147483648
      %v2067 = vmul.f32 %v2035, 1.442695
      %v2068 = vpow.pop %v2067
      %v2069 = vmul.f32 %v2036, 1.442695
      %v2070 = vpow.pop %v2069
      %v2071 = vmul.f32 %v2037, 1.442695
      %v2072 = vpow.pop %v2071
      %v2073 = vmul.f32 %v2038, 1.442695
      %v2074 = vpow.pop %v2073
      %v2075 = vmul.f32 %v2039, 1.442695
      %v2076 = vpow.pop %v2075
      %v2077 = vmul.f32 %v2040, 1.442695
      %v2078 = vpow.pop %v2077
      %v2079 = vmul.f32 %v2041, 1.442695
      %v2080 = vpow.pop %v2079
      %v2081 = vmul.f32 %v2042, 1.442695
      %v2082 = vpow.pop %v2081
      %v2083 = vmul.f32 %v2043, 1.442695
      %v2084 = vpow.pop %v2083
      %v2085 = vmul.f32 %v2044, 1.442695
      %v2086 = vpow.pop %v2085
      %v2087 = vmul.f32 %v2045, 1.442695
      %v2088 = vpow.pop %v2087
      %v2089 = vmul.f32 %v2046, 1.442695
      %v2090 = vpow.pop %v2089
      %v2091 = vmul.f32 %v2047, 1.442695
      %v2092 = vpow.pop %v2091
      %v2093 = vmul.f32 %v2048, 1.442695
      %v2094 = vpow.pop %v2093
      %v2095 = vmul.f32 %v2049, 1.442695
      %v2096 = vpow.pop %v2095
      %v2097 = vmul.f32 %v2050, 1.442695
      %v2098 = vpow.pop %v2097
      %v2099 = vmul.f32 %v2051, 1.442695
      %v2100 = vpow.pop %v2099
      %v2101 = vmul.f32 %v2052, 1.442695
      %v2102 = vpow.pop %v2101
      %v2103 = vmul.f32 %v2053, 1.442695
      %v2104 = vpow.pop %v2103
      %v2105 = vmul.f32 %v2054, 1.442695
      %v2106 = vpow.pop %v2105
      %v2107 = vmul.f32 %v2055, 1.442695
      %v2108 = vpow.pop %v2107
      %v2109 = vmul.f32 %v2056, 1.442695
      %v2110 = vpow.pop %v2109
      %v2111 = vmul.f32 %v2057, 1.442695
      %v2112 = vpow.pop %v2111
      %v2113 = vmul.f32 %v2058, 1.442695
      %v2114 = vpow.pop %v2113
      %v2115 = vmul.f32 %v2059, 1.442695
      %v2116 = vpow.pop %v2115
      %v2117 = vmul.f32 %v2060, 1.442695
      %v2118 = vpow.pop %v2117
      %v2119 = vmul.f32 %v2061, 1.442695
      %v2120 = vpow.pop %v2119
      %v2121 = vmul.f32 %v2062, 1.442695
      %v2122 = vpow.pop %v2121
      %v2123 = vmul.f32 %v2063, 1.442695
      %v2124 = vpow.pop %v2123
      %v2125 = vmul.f32 %v2064, 1.442695
      %v2126 = vpow.pop %v2125
      %v2127 = vmul.f32 %v2065, 1.442695
      %v2128 = vpow.pop %v2127
      %v2129 = vmul.f32 %v2066, 1.442695
      %v2130 = vpow.pop %v2129
      %v2131 = vadd.f32 %v2068, 1.0
      %v2132 = vadd.f32 %v2070, 1.0
      %v2133 = vadd.f32 %v2072, 1.0
      %v2134 = vadd.f32 %v2074, 1.0
      %v2135 = vadd.f32 %v2076, 1.0
      %v2136 = vadd.f32 %v2078, 1.0
      %v2137 = vadd.f32 %v2080, 1.0
      %v2138 = vadd.f32 %v2082, 1.0
      %v2139 = vadd.f32 %v2084, 1.0
      %v2140 = vadd.f32 %v2086, 1.0
      %v2141 = vadd.f32 %v2088, 1.0
      %v2142 = vadd.f32 %v2090, 1.0
      %v2143 = vadd.f32 %v2092, 1.0
      %v2144 = vadd.f32 %v2094, 1.0
      %v2145 = vadd.f32 %v2096, 1.0
      %v2146 = vadd.f32 %v2098, 1.0
      %v2147 = vadd.f32 %v2100, 1.0
      %v2148 = vadd.f32 %v2102, 1.0
      %v2149 = vadd.f32 %v2104, 1.0
      %v2150 = vadd.f32 %v2106, 1.0
      %v2151 = vadd.f32 %v2108, 1.0
      %v2152 = vadd.f32 %v2110, 1.0
      %v2153 = vadd.f32 %v2112, 1.0
      %v2154 = vadd.f32 %v2114, 1.0
      %v2155 = vadd.f32 %v2116, 1.0
      %v2156 = vadd.f32 %v2118, 1.0
      %v2157 = vadd.f32 %v2120, 1.0
      %v2158 = vadd.f32 %v2122, 1.0
      %v2159 = vadd.f32 %v2124, 1.0
      %v2160 = vadd.f32 %v2126, 1.0
      %v2161 = vadd.f32 %v2128, 1.0
      %v2162 = vadd.f32 %v2130, 1.0
      %v2163 = vrcp.pop %v2131
      %v2164 = vmul.f32 1.0, %v2163
      %v2165 = vrcp.pop %v2132
      %v2166 = vmul.f32 1.0, %v2165
      %v2167 = vrcp.pop %v2133
      %v2168 = vmul.f32 1.0, %v2167
      %v2169 = vrcp.pop %v2134
      %v2170 = vmul.f32 1.0, %v2169
      %v2171 = vrcp.pop %v2135
      %v2172 = vmul.f32 1.0, %v2171
      %v2173 = vrcp.pop %v2136
      %v2174 = vmul.f32 1.0, %v2173
      %v2175 = vrcp.pop %v2137
      %v2176 = vmul.f32 1.0, %v2175
      %v2177 = vrcp.pop %v2138
      %v2178 = vmul.f32 1.0, %v2177
      %v2179 = vrcp.pop %v2139
      %v2180 = vmul.f32 1.0, %v2179
      %v2181 = vrcp.pop %v2140
      %v2182 = vmul.f32 1.0, %v2181
      %v2183 = vrcp.pop %v2141
      %v2184 = vmul.f32 1.0, %v2183
      %v2185 = vrcp.pop %v2142
      %v2186 = vmul.f32 1.0, %v2185
      %v2187 = vrcp.pop %v2143
      %v2188 = vmul.f32 1.0, %v2187
      %v2189 = vrcp.pop %v2144
      %v2190 = vmul.f32 1.0, %v2189
      %v2191 = vrcp.pop %v2145
      %v2192 = vmul.f32 1.0, %v2191
      %v2193 = vrcp.pop %v2146
      %v2194 = vmul.f32 1.0, %v2193
      %v2195 = vrcp.pop %v2147
      %v2196 = vmul.f32 1.0, %v2195
      %v2197 = vrcp.pop %v2148
      %v2198 = vmul.f32 1.0, %v2197
      %v2199 = vrcp.pop %v2149
      %v2200 = vmul.f32 1.0, %v2199
      %v2201 = vrcp.pop %v2150
      %v2202 = vmul.f32 1.0, %v2201
      %v2203 = vrcp.pop %v2151
      %v2204 = vmul.f32 1.0, %v2203
      %v2205 = vrcp.pop %v2152
      %v2206 = vmul.f32 1.0, %v2205
      %v2207 = vrcp.pop %v2153
      %v2208 = vmul.f32 1.0, %v2207
      %v2209 = vrcp.pop %v2154
      %v2210 = vmul.f32 1.0, %v2209
      %v2211 = vrcp.pop %v2155
      %v2212 = vmul.f32 1.0, %v2211
      %v2213 = vrcp.pop %v2156
      %v2214 = vmul.f32 1.0, %v2213
      %v2215 = vrcp.pop %v2157
      %v2216 = vmul.f32 1.0, %v2215
      %v2217 = vrcp.pop %v2158
      %v2218 = vmul.f32 1.0, %v2217
      %v2219 = vrcp.pop %v2159
      %v2220 = vmul.f32 1.0, %v2219
      %v2221 = vrcp.pop %v2160
      %v2222 = vmul.f32 1.0, %v2221
      %v2223 = vrcp.pop %v2161
      %v2224 = vmul.f32 1.0, %v2223
      %v2225 = vrcp.pop %v2162
      %v2226 = vmul.f32 1.0, %v2225
      %v2227 = vmul.f32 %v2003, %v2164
      %v2228 = vmul.f32 %v2004, %v2166
      %v2229 = vmul.f32 %v2005, %v2168
      %v2230 = vmul.f32 %v2006, %v2170
      %v2231 = vmul.f32 %v2007, %v2172
      %v2232 = vmul.f32 %v2008, %v2174
      %v2233 = vmul.f32 %v2009, %v2176
      %v2234 = vmul.f32 %v2010, %v2178
      %v2235 = vmul.f32 %v2011, %v2180
      %v2236 = vmul.f32 %v2012, %v2182
      %v2237 = vmul.f32 %v2013, %v2184
      %v2238 = vmul.f32 %v2014, %v2186
      %v2239 = vmul.f32 %v2015, %v2188
      %v2240 = vmul.f32 %v2016, %v2190
      %v2241 = vmul.f32 %v2017, %v2192
      %v2242 = vmul.f32 %v2018, %v2194
      %v2243 = vmul.f32 %v2019, %v2196
      %v2244 = vmul.f32 %v2020, %v2198
      %v2245 = vmul.f32 %v2021, %v2200
      %v2246 = vmul.f32 %v2022, %v2202
      %v2247 = vmul.f32 %v2023, %v2204
      %v2248 = vmul.f32 %v2024, %v2206
      %v2249 = vmul.f32 %v2025, %v2208
      %v2250 = vmul.f32 %v2026, %v2210
      %v2251 = vmul.f32 %v2027, %v2212
      %v2252 = vmul.f32 %v2028, %v2214
      %v2253 = vmul.f32 %v2029, %v2216
      %v2254 = vmul.f32 %v2030, %v2218
      %v2255 = vmul.f32 %v2031, %v2220
      %v2256 = vmul.f32 %v2032, %v2222
      %v2257 = vmul.f32 %v2033, %v2224
      %v2258 = vmul.f32 %v2034, %v2226
      %v2259 = vsel %vm973, %v2227, 0.0
      %v2260 = vsel %vm973, %v2229, 0.0
      %v2261 = vadd.f32 %v2259, %v2260
      %v2262 = vsel %vm973, %v2231, 0.0
      %v2263 = vadd.f32 %v2261, %v2262
      %v2264 = vsel %vm973, %v2233, 0.0
      %v2265 = vadd.f32 %v2263, %v2264
      %v2266 = vsel %vm973, %v2235, 0.0
      %v2267 = vadd.f32 %v2265, %v2266
      %v2268 = vsel %vm973, %v2237, 0.0
      %v2269 = vadd.f32 %v2267, %v2268
      %v2270 = vsel %vm973, %v2239, 0.0
      %v2271 = vadd.f32 %v2269, %v2270
      %v2272 = vsel %vm973, %v2241, 0.0
      %v2273 = vadd.f32 %v2271, %v2272
      %v2274 = vsel %vm973, %v2243, 0.0
      %v2275 = vadd.f32 %v2273, %v2274
      %v2276 = vsel %vm973, %v2245, 0.0
      %v2277 = vadd.f32 %v2275, %v2276
      %v2278 = vsel %vm973, %v2247, 0.0
      %v2279 = vadd.f32 %v2277, %v2278
      %v2280 = vsel %vm973, %v2249, 0.0
      %v2281 = vadd.f32 %v2279, %v2280
      %v2282 = vsel %vm973, %v2251, 0.0
      %v2283 = vadd.f32 %v2281, %v2282
      %v2284 = vsel %vm973, %v2253, 0.0
      %v2285 = vadd.f32 %v2283, %v2284
      %v2286 = vsel %vm973, %v2255, 0.0
      %v2287 = vadd.f32 %v2285, %v2286
      %v2288 = vsel %vm973, %v2257, 0.0
      %v2289 = vadd.f32 %v2287, %v2288
      %v2290 = vsel %vm973, %v2228, 0.0
      %v2291 = vsel %vm973, %v2230, 0.0
      %v2292 = vadd.f32 %v2290, %v2291
      %v2293 = vsel %vm973, %v2232, 0.0
      %v2294 = vadd.f32 %v2292, %v2293
      %v2295 = vsel %vm973, %v2234, 0.0
      %v2296 = vadd.f32 %v2294, %v2295
      %v2297 = vsel %vm973, %v2236, 0.0
      %v2298 = vadd.f32 %v2296, %v2297
      %v2299 = vsel %vm973, %v2238, 0.0
      %v2300 = vadd.f32 %v2298, %v2299
      %v2301 = vsel %vm973, %v2240, 0.0
      %v2302 = vadd.f32 %v2300, %v2301
      %v2303 = vsel %vm973, %v2242, 0.0
      %v2304 = vadd.f32 %v2302, %v2303
      %v2305 = vsel %vm973, %v2244, 0.0
      %v2306 = vadd.f32 %v2304, %v2305
      %v2307 = vsel %vm973, %v2246, 0.0
      %v2308 = vadd.f32 %v2306, %v2307
      %v2309 = vsel %vm973, %v2248, 0.0
      %v2310 = vadd.f32 %v2308, %v2309
      %v2311 = vsel %vm973, %v2250, 0.0
      %v2312 = vadd.f32 %v2310, %v2311
      %v2313 = vsel %vm973, %v2252, 0.0
      %v2314 = vadd.f32 %v2312, %v2313
      %v2315 = vsel %vm973, %v2254, 0.0
      %v2316 = vadd.f32 %v2314, %v2315
      %v2317 = vsel %vm973, %v2256, 0.0
      %v2318 = vadd.f32 %v2316, %v2317
      %v2319 = vsel %vm973, %v2258, 0.0
      %v2320 = vadd.f32 %v2318, %v2319
      %v2321 = vrcp.pop 16.0
      %v2322 = vmul.f32 %v2289, %v2321
      %v2323 = vmul.f32 %v2320, %v2321
      %v2324 = vsel %vm973, %v2322, 0.0
      %v2325 = vsel %vm973, %v2323, 0.0
      %v2326 = vadd.f32 %v2324, %v2325
      %v2327 = vrot.slane %v2326, 4
      %v2328 = vadd.f32 %v2326, %v2327
      %v2329 = vrot.slane %v2328, 2
      %v2330 = vadd.f32 %v2328, %v2329
      %v2331 = vrot.slane %v2330, 1
      %v2332 = vadd.f32 %v2330, %v2331
      %v2333 = vmul.f32 %v2332, %v2321
      %2335 = vbcast.lane.b32.xlu0 %v2333, 256
      %v2336 = vpop.permute.xlu0 %2335
      %s2338 = sor.u32 256, 8
      %2339 = vbcast.lane.b32.xlu0 %v2333, %s2338
      %v2340 = vpop.permute.xlu0 %2339
      %s2342 = sor.u32 256, 16
      %2343 = vbcast.lane.b32.xlu0 %v2333, %s2342
      %v2344 = vpop.permute.xlu0 %2343
      %s2346 = sor.u32 256, 24
      %2347 = vbcast.lane.b32.xlu0 %v2333, %s2346
      %v2348 = vpop.permute.xlu0 %2347
      %v2349 = vld [vmem:[%s5] sm:$0xff]
      %v2350 = vld [vmem:[%s5 + $0x8] sm:$0xff]
      %v2351 = vld [vmem:[%s5 + $0x10] sm:$0xff]
      %v2352 = vld [vmem:[%s5 + $0x18] sm:$0xff]
      %v2353 = vmul.f32 %v2336, %v2349
      %v2354 = vmul.f32 %v2340, %v2350
      %v2355 = vmul.f32 %v2344, %v2351
      %v2356 = vmul.f32 %v2348, %v2352
      %vm2357 = vcmask 15360
      %v2358 = vsel %vm2357, %v2353, 0.0
      %v2359 = vsel %vm2357, %v2354, 0.0
      %v2360 = vadd.f32 %v2358, %v2359
      %v2361 = vsel %vm2357, %v2355, 0.0
      %v2362 = vadd.f32 %v2360, %v2361
      %v2363 = vsel %vm2357, %v2356, 0.0
      %v2364 = vadd.f32 %v2362, %v2363
      %v2365 = vrot.slane %v2364, 4
      %v2366 = vadd.f32 %v2364, %v2365
      %v2367 = vrot.slane %v2366, 2
      %v2368 = vadd.f32 %v2366, %v2367
      %v2369 = vrot.slane %v2368, 1
      %v2370 = vadd.f32 %v2368, %v2369
      %v2371 = vld [vmem:[%s6] sm:$0x1]
      %v2372 = vadd.f32 %v2370, %v2371
      %v2373 = vxor.u32 %v2372, 2147483648
      %v2374 = vmul.f32 %v2373, 1.442695
      %v2375 = vpow.pop %v2374
      %v2376 = vadd.f32 %v2375, 1.0
      %v2377 = vrcp.pop %v2376
      %v2378 = vmul.f32 1.0, %v2377
      %v2379 = vmul.f32 %v2372, %v2378
      %v2380 = vlaneseq
      %v2381 = vshrl.u32 %v2380, 7
      %v2382 = vsub.s32 0, %v2381
      %v2383 = vrot.slane %v2379, %v2382
      %2385 = vbcast.lane.b32.xlu0 %v2383, 256
      %v2386 = vpop.permute.xlu0 %2385
      %v2387 = vld [vmem:[%s7] sm:$0x3]
      %v2388 = vmul.f32 %v2386, %v2387
      %vm2389 = vcmask 254976
      %v2390 = vsel %vm2389, %v2388, 0.0
      %v2391 = vrot.slane %v2390, 4
      %v2392 = vadd.f32 %v2390, %v2391
      %v2393 = vrot.slane %v2392, 2
      %v2394 = vadd.f32 %v2392, %v2393
      %v2395 = vrot.slane %v2394, 1
      %v2396 = vadd.f32 %v2394, %v2395
      %v2397 = vld [vmem:[%s8] sm:$0x1]
      %v2398 = vadd.f32 %v2396, %v2397
      %v2399 = vxor.u32 %v2398, 2147483648
      %v2400 = vmul.f32 %v2399, 1.442695
      %v2401 = vpow.pop %v2400
      %v2402 = vadd.f32 %v2401, 1.0
      %v2403 = vrcp.pop %v2402
      %v2404 = vmul.f32 1.0, %v2403
      %v2405 = vlaneseq
      %v2406 = vshrl.u32 %v2405, 7
      %v2407 = vsub.s32 0, %v2406
      %v2408 = vrot.slane %v2404, %v2407
      %v2409 = vmul.f32 %v2227, %v2408
      %v2410 = vmul.f32 %v2228, %v2408
      %v2411 = vmul.f32 %v2229, %v2408
      %v2412 = vmul.f32 %v2230, %v2408
      %v2413 = vmul.f32 %v2231, %v2408
      %v2414 = vmul.f32 %v2232, %v2408
      %v2415 = vmul.f32 %v2233, %v2408
      %v2416 = vmul.f32 %v2234, %v2408
      %v2417 = vmul.f32 %v2235, %v2408
      %v2418 = vmul.f32 %v2236, %v2408
      %v2419 = vmul.f32 %v2237, %v2408
      %v2420 = vmul.f32 %v2238, %v2408
      %v2421 = vmul.f32 %v2239, %v2408
      %v2422 = vmul.f32 %v2240, %v2408
      %v2423 = vmul.f32 %v2241, %v2408
      %v2424 = vmul.f32 %v2242, %v2408
      %v2425 = vmul.f32 %v2243, %v2408
      %v2426 = vmul.f32 %v2244, %v2408
      %v2427 = vmul.f32 %v2245, %v2408
      %v2428 = vmul.f32 %v2246, %v2408
      %v2429 = vmul.f32 %v2247, %v2408
      %v2430 = vmul.f32 %v2248, %v2408
      %v2431 = vmul.f32 %v2249, %v2408
      %v2432 = vmul.f32 %v2250, %v2408
      %v2433 = vmul.f32 %v2251, %v2408
      %v2434 = vmul.f32 %v2252, %v2408
      %v2435 = vmul.f32 %v2253, %v2408
      %v2436 = vmul.f32 %v2254, %v2408
      %v2437 = vmul.f32 %v2255, %v2408
      %v2438 = vmul.f32 %v2256, %v2408
      %v2439 = vmul.f32 %v2257, %v2408
      %v2440 = vmul.f32 %v2258, %v2408
      %2441 = vst.msk [vmem:[#allocation3] sm:$0xff] %vm973, %v2409
      %2442 = vst.msk [vmem:[#allocation3 + $0x8] sm:$0xff] %vm973, %v2410
      %2443 = vst.msk [vmem:[#allocation3 + $0x10] sm:$0xff] %vm973, %v2411
      %2444 = vst.msk [vmem:[#allocation3 + $0x18] sm:$0xff] %vm973, %v2412
      %2445 = vst.msk [vmem:[#allocation3 + $0x20] sm:$0xff] %vm973, %v2413
      %2446 = vst.msk [vmem:[#allocation3 + $0x28] sm:$0xff] %vm973, %v2414
      %2447 = vst.msk [vmem:[#allocation3 + $0x30] sm:$0xff] %vm973, %v2415
      %2448 = vst.msk [vmem:[#allocation3 + $0x38] sm:$0xff] %vm973, %v2416
      %2449 = vst.msk [vmem:[#allocation3 + $0x40] sm:$0xff] %vm973, %v2417
      %2450 = vst.msk [vmem:[#allocation3 + $0x48] sm:$0xff] %vm973, %v2418
      %2451 = vst.msk [vmem:[#allocation3 + $0x50] sm:$0xff] %vm973, %v2419
      %2452 = vst.msk [vmem:[#allocation3 + $0x58] sm:$0xff] %vm973, %v2420
      %2453 = vst.msk [vmem:[#allocation3 + $0x60] sm:$0xff] %vm973, %v2421
      %2454 = vst.msk [vmem:[#allocation3 + $0x68] sm:$0xff] %vm973, %v2422
      %2455 = vst.msk [vmem:[#allocation3 + $0x70] sm:$0xff] %vm973, %v2423
      %2456 = vst.msk [vmem:[#allocation3 + $0x78] sm:$0xff] %vm973, %v2424
      %2457 = vst.msk [vmem:[#allocation3 + $0x80] sm:$0xff] %vm973, %v2425
      %2458 = vst.msk [vmem:[#allocation3 + $0x88] sm:$0xff] %vm973, %v2426
      %2459 = vst.msk [vmem:[#allocation3 + $0x90] sm:$0xff] %vm973, %v2427
      %2460 = vst.msk [vmem:[#allocation3 + $0x98] sm:$0xff] %vm973, %v2428
      %2461 = vst.msk [vmem:[#allocation3 + $0xa0] sm:$0xff] %vm973, %v2429
      %2462 = vst.msk [vmem:[#allocation3 + $0xa8] sm:$0xff] %vm973, %v2430
      %2463 = vst.msk [vmem:[#allocation3 + $0xb0] sm:$0xff] %vm973, %v2431
      %2464 = vst.msk [vmem:[#allocation3 + $0xb8] sm:$0xff] %vm973, %v2432
      %2465 = vst.msk [vmem:[#allocation3 + $0xc0] sm:$0xff] %vm973, %v2433
      %2466 = vst.msk [vmem:[#allocation3 + $0xc8] sm:$0xff] %vm973, %v2434
      %2467 = vst.msk [vmem:[#allocation3 + $0xd0] sm:$0xff] %vm973, %v2435
      %2468 = vst.msk [vmem:[#allocation3 + $0xd8] sm:$0xff] %vm973, %v2436
      %2469 = vst.msk [vmem:[#allocation3 + $0xe0] sm:$0xff] %vm973, %v2437
      %2470 = vst.msk [vmem:[#allocation3 + $0xe8] sm:$0xff] %vm973, %v2438
      %2471 = vst.msk [vmem:[#allocation3 + $0xf0] sm:$0xff] %vm973, %v2439
      %2472 = vst.msk [vmem:[#allocation3 + $0xf8] sm:$0xff] %vm973, %v2440
      %v2473 = vld [vmem:[#allocation3] sm:$0xff]
      %v2474 = vld [vmem:[#allocation3 + $0x8] sm:$0xff]
      %v2475 = vld [vmem:[#allocation3 + $0x10] sm:$0xff]
      %v2476 = vld [vmem:[#allocation3 + $0x18] sm:$0xff]
      %v2477 = vld [vmem:[#allocation3 + $0x20] sm:$0xff]
      %v2478 = vld [vmem:[#allocation3 + $0x28] sm:$0xff]
      %v2479 = vld [vmem:[#allocation3 + $0x30] sm:$0xff]
      %v2480 = vld [vmem:[#allocation3 + $0x38] sm:$0xff]
      %v2481 = vld [vmem:[#allocation3 + $0x40] sm:$0xff]
      %v2482 = vld [vmem:[#allocation3 + $0x48] sm:$0xff]
      %v2483 = vld [vmem:[#allocation3 + $0x50] sm:$0xff]
      %v2484 = vld [vmem:[#allocation3 + $0x58] sm:$0xff]
      %v2485 = vld [vmem:[#allocation3 + $0x60] sm:$0xff]
      %v2486 = vld [vmem:[#allocation3 + $0x68] sm:$0xff]
      %v2487 = vld [vmem:[#allocation3 + $0x70] sm:$0xff]
      %v2488 = vld [vmem:[#allocation3 + $0x78] sm:$0xff]
      %v2489 = vld [vmem:[#allocation3 + $0x80] sm:$0xff]
      %v2490 = vld [vmem:[#allocation3 + $0x88] sm:$0xff]
      %v2491 = vld [vmem:[#allocation3 + $0x90] sm:$0xff]
      %v2492 = vld [vmem:[#allocation3 + $0x98] sm:$0xff]
      %v2493 = vld [vmem:[#allocation3 + $0xa0] sm:$0xff]
      %v2494 = vld [vmem:[#allocation3 + $0xa8] sm:$0xff]
      %v2495 = vld [vmem:[#allocation3 + $0xb0] sm:$0xff]
      %v2496 = vld [vmem:[#allocation3 + $0xb8] sm:$0xff]
      %v2497 = vld [vmem:[#allocation3 + $0xc0] sm:$0xff]
      %v2498 = vld [vmem:[#allocation3 + $0xc8] sm:$0xff]
      %v2499 = vld [vmem:[#allocation3 + $0xd0] sm:$0xff]
      %v2500 = vld [vmem:[#allocation3 + $0xd8] sm:$0xff]
      %v2501 = vld [vmem:[#allocation3 + $0xe0] sm:$0xff]
      %v2502 = vld [vmem:[#allocation3 + $0xe8] sm:$0xff]
      %v2503 = vld [vmem:[#allocation3 + $0xf0] sm:$0xff]
      %v2504 = vld [vmem:[#allocation3 + $0xf8] sm:$0xff]
      %v2505 = vld [vmem:[%s9] sm:$0xff]
      %v2506 = vld [vmem:[%s9 + $0x8] sm:$0xff]
      %v2507 = vld [vmem:[%s9 + $0x10] sm:$0xff]
      %v2508 = vld [vmem:[%s9 + $0x18] sm:$0xff]
      %v2509 = vld [vmem:[%s10] sm:$0x1]
      %v2511 = vlaneseq
      %v2512 = vshrl.u32 %v2511, 7
      %v2513 = vsub.s32 0, %v2512
      %v2514 = vrot.slane %v2509, %v2513
      %v2517 = vsel %vm973, %v2473, 0
      %v2520 = vsel %vm973, %v2474, 0
      %v2523 = vsel %vm973, %v2475, 0
      %v2526 = vsel %vm973, %v2476, 0
      %v2529 = vsel %vm973, %v2477, 0
      %v2532 = vsel %vm973, %v2478, 0
      %v2535 = vsel %vm973, %v2479, 0
      %v2538 = vsel %vm973, %v2480, 0
      %v2541 = vsel %vm973, %v2481, 0
      %v2544 = vsel %vm973, %v2482, 0
      %v2547 = vsel %vm973, %v2483, 0
      %v2550 = vsel %vm973, %v2484, 0
      %v2553 = vsel %vm973, %v2485, 0
      %v2556 = vsel %vm973, %v2486, 0
      %v2559 = vsel %vm973, %v2487, 0
      %v2562 = vsel %vm973, %v2488, 0
      %v2565 = vsel %vm973, %v2489, 0
      %v2568 = vsel %vm973, %v2490, 0
      %v2571 = vsel %vm973, %v2491, 0
      %v2574 = vsel %vm973, %v2492, 0
      %v2577 = vsel %vm973, %v2493, 0
      %v2580 = vsel %vm973, %v2494, 0
      %v2583 = vsel %vm973, %v2495, 0
      %v2586 = vsel %vm973, %v2496, 0
      %v2589 = vsel %vm973, %v2497, 0
      %v2592 = vsel %vm973, %v2498, 0
      %v2595 = vsel %vm973, %v2499, 0
      %v2598 = vsel %vm973, %v2500, 0
      %v2601 = vsel %vm973, %v2501, 0
      %v2604 = vsel %vm973, %v2502, 0
      %v2607 = vsel %vm973, %v2503, 0
      %v2610 = vsel %vm973, %v2504, 0
      %2612 = vmatprep.subr.mxu0 0.0
      %2613 = vmatpush1.msra.mxu0 0.0
      %2614 = vmatprep.subr.mxu0 0.0
      %2615 = vmatpush1.msra.mxu0 0.0
      %2616 = vmatprep.subr.mxu0 0.0
      %2617 = vmatpush1.msra.mxu0 0.0
      %2618 = vmatprep.subr.mxu0 0.0
      %2619 = vmatpush1.msra.mxu0 0.0
      %2620 = vmatprep.subr.mxu0 0.0
      %2621 = vmatpush1.msra.mxu0 0.0
      %2622 = vmatprep.subr.mxu0 0.0
      %2623 = vmatpush1.msra.mxu0 0.0
      %2624 = vmatprep.subr.mxu0 0.0
      %2625 = vmatpush1.msra.mxu0 0.0
      %2626 = vmatprep.subr.mxu0 0.0
      %2627 = vmatpush1.msra.mxu0 0.0
      %2628 = vmatprep.subr.mxu0 0.0
      %2629 = vmatpush1.msra.mxu0 0.0
      %2630 = vmatprep.subr.mxu0 0.0
      %2631 = vmatpush1.msra.mxu0 0.0
      %2632 = vmatprep.subr.mxu0 0.0
      %2633 = vmatpush1.msra.mxu0 0.0
      %2634 = vmatprep.subr.mxu0 0.0
      %2635 = vmatpush1.msra.mxu0 0.0
      %2636 = vmatprep.subr.mxu0 0.0
      %2637 = vmatpush1.msra.mxu0 %v2508
      %2638 = vmatprep.subr.mxu0 0.0
      %2639 = vmatpush1.msra.mxu0 %v2507
      %2640 = vmatprep.subr.mxu0 0.0
      %2641 = vmatpush1.msra.mxu0 %v2506
      %2642 = vmatprep.subr.mxu0 0.0
      %2643 = vmatpush1.msra.mxu0 %v2505
      %2644 = vmatprep.subr.mxu0 0.0
      %2645 = vmatpush2.msra.mxu0 0.0
      %2646 = vmatprep.subr.mxu0 0.0
      %2647 = vmatpush2.msra.mxu0 0.0
      %2648 = vmatprep.subr.mxu0 0.0
      %2649 = vmatpush2.msra.mxu0 0.0
      %2650 = vmatprep.subr.mxu0 0.0
      %2651 = vmatpush2.msra.mxu0 0.0
      %2652 = vmatprep.subr.mxu0 0.0
      %2653 = vmatpush2.msra.mxu0 0.0
      %2654 = vmatprep.subr.mxu0 0.0
      %2655 = vmatpush2.msra.mxu0 0.0
      %2656 = vmatprep.subr.mxu0 0.0
      %2657 = vmatpush2.msra.mxu0 0.0
      %2658 = vmatprep.subr.mxu0 0.0
      %2659 = vmatpush2.msra.mxu0 0.0
      %2660 = vmatprep.subr.mxu0 0.0
      %2661 = vmatpush2.msra.mxu0 0.0
      %2662 = vmatprep.subr.mxu0 0.0
      %2663 = vmatpush2.msra.mxu0 0.0
      %2664 = vmatprep.subr.mxu0 0.0
      %2665 = vmatpush2.msra.mxu0 0.0
      %2666 = vmatprep.subr.mxu0 0.0
      %2667 = vmatpush2.msra.mxu0 0.0
      %2668 = vmatprep.subr.mxu0 0.0
      %2669 = vmatpush2.msra.mxu0 0.0
      %2670 = vmatprep.subr.mxu0 0.0
      %2671 = vmatpush2.msra.mxu0 0.0
      %2672 = vmatprep.subr.mxu0 0.0
      %2673 = vmatpush2.msra.mxu0 0.0
      %2674 = vmatprep.subr.mxu0 0.0
      %2675 = vmatpush2.msra.mxu0 0.0
      %2676 = vmatprep.mubr.f32.mxu0 0.0
      %2677 = vmatmul.mubr.f32.gmra.mxu0 %v2517
      %v2678 = vpop.f32.mrf.mxu0
      %v2679 = vadd.f32 %v2514, %v2678
      %v2680 = vpop.f32.mrf.mxu0
      %2681 = vmatprep.mubr.f32.mxu0 0.0
      %2682 = vmatmul.mubr.f32.gmra.mxu0 %v2520
      %v2683 = vpop.f32.mrf.mxu0
      %v2684 = vadd.f32 %v2514, %v2683
      %v2685 = vpop.f32.mrf.mxu0
      %2686 = vmatprep.mubr.f32.mxu0 0.0
      %2687 = vmatmul.mubr.f32.gmra.mxu0 %v2523
      %v2688 = vpop.f32.mrf.mxu0
      %v2689 = vadd.f32 %v2514, %v2688
      %v2690 = vpop.f32.mrf.mxu0
      %2691 = vmatprep.mubr.f32.mxu0 0.0
      %2692 = vmatmul.mubr.f32.gmra.mxu0 %v2526
      %v2693 = vpop.f32.mrf.mxu0
      %v2694 = vadd.f32 %v2514, %v2693
      %v2695 = vpop.f32.mrf.mxu0
      %2696 = vmatprep.mubr.f32.mxu0 0.0
      %2697 = vmatmul.mubr.f32.gmra.mxu0 %v2529
      %v2698 = vpop.f32.mrf.mxu0
      %v2699 = vadd.f32 %v2514, %v2698
      %v2700 = vpop.f32.mrf.mxu0
      %2701 = vmatprep.mubr.f32.mxu0 0.0
      %2702 = vmatmul.mubr.f32.gmra.mxu0 %v2532
      %v2703 = vpop.f32.mrf.mxu0
      %v2704 = vadd.f32 %v2514, %v2703
      %v2705 = vpop.f32.mrf.mxu0
      %2706 = vmatprep.mubr.f32.mxu0 0.0
      %2707 = vmatmul.mubr.f32.gmra.mxu0 %v2535
      %v2708 = vpop.f32.mrf.mxu0
      %v2709 = vadd.f32 %v2514, %v2708
      %v2710 = vpop.f32.mrf.mxu0
      %2711 = vmatprep.mubr.f32.mxu0 0.0
      %2712 = vmatmul.mubr.f32.gmra.mxu0 %v2538
      %v2713 = vpop.f32.mrf.mxu0
      %v2714 = vadd.f32 %v2514, %v2713
      %v2715 = vpop.f32.mrf.mxu0
      %2716 = vmatprep.mubr.f32.mxu0 0.0
      %2717 = vmatmul.mubr.f32.gmra.mxu0 %v2541
      %v2718 = vpop.f32.mrf.mxu0
      %v2719 = vadd.f32 %v2514, %v2718
      %v2720 = vpop.f32.mrf.mxu0
      %2721 = vmatprep.mubr.f32.mxu0 0.0
      %2722 = vmatmul.mubr.f32.gmra.mxu0 %v2544
      %v2723 = vpop.f32.mrf.mxu0
      %v2724 = vadd.f32 %v2514, %v2723
      %v2725 = vpop.f32.mrf.mxu0
      %2726 = vmatprep.mubr.f32.mxu0 0.0
      %2727 = vmatmul.mubr.f32.gmra.mxu0 %v2547
      %v2728 = vpop.f32.mrf.mxu0
      %v2729 = vadd.f32 %v2514, %v2728
      %v2730 = vpop.f32.mrf.mxu0
      %2731 = vmatprep.mubr.f32.mxu0 0.0
      %2732 = vmatmul.mubr.f32.gmra.mxu0 %v2550
      %v2733 = vpop.f32.mrf.mxu0
      %v2734 = vadd.f32 %v2514, %v2733
      %v2735 = vpop.f32.mrf.mxu0
      %2736 = vmatprep.mubr.f32.mxu0 0.0
      %2737 = vmatmul.mubr.f32.gmra.mxu0 %v2553
      %v2738 = vpop.f32.mrf.mxu0
      %v2739 = vadd.f32 %v2514, %v2738
      %v2740 = vpop.f32.mrf.mxu0
      %2741 = vmatprep.mubr.f32.mxu0 0.0
      %2742 = vmatmul.mubr.f32.gmra.mxu0 %v2556
      %v2743 = vpop.f32.mrf.mxu0
      %v2744 = vadd.f32 %v2514, %v2743
      %v2745 = vpop.f32.mrf.mxu0
      %2746 = vmatprep.mubr.f32.mxu0 0.0
      %2747 = vmatmul.mubr.f32.gmra.mxu0 %v2559
      %v2748 = vpop.f32.mrf.mxu0
      %v2749 = vadd.f32 %v2514, %v2748
      %v2750 = vpop.f32.mrf.mxu0
      %2751 = vmatprep.mubr.f32.mxu0 0.0
      %2752 = vmatmul.mubr.f32.gmra.mxu0 %v2562
      %v2753 = vpop.f32.mrf.mxu0
      %v2754 = vadd.f32 %v2514, %v2753
      %v2755 = vpop.f32.mrf.mxu0
      %2756 = vmatprep.mubr.f32.mxu0 0.0
      %2757 = vmatmul.mubr.f32.gmra.mxu0 %v2565
      %v2758 = vpop.f32.mrf.mxu0
      %v2759 = vadd.f32 %v2514, %v2758
      %v2760 = vpop.f32.mrf.mxu0
      %2761 = vmatprep.mubr.f32.mxu0 0.0
      %2762 = vmatmul.mubr.f32.gmra.mxu0 %v2568
      %v2763 = vpop.f32.mrf.mxu0
      %v2764 = vadd.f32 %v2514, %v2763
      %v2765 = vpop.f32.mrf.mxu0
      %2766 = vmatprep.mubr.f32.mxu0 0.0
      %2767 = vmatmul.mubr.f32.gmra.mxu0 %v2571
      %v2768 = vpop.f32.mrf.mxu0
      %v2769 = vadd.f32 %v2514, %v2768
      %v2770 = vpop.f32.mrf.mxu0
      %2771 = vmatprep.mubr.f32.mxu0 0.0
      %2772 = vmatmul.mubr.f32.gmra.mxu0 %v2574
      %v2773 = vpop.f32.mrf.mxu0
      %v2774 = vadd.f32 %v2514, %v2773
      %v2775 = vpop.f32.mrf.mxu0
      %2776 = vmatprep.mubr.f32.mxu0 0.0
      %2777 = vmatmul.mubr.f32.gmra.mxu0 %v2577
      %v2778 = vpop.f32.mrf.mxu0
      %v2779 = vadd.f32 %v2514, %v2778
      %v2780 = vpop.f32.mrf.mxu0
      %2781 = vmatprep.mubr.f32.mxu0 0.0
      %2782 = vmatmul.mubr.f32.gmra.mxu0 %v2580
      %v2783 = vpop.f32.mrf.mxu0
      %v2784 = vadd.f32 %v2514, %v2783
      %v2785 = vpop.f32.mrf.mxu0
      %2786 = vmatprep.mubr.f32.mxu0 0.0
      %2787 = vmatmul.mubr.f32.gmra.mxu0 %v2583
      %v2788 = vpop.f32.mrf.mxu0
      %v2789 = vadd.f32 %v2514, %v2788
      %v2790 = vpop.f32.mrf.mxu0
      %2791 = vmatprep.mubr.f32.mxu0 0.0
      %2792 = vmatmul.mubr.f32.gmra.mxu0 %v2586
      %v2793 = vpop.f32.mrf.mxu0
      %v2794 = vadd.f32 %v2514, %v2793
      %v2795 = vpop.f32.mrf.mxu0
      %2796 = vmatprep.mubr.f32.mxu0 0.0
      %2797 = vmatmul.mubr.f32.gmra.mxu0 %v2589
      %v2798 = vpop.f32.mrf.mxu0
      %v2799 = vadd.f32 %v2514, %v2798
      %v2800 = vpop.f32.mrf.mxu0
      %2801 = vmatprep.mubr.f32.mxu0 0.0
      %2802 = vmatmul.mubr.f32.gmra.mxu0 %v2592
      %v2803 = vpop.f32.mrf.mxu0
      %v2804 = vadd.f32 %v2514, %v2803
      %v2805 = vpop.f32.mrf.mxu0
      %2806 = vmatprep.mubr.f32.mxu0 0.0
      %2807 = vmatmul.mubr.f32.gmra.mxu0 %v2595
      %v2808 = vpop.f32.mrf.mxu0
      %v2809 = vadd.f32 %v2514, %v2808
      %v2810 = vpop.f32.mrf.mxu0
      %2811 = vmatprep.mubr.f32.mxu0 0.0
      %2812 = vmatmul.mubr.f32.gmra.mxu0 %v2598
      %v2813 = vpop.f32.mrf.mxu0
      %v2814 = vadd.f32 %v2514, %v2813
      %v2815 = vpop.f32.mrf.mxu0
      %2816 = vmatprep.mubr.f32.mxu0 0.0
      %2817 = vmatmul.mubr.f32.gmra.mxu0 %v2601
      %v2818 = vpop.f32.mrf.mxu0
      %v2819 = vadd.f32 %v2514, %v2818
      %v2820 = vpop.f32.mrf.mxu0
      %2821 = vmatprep.mubr.f32.mxu0 0.0
      %2822 = vmatmul.mubr.f32.gmra.mxu0 %v2604
      %v2823 = vpop.f32.mrf.mxu0
      %v2824 = vadd.f32 %v2514, %v2823
      %v2825 = vpop.f32.mrf.mxu0
      %2826 = vmatprep.mubr.f32.mxu0 0.0
      %2827 = vmatmul.mubr.f32.gmra.mxu0 %v2607
      %v2828 = vpop.f32.mrf.mxu0
      %v2829 = vadd.f32 %v2514, %v2828
      %v2830 = vpop.f32.mrf.mxu0
      %2831 = vmatprep.mubr.f32.mxu0 0.0
      %2832 = vmatmul.mubr.f32.gmra.mxu0 %v2610
      %v2833 = vpop.f32.mrf.mxu0
      %v2834 = vadd.f32 %v2514, %v2833
      %v2835 = vpop.f32.mrf.mxu0
      %2836 = vdwg.mxu0
      %v2837 = vadd.f32 %v2679, %v387
      %v2838 = vadd.f32 %v2684, %v388
      %v2839 = vadd.f32 %v2689, %v389
      %v2840 = vadd.f32 %v2694, %v390
      %v2841 = vadd.f32 %v2699, %v391
      %v2842 = vadd.f32 %v2704, %v392
      %v2843 = vadd.f32 %v2709, %v393
      %v2844 = vadd.f32 %v2714, %v394
      %v2845 = vadd.f32 %v2719, %v395
      %v2846 = vadd.f32 %v2724, %v396
      %v2847 = vadd.f32 %v2729, %v397
      %v2848 = vadd.f32 %v2734, %v398
      %v2849 = vadd.f32 %v2739, %v399
      %v2850 = vadd.f32 %v2744, %v400
      %v2851 = vadd.f32 %v2749, %v401
      %v2852 = vadd.f32 %v2754, %v402
      %v2853 = vadd.f32 %v2759, %v403
      %v2854 = vadd.f32 %v2764, %v404
      %v2855 = vadd.f32 %v2769, %v405
      %v2856 = vadd.f32 %v2774, %v406
      %v2857 = vadd.f32 %v2779, %v407
      %v2858 = vadd.f32 %v2784, %v408
      %v2859 = vadd.f32 %v2789, %v409
      %v2860 = vadd.f32 %v2794, %v410
      %v2861 = vadd.f32 %v2799, %v411
      %v2862 = vadd.f32 %v2804, %v412
      %v2863 = vadd.f32 %v2809, %v413
      %v2864 = vadd.f32 %v2814, %v414
      %v2865 = vadd.f32 %v2819, %v415
      %v2866 = vadd.f32 %v2824, %v416
      %v2867 = vadd.f32 %v2829, %v417
      %v2868 = vadd.f32 %v2834, %v418
      %2869 = vst.msk [vmem:[%s386] sm:$0xff] %vm427, %v2837
      %2870 = vst.msk [vmem:[%s386 + $0x8] sm:$0xff] %vm427, %v2838
      %2871 = vst.msk [vmem:[%s386 + $0x10] sm:$0xff] %vm427, %v2839
      %2872 = vst.msk [vmem:[%s386 + $0x18] sm:$0xff] %vm427, %v2840
      %2873 = vst.msk [vmem:[%s386 + $0x20] sm:$0xff] %vm427, %v2841
      %2874 = vst.msk [vmem:[%s386 + $0x28] sm:$0xff] %vm427, %v2842
      %2875 = vst.msk [vmem:[%s386 + $0x30] sm:$0xff] %vm427, %v2843
      %2876 = vst.msk [vmem:[%s386 + $0x38] sm:$0xff] %vm427, %v2844
      %2877 = vst.msk [vmem:[%s386 + $0x40] sm:$0xff] %vm427, %v2845
      %2878 = vst.msk [vmem:[%s386 + $0x48] sm:$0xff] %vm427, %v2846
      %2879 = vst.msk [vmem:[%s386 + $0x50] sm:$0xff] %vm427, %v2847
      %2880 = vst.msk [vmem:[%s386 + $0x58] sm:$0xff] %vm427, %v2848
      %2881 = vst.msk [vmem:[%s386 + $0x60] sm:$0xff] %vm427, %v2849
      %2882 = vst.msk [vmem:[%s386 + $0x68] sm:$0xff] %vm427, %v2850
      %2883 = vst.msk [vmem:[%s386 + $0x70] sm:$0xff] %vm427, %v2851
      %2884 = vst.msk [vmem:[%s386 + $0x78] sm:$0xff] %vm427, %v2852
      %2885 = vst.msk [vmem:[%s386 + $0x80] sm:$0xff] %vm427, %v2853
      %2886 = vst.msk [vmem:[%s386 + $0x88] sm:$0xff] %vm427, %v2854
      %2887 = vst.msk [vmem:[%s386 + $0x90] sm:$0xff] %vm427, %v2855
      %2888 = vst.msk [vmem:[%s386 + $0x98] sm:$0xff] %vm427, %v2856
      %2889 = vst.msk [vmem:[%s386 + $0xa0] sm:$0xff] %vm427, %v2857
      %2890 = vst.msk [vmem:[%s386 + $0xa8] sm:$0xff] %vm427, %v2858
      %2891 = vst.msk [vmem:[%s386 + $0xb0] sm:$0xff] %vm427, %v2859
      %2892 = vst.msk [vmem:[%s386 + $0xb8] sm:$0xff] %vm427, %v2860
      %2893 = vst.msk [vmem:[%s386 + $0xc0] sm:$0xff] %vm427, %v2861
      %2894 = vst.msk [vmem:[%s386 + $0xc8] sm:$0xff] %vm427, %v2862
      %2895 = vst.msk [vmem:[%s386 + $0xd0] sm:$0xff] %vm427, %v2863
      %2896 = vst.msk [vmem:[%s386 + $0xd8] sm:$0xff] %vm427, %v2864
      %2897 = vst.msk [vmem:[%s386 + $0xe0] sm:$0xff] %vm427, %v2865
      %2898 = vst.msk [vmem:[%s386 + $0xe8] sm:$0xff] %vm427, %v2866
      %2899 = vst.msk [vmem:[%s386 + $0xf0] sm:$0xff] %vm427, %v2867
      %2900 = vst.msk [vmem:[%s386 + $0xf8] sm:$0xff] %vm427, %v2868
      %p2901 = scmp.lt.s32.totalorder %s22, 1
      %s2902 = scalar_select %p2901, %s22, 1
      %s2903 = smul.addr %s2902, 32
      %s2904 = smul.addr %s2903, 8
      %s2905 = scalar_lea.vmem %s11, %s2904
      // Predicated region
      $region65: #{tpu_custom_call.1} parent=63 // pred_check
        %p2906 = pneg %p276
      $region66: #{tpu_custom_call.1} parent=63 // pred_check_branch
        %2908 = sbr.rel (%p2906) target = $region68
      $region67: #{tpu_custom_call.1} parent=63 // pred_region
        _
      $region68: #{tpu_custom_call.1} parent=63 // pred_fallthru
        _
    $region64: #{tpu_custom_call.1} parent=5 // pred_fallthru
      _
    %p2909 = scmp.le.s32.totalorder 2, %s17
    // Predicated region
    $region69: #{tpu_custom_call.1} parent=5 // pred_check
      %p2910 = pneg %p2909
    $region70: #{tpu_custom_call.1} parent=5 // pred_check_branch
      %2912 = sbr.rel (%p2910) target = $region72
    $region71: #{tpu_custom_call.1} parent=5 // pred_region
      %s2913 = ssub.s32 %s17, 2
      // Predicated region
      $region73: #{tpu_custom_call.1} parent=71 // pred_check
        %p2914 = pneg %p282
      $region74: #{tpu_custom_call.1} parent=71 // pred_check_branch
        %2916 = sbr.rel (%p2914) target = $region76
      $region75: #{tpu_custom_call.1} parent=71 // pred_region
        %p2917 = scmp.lt.s32.totalorder %s23, 1
        %s2918 = scalar_select %p2917, %s23, 1
        %s2919 = smul.addr %s2918, 32
        %s2920 = smul.addr %s2919, 8
        %s2921 = scalar_lea.vmem %s11, %s2920
      $region76: #{tpu_custom_call.1} parent=71 // pred_fallthru
        _
    $region72: #{tpu_custom_call.1} parent=5 // pred_fallthru
      _
  $region6: #{tpu_custom_call.1} parent=0 // loop_footer
    %s21 = sadd.s32 1, %s17
  $region7: #{tpu_custom_call.1} parent=0 // loop_footer_branch
    %16 = sbr.rel target = $region3
  $region8: #{tpu_custom_call.1} parent=0 // loop_exit
    _

</llo_original>
